<compile_context>
chip_gen: v7x
topology: tpu7x:2x2x1
jax: 0.10.0
libtpu: 0.0.40
codegen_flags: <defaults>
</compile_context>

<pallas_src>
import functools

import jax
import jax.numpy as jnp
from jax import lax
from jax.experimental import pallas as pl
from jax.experimental.pallas import tpu as pltpu


LN_EPS = 1e-5


# ----------------------------------------------------------------------------
# In-kernel helpers (operate on values already resident in vregs/VMEM)
# ----------------------------------------------------------------------------

def _ln(x, g, b):
    mean = jnp.mean(x, axis=-1, keepdims=True)
    var = jnp.mean(jnp.square(x - mean), axis=-1, keepdims=True)
    return (x - mean) * lax.rsqrt(var + LN_EPS) * g + b


def _quickgelu(x):
    # CLIP QuickGELU: x * sigmoid(1.702 x); reciprocal goes to the EUP slot.
    return x * pl.reciprocal(1.0 + jnp.exp(-1.702 * x), approx=True)


# ----------------------------------------------------------------------------
# Kernel 1: fused patch-embed + CLS/pos add + ln_pre  (one image per grid step)
# ----------------------------------------------------------------------------

def _embed_kernel(p_ref, wp_ref, poscls_ref, g_ref, b_ref, o_ref):
    # p_ref: (1, S, patch_dim) f32, row 0 zero-padded for the CLS slot.
    # wp_ref: (patch_dim, W) bf16.  poscls_ref: (S, W) f32 (pos with row0+=cls).
    pe = jnp.dot(p_ref[0].astype(jnp.bfloat16), wp_ref[...],
                 preferred_element_type=jnp.float32)
    x = pe + poscls_ref[...]
    o_ref[0] = _ln(x, g_ref[...], b_ref[...])


def embed_ln_pre(patches_padded, w_patch_bf16, pos_cls, g, b):
    B, S, PD = patches_padded.shape
    W = w_patch_bf16.shape[1]
    return pl.pallas_call(
        _embed_kernel,
        grid=(B,),
        out_shape=jax.ShapeDtypeStruct((B, S, W), jnp.float32),
        in_specs=[
            pl.BlockSpec((1, S, PD), lambda bi: (bi, 0, 0)),
            pl.BlockSpec((PD, W), lambda bi: (0, 0)),
            pl.BlockSpec((S, W), lambda bi: (0, 0)),
            pl.BlockSpec((1, W), lambda bi: (0, 0)),
            pl.BlockSpec((1, W), lambda bi: (0, 0)),
        ],
        out_specs=pl.BlockSpec((1, S, W), lambda bi: (bi, 0, 0)),
        compiler_params=pltpu.CompilerParams(dimension_semantics=("parallel",)),
    )(patches_padded, w_patch_bf16, pos_cls, g, b)


# ----------------------------------------------------------------------------
# Kernel 2: one fused residual attention block (one image per grid step)
# ----------------------------------------------------------------------------

def _block_kernel(x_ref, ln1g_ref, ln1b_ref, wqkv_ref, bqkv_ref,
                  wout_ref, bout_ref, ln2g_ref, ln2b_ref,
                  wfc1_ref, bfc1_ref, wfc2_ref, bfc2_ref,
                  o_ref, *, heads):
    x = x_ref[0]                                   # (S, W) f32, VMEM-resident
    S, W = x.shape
    hd = W // heads
    scale = hd ** -0.5

    # --- attention sub-block: x = x + out_proj(MHA(ln_1(x))) ---
    y = _ln(x, ln1g_ref[...], ln1b_ref[...]).astype(jnp.bfloat16)
    qkv = jnp.dot(y, wqkv_ref[...],
                  preferred_element_type=jnp.float32) + bqkv_ref[...]  # (S, 3W)

    acc = jnp.zeros((S, W), jnp.float32)
    for h in range(heads):                         # static unroll, heads small
        q = qkv[:, h * hd:(h + 1) * hd].astype(jnp.bfloat16)
        k = qkv[:, W + h * hd:W + (h + 1) * hd].astype(jnp.bfloat16)
        v = qkv[:, 2 * W + h * hd:2 * W + (h + 1) * hd].astype(jnp.bfloat16)
        s = lax.dot_general(q, k, (((1,), (1,)), ((), ())),
                            preferred_element_type=jnp.float32) * scale
        m = jnp.max(s, axis=-1, keepdims=True)
        p = jnp.exp(s - m)
        p = p * pl.reciprocal(jnp.sum(p, axis=-1, keepdims=True), approx=True)
        o_h = jnp.dot(p.astype(jnp.bfloat16), v,
                      preferred_element_type=jnp.float32)          # (S, hd)
        # fold the out-projection per head: no lane-concat needed
        acc = acc + jnp.dot(o_h.astype(jnp.bfloat16),
                            wout_ref[h * hd:(h + 1) * hd, :],
                            preferred_element_type=jnp.float32)
    x = x + acc + bout_ref[...]

    # --- MLP sub-block: x = x + fc2(QuickGELU(fc1(ln_2(x)))) ---
    y2 = _ln(x, ln2g_ref[...], ln2b_ref[...]).astype(jnp.bfloat16)
    h1 = jnp.dot(y2, wfc1_ref[...],
                 preferred_element_type=jnp.float32) + bfc1_ref[...]
    h1 = _quickgelu(h1).astype(jnp.bfloat16)
    h2 = jnp.dot(h1, wfc2_ref[...],
                 preferred_element_type=jnp.float32) + bfc2_ref[...]
    o_ref[0] = x + h2


_BLOCK_PARAM_ORDER = ("ln1_g", "ln1_b", "w_qkv", "b_qkv", "w_out", "b_out",
                      "ln2_g", "ln2_b", "w_fc1", "b_fc1", "w_fc2", "b_fc2")


def residual_block(x, blk, heads):
    B, S, W = x.shape
    in_specs = [pl.BlockSpec((1, S, W), lambda bi: (bi, 0, 0))]
    args = [x]
    for name in _BLOCK_PARAM_ORDER:
        arr = blk[name]
        in_specs.append(
            pl.BlockSpec(arr.shape, lambda bi, n=arr.ndim: (0,) * n))
        args.append(arr)
    return pl.pallas_call(
        functools.partial(_block_kernel, heads=heads),
        grid=(B,),
        out_shape=jax.ShapeDtypeStruct((B, S, W), jnp.float32),
        in_specs=in_specs,
        out_specs=pl.BlockSpec((1, S, W), lambda bi: (bi, 0, 0)),
        compiler_params=pltpu.CompilerParams(dimension_semantics=("parallel",)),
    )(*args)


# ----------------------------------------------------------------------------
# Kernel 3: fused ln_post + projection on the CLS tokens (tiny, grid-less)
# ----------------------------------------------------------------------------

def _head_kernel(x_ref, g_ref, b_ref, wproj_ref, o_ref):
    y = _ln(x_ref[...], g_ref[...], b_ref[...]).astype(jnp.bfloat16)
    o_ref[...] = jnp.dot(y, wproj_ref[...], preferred_element_type=jnp.float32)


def ln_post_proj(cls_tokens, g, b, w_proj_bf16):
    B, _ = cls_tokens.shape
    out_dim = w_proj_bf16.shape[1]
    vmem = pl.BlockSpec(memory_space=pltpu.MemorySpace.VMEM)
    return pl.pallas_call(
        _head_kernel,
        out_shape=jax.ShapeDtypeStruct((B, out_dim), jnp.float32),
        in_specs=[vmem, vmem, vmem, vmem],
        out_specs=vmem,
    )(cls_tokens, g, b, w_proj_bf16)


# ----------------------------------------------------------------------------
# Parameter construction (synthetic, deterministic) + one-time preprocessing
# ----------------------------------------------------------------------------

def init_params(key, cfg):
    C, P, width, layers, out_dim = (cfg["channels"], cfg["patch"],
                                    cfg["width"], cfg["layers"], cfg["out_dim"])
    patch_dim = C * P * P
    seq = cfg["num_patches"] + 1

    def nrm(k, shape, scale=0.02):
        return scale * jax.random.normal(k, shape, dtype=jnp.float32)

    keys = iter(jax.random.split(key, 8 + 12 * layers))
    params = {
        "w_patch": nrm(next(keys), (patch_dim, width)),   # conv1 as matmul
        "cls": nrm(next(keys), (width,)),
        "pos": nrm(next(keys), (seq, width)),
        "ln_pre_g": jnp.ones((width,), jnp.float32),
        "ln_pre_b": jnp.zeros((width,), jnp.float32),
        "ln_post_g": jnp.ones((width,), jnp.float32),
        "ln_post_b": jnp.zeros((width,), jnp.float32),
        "proj": nrm(next(keys), (width, out_dim)),
        "blocks": [],
    }
    for _ in range(layers):
        params["blocks"].append({
            "ln1_g": jnp.ones((width,), jnp.float32),
            "ln1_b": jnp.zeros((width,), jnp.float32),
            "w_qkv": nrm(next(keys), (width, 3 * width)),
            "b_qkv": nrm(next(keys), (3 * width,)),
            "w_out": nrm(next(keys), (width, width)),
            "b_out": nrm(next(keys), (width,)),
            "ln2_g": jnp.ones((width,), jnp.float32),
            "ln2_b": jnp.zeros((width,), jnp.float32),
            "w_fc1": nrm(next(keys), (width, 4 * width)),
            "b_fc1": nrm(next(keys), (4 * width,)),
            "w_fc2": nrm(next(keys), (4 * width, width)),
            "b_fc2": nrm(next(keys), (width,)),
        })
    return params


def preprocess_params(params, cfg):
    """Cast matmul weights to bf16 ONCE; reshape biases/LN params to (1, N)."""
    W = cfg["width"]
    pp = {
        "w_patch": params["w_patch"].astype(jnp.bfloat16),
        # fold CLS token into row 0 of the positional embedding
        "pos_cls": params["pos"].at[0].add(params["cls"]),
        "ln_pre_g": params["ln_pre_g"].reshape(1, W),
        "ln_pre_b": params["ln_pre_b"].reshape(1, W),
        "ln_post_g": params["ln_post_g"].reshape(1, W),
        "ln_post_b": params["ln_post_b"].reshape(1, W),
        "proj": params["proj"].astype(jnp.bfloat16),
        "blocks": [],
    }
    for blk in params["blocks"]:
        pp["blocks"].append({
            "ln1_g": blk["ln1_g"].reshape(1, W),
            "ln1_b": blk["ln1_b"].reshape(1, W),
            "w_qkv": blk["w_qkv"].astype(jnp.bfloat16),
            "b_qkv": blk["b_qkv"].reshape(1, 3 * W),
            "w_out": blk["w_out"].astype(jnp.bfloat16),
            "b_out": blk["b_out"].reshape(1, W),
            "ln2_g": blk["ln2_g"].reshape(1, W),
            "ln2_b": blk["ln2_b"].reshape(1, W),
            "w_fc1": blk["w_fc1"].astype(jnp.bfloat16),
            "b_fc1": blk["b_fc1"].reshape(1, 4 * W),
            "w_fc2": blk["w_fc2"].astype(jnp.bfloat16),
            "b_fc2": blk["b_fc2"].reshape(1, W),
        })
    return pp


# ----------------------------------------------------------------------------
# Forward pass (thin JAX glue around 1 + layers + 1 fused Pallas kernels)
# ----------------------------------------------------------------------------

def clip_featurizer_forward(pp, x_nchw, cfg):
    """x_nchw: (B, C, H, W) float32 -> (B, out_dim) image features."""
    B, C, H, Wimg = x_nchw.shape
    P, heads = cfg["patch"], cfg["heads"]
    gh, gw = H // P, Wimg // P
    n_patches = gh * gw
    patch_dim = C * P * P

    # Patch extraction (conv stride=P, kernel=P, bias=False) as patch rows;
    # the matmul happens inside the fused embed kernel.  Row 0 is a zero row
    # standing in for the CLS slot (the CLS token lives in pos_cls).
    patches = (x_nchw
               .reshape(B, C, gh, P, gw, P)
               .transpose(0, 2, 4, 1, 3, 5)
               .reshape(B, n_patches, patch_dim))
    patches_padded = jnp.concatenate(
        [jnp.zeros((B, 1, patch_dim), jnp.float32), patches], axis=1)

    x = embed_ln_pre(patches_padded, pp["w_patch"], pp["pos_cls"],
                     pp["ln_pre_g"], pp["ln_pre_b"])           # (B, S, W)

    for blk in pp["blocks"]:
        x = residual_block(x, blk, heads)

    cls_tokens = x[:, 0, :]                                    # (B, W)
    return ln_post_proj(cls_tokens, pp["ln_post_g"], pp["ln_post_b"],
                        pp["proj"])                            # (B, out_dim)


# ----------------------------------------------------------------------------
# Pure-JAX f32 reference (mirrors CLIP ViT encode_image, return_cls=True path)
# ----------------------------------------------------------------------------

def reference_forward(params, x_nchw, cfg):
    B, C, H, Wimg = x_nchw.shape
    P, width, heads = cfg["patch"], cfg["width"], cfg["heads"]
    gh, gw = H // P, Wimg // P
    n_patches = gh * gw
    S = n_patches + 1
    hd = width // heads

    def ln(t, g, b):
        m = t.mean(-1, keepdims=True)
        v = ((t - m) ** 2).mean(-1, keepdims=True)
        return (t - m) / jnp.sqrt(v + LN_EPS) * g + b

    patches = (x_nchw.reshape(B, C, gh, P, gw, P)
               .transpose(0, 2, 4, 1, 3, 5)
               .reshape(B, n_patches, C * P * P))
    emb = patches @ params["w_patch"]
    cls = jnp.broadcast_to(params["cls"][None, None, :], (B, 1, width))
    x = jnp.concatenate([cls, emb], axis=1) + params["pos"][None]
    x = ln(x, params["ln_pre_g"], params["ln_pre_b"])

    for blk in params["blocks"]:
        y = ln(x, blk["ln1_g"], blk["ln1_b"])
        qkv = (y @ blk["w_qkv"] + blk["b_qkv"]).reshape(B, S, 3, heads, hd)
        q = qkv[:, :, 0].transpose(0, 2, 1, 3)
        k = qkv[:, :, 1].transpose(0, 2, 1, 3)
        v = qkv[:, :, 2].transpose(0, 2, 1, 3)
        s = jnp.einsum("bhqd,bhkd->bhqk", q, k) * hd ** -0.5
        p = jax.nn.softmax(s, axis=-1)
        a = jnp.einsum("bhqk,bhkd->bhqd", p, v)
        a = a.transpose(0, 2, 1, 3).reshape(B, S, width)
        x = x + a @ blk["w_out"] + blk["b_out"]
        y = ln(x, blk["ln2_g"], blk["ln2_b"])
        h = y @ blk["w_fc1"] + blk["b_fc1"]
        h = h * jax.nn.sigmoid(1.702 * h)
        x = x + h @ blk["w_fc2"] + blk["b_fc2"]

    cls_feat = ln(x[:, 0, :], params["ln_post_g"], params["ln_post_b"])
    return cls_feat @ params["proj"]


# ----------------------------------------------------------------------------
# Main
# ----------------------------------------------------------------------------

if __name__ == "__main__":
    # Small but lane-dense shapes (last dims multiples of 128).
    cfg = {
        "channels": 3,
        "patch": 8,
        "image": 32,
        "width": 128,
        "heads": 4,
        "layers": 2,
        "out_dim": 128,
    }
    cfg["num_patches"] = (cfg["image"] // cfg["patch"]) ** 2   # 16 -> S = 17

    key = jax.random.PRNGKey(0)
    k_params, k_x = jax.random.split(key)
    params = init_params(k_params, cfg)
    pp = preprocess_params(params, cfg)

    x = jax.random.normal(
        k_x, (2, cfg["channels"], cfg["image"], cfg["image"]), dtype=jnp.float32)

    fwd = jax.jit(functools.partial(clip_featurizer_forward, cfg=cfg))
    feats = jax.block_until_ready(fwd(pp, x))

    assert feats.shape == (2, cfg["out_dim"])
    assert feats.dtype == jnp.float32
    assert bool(jnp.all(jnp.isfinite(feats)))

    # Loose check vs. an f32 pure-JAX reference (bf16 matmuls => small diffs).
    ref = reference_forward(params, x, cfg)
    max_err = float(jnp.max(jnp.abs(feats - ref)))
    assert max_err < 5e-2, f"max abs error vs reference too large: {max_err}"

    print("KERNEL_OK")
</pallas_src>

<mosaic_0001>
module attributes {stable_mosaic.version = 11 : i64} {
  func.func @_embed_kernel(%arg0: i32, %arg1: memref<1x17x192xf32, #tpu.memory_space<vmem>>, %arg2: memref<192x128xbf16, #tpu.memory_space<vmem>>, %arg3: memref<17x128xf32, #tpu.memory_space<vmem>>, %arg4: memref<1x128xf32, #tpu.memory_space<vmem>>, %arg5: memref<1x128xf32, #tpu.memory_space<vmem>>, %arg6: memref<1x17x128xf32, #tpu.memory_space<vmem>>) attributes {dimension_semantics = [#tpu.dimension_semantics<parallel>], iteration_bounds = array<i64: 2>, scalar_prefetch = 0 : i64, scratch_operands = 0 : i64, tpu.core_type = #tpu.core_type<tc>, window_params = [{transform_indices = @transform_0, window_bounds = array<i64: 1, 17, 192>}, {pipeline_mode = #tpu.pipeline_mode<synchronous>, transform_indices = @transform_1, window_bounds = array<i64: 192, 128>}, {pipeline_mode = #tpu.pipeline_mode<synchronous>, transform_indices = @transform_2, window_bounds = array<i64: 17, 128>}, {pipeline_mode = #tpu.pipeline_mode<synchronous>, transform_indices = @transform_3, window_bounds = array<i64: 1, 128>}, {pipeline_mode = #tpu.pipeline_mode<synchronous>, transform_indices = @transform_4, window_bounds = array<i64: 1, 128>}, {transform_indices = @transform_5, window_bounds = array<i64: 1, 17, 128>}]} {
    %c0 = arith.constant 0 : index
    %c0_0 = arith.constant 0 : index
    %c0_1 = arith.constant 0 : index
    %0 = vector.load %arg1[%c0, %c0_0, %c0_1] : memref<1x17x192xf32, #tpu.memory_space<vmem>>, vector<1x17x192xf32>
    %1 = vector.shape_cast %0 : vector<1x17x192xf32> to vector<17x192xf32>
    %2 = arith.truncf %1 : vector<17x192xf32> to vector<17x192xbf16>
    %c0_2 = arith.constant 0 : index
    %c0_3 = arith.constant 0 : index
    %3 = vector.load %arg2[%c0_2, %c0_3] : memref<192x128xbf16, #tpu.memory_space<vmem>>, vector<192x128xbf16>
    %cst = arith.constant dense<0.000000e+00> : vector<17x128xf32>
    %4 = tpu.matmul %2, %3, %cst {dimension_numbers = #tpu.dot_dimension_numbers<[1], [0], [0], [1], [0, 0, 1, 1], [], []>} : vector<17x192xbf16>, vector<192x128xbf16>, vector<17x128xf32> -> vector<17x128xf32>
    %c0_4 = arith.constant 0 : index
    %c0_5 = arith.constant 0 : index
    %5 = vector.load %arg3[%c0_4, %c0_5] : memref<17x128xf32, #tpu.memory_space<vmem>>, vector<17x128xf32>
    %6 = arith.addf %4, %5 : vector<17x128xf32>
    %c0_6 = arith.constant 0 : index
    %c0_7 = arith.constant 0 : index
    %7 = vector.load %arg4[%c0_6, %c0_7] : memref<1x128xf32, #tpu.memory_space<vmem>>, vector<1x128xf32>
    %c0_8 = arith.constant 0 : index
    %c0_9 = arith.constant 0 : index
    %8 = vector.load %arg5[%c0_8, %c0_9] : memref<1x128xf32, #tpu.memory_space<vmem>>, vector<1x128xf32>
    %cst_10 = arith.constant dense<0.000000e+00> : vector<17xf32>
    %9 = vector.multi_reduction <add>, %6, %cst_10 [1] : vector<17x128xf32> to vector<17xf32>
    %10 = vector.shape_cast %9 : vector<17xf32> to vector<17x1xf32>
    %cst_11 = arith.constant 1.280000e+02 : f32
    %11 = vector.broadcast %cst_11 : f32 to vector<17x1xf32>
    %12 = arith.divf %10, %11 : vector<17x1xf32>
    %13 = vector.broadcast %12 : vector<17x1xf32> to vector<17x128xf32>
    %14 = arith.subf %6, %13 : vector<17x128xf32>
    %15 = arith.mulf %14, %14 : vector<17x128xf32>
    %cst_12 = arith.constant dense<0.000000e+00> : vector<17xf32>
    %16 = vector.multi_reduction <add>, %15, %cst_12 [1] : vector<17x128xf32> to vector<17xf32>
    %17 = vector.shape_cast %16 : vector<17xf32> to vector<17x1xf32>
    %cst_13 = arith.constant 1.280000e+02 : f32
    %18 = vector.broadcast %cst_13 : f32 to vector<17x1xf32>
    %19 = arith.divf %17, %18 : vector<17x1xf32>
    %20 = vector.broadcast %12 : vector<17x1xf32> to vector<17x128xf32>
    %21 = arith.subf %6, %20 : vector<17x128xf32>
    %cst_14 = arith.constant 9.99999974E-6 : f32
    %22 = vector.broadcast %cst_14 : f32 to vector<17x1xf32>
    %23 = arith.addf %19, %22 : vector<17x1xf32>
    %24 = math.rsqrt %23 : vector<17x1xf32>
    %25 = vector.broadcast %24 : vector<17x1xf32> to vector<17x128xf32>
    %26 = arith.mulf %21, %25 : vector<17x128xf32>
    %27 = vector.broadcast %7 : vector<1x128xf32> to vector<17x128xf32>
    %28 = arith.mulf %26, %27 : vector<17x128xf32>
    %29 = vector.broadcast %8 : vector<1x128xf32> to vector<17x128xf32>
    %30 = arith.addf %28, %29 : vector<17x128xf32>
    %c0_15 = arith.constant 0 : index
    %c0_16 = arith.constant 0 : index
    %c0_17 = arith.constant 0 : index
    %31 = vector.load %arg6[%c0_15, %c0_16, %c0_17] : memref<1x17x128xf32, #tpu.memory_space<vmem>>, vector<1x17x128xf32>
    %32 = vector.shape_cast %31 : vector<1x17x128xf32> to vector<17x128xf32>
    %33 = vector.shape_cast %30 : vector<17x128xf32> to vector<1x17x128xf32>
    tpu.vector_store %arg6[%c0_15, %c0_16, %c0_17], %33 {strides = array<i32>} : memref<1x17x128xf32, #tpu.memory_space<vmem>>, vector<1x17x128xf32>,
    return
  }
  func.func @transform_0(%arg0: i32) -> (i32, i32, i32) {
    %c0_i32 = arith.constant 0 : i32
    %c0_i32_0 = arith.constant 0 : i32
    %c0_i32_1 = arith.constant 0 : i32
    return %arg0, %c0_i32, %c0_i32_0 : i32, i32, i32
  }
  func.func @transform_1(%arg0: i32) -> (i32, i32) {
    %c0_i32 = arith.constant 0 : i32
    %c0_i32_0 = arith.constant 0 : i32
    %c0_i32_1 = arith.constant 0 : i32
    return %c0_i32, %c0_i32_0 : i32, i32
  }
  func.func @transform_2(%arg0: i32) -> (i32, i32) {
    %c0_i32 = arith.constant 0 : i32
    %c0_i32_0 = arith.constant 0 : i32
    %c0_i32_1 = arith.constant 0 : i32
    return %c0_i32, %c0_i32_0 : i32, i32
  }
  func.func @transform_3(%arg0: i32) -> (i32, i32) {
    %c0_i32 = arith.constant 0 : i32
    %c0_i32_0 = arith.constant 0 : i32
    %c0_i32_1 = arith.constant 0 : i32
    return %c0_i32, %c0_i32_0 : i32, i32
  }
  func.func @transform_4(%arg0: i32) -> (i32, i32) {
    %c0_i32 = arith.constant 0 : i32
    %c0_i32_0 = arith.constant 0 : i32
    %c0_i32_1 = arith.constant 0 : i32
    return %c0_i32, %c0_i32_0 : i32, i32
  }
  func.func @transform_5(%arg0: i32) -> (i32, i32, i32) {
    %c0_i32 = arith.constant 0 : i32
    %c0_i32_0 = arith.constant 0 : i32
    %c0_i32_1 = arith.constant 0 : i32
    return %arg0, %c0_i32, %c0_i32_0 : i32, i32, i32
  }
}

module attributes {stable_mosaic.version = 11 : i64} {
  func.func @_block_kernel(%arg0: i32, %arg1: memref<1x17x128xf32, #tpu.memory_space<vmem>>, %arg2: memref<1x128xf32, #tpu.memory_space<vmem>>, %arg3: memref<1x128xf32, #tpu.memory_space<vmem>>, %arg4: memref<128x384xbf16, #tpu.memory_space<vmem>>, %arg5: memref<1x384xf32, #tpu.memory_space<vmem>>, %arg6: memref<128x128xbf16, #tpu.memory_space<vmem>>, %arg7: memref<1x128xf32, #tpu.memory_space<vmem>>, %arg8: memref<1x128xf32, #tpu.memory_space<vmem>>, %arg9: memref<1x128xf32, #tpu.memory_space<vmem>>, %arg10: memref<128x512xbf16, #tpu.memory_space<vmem>>, %arg11: memref<1x512xf32, #tpu.memory_space<vmem>>, %arg12: memref<512x128xbf16, #tpu.memory_space<vmem>>, %arg13: memref<1x128xf32, #tpu.memory_space<vmem>>, %arg14: memref<1x17x128xf32, #tpu.memory_space<vmem>>) attributes {dimension_semantics = [#tpu.dimension_semantics<parallel>], iteration_bounds = array<i64: 2>, scalar_prefetch = 0 : i64, scratch_operands = 0 : i64, tpu.core_type = #tpu.core_type<tc>, window_params = [{transform_indices = @transform_0, window_bounds = array<i64: 1, 17, 128>}, {pipeline_mode = #tpu.pipeline_mode<synchronous>, transform_indices = @transform_1, window_bounds = array<i64: 1, 128>}, {pipeline_mode = #tpu.pipeline_mode<synchronous>, transform_indices = @transform_2, window_bounds = array<i64: 1, 128>}, {pipeline_mode = #tpu.pipeline_mode<synchronous>, transform_indices = @transform_3, window_bounds = array<i64: 128, 384>}, {pipeline_mode = #tpu.pipeline_mode<synchronous>, transform_indices = @transform_4, window_bounds = array<i64: 1, 384>}, {pipeline_mode = #tpu.pipeline_mode<synchronous>, transform_indices = @transform_5, window_bounds = array<i64: 128, 128>}, {pipeline_mode = #tpu.pipeline_mode<synchronous>, transform_indices = @transform_6, window_bounds = array<i64: 1, 128>}, {pipeline_mode = #tpu.pipeline_mode<synchronous>, transform_indices = @transform_7, window_bounds = array<i64: 1, 128>}, {pipeline_mode = #tpu.pipeline_mode<synchronous>, transform_indices = @transform_8, window_bounds = array<i64: 1, 128>}, {pipeline_mode = #tpu.pipeline_mode<synchronous>, transform_indices = @transform_9, window_bounds = array<i64: 128, 512>}, {pipeline_mode = #tpu.pipeline_mode<synchronous>, transform_indices = @transform_10, window_bounds = array<i64: 1, 512>}, {pipeline_mode = #tpu.pipeline_mode<synchronous>, transform_indices = @transform_11, window_bounds = array<i64: 512, 128>}, {pipeline_mode = #tpu.pipeline_mode<synchronous>, transform_indices = @transform_12, window_bounds = array<i64: 1, 128>}, {transform_indices = @transform_13, window_bounds = array<i64: 1, 17, 128>}]} {
    %c0 = arith.constant 0 : index
    %c0_0 = arith.constant 0 : index
    %c0_1 = arith.constant 0 : index
    %0 = vector.load %arg1[%c0, %c0_0, %c0_1] : memref<1x17x128xf32, #tpu.memory_space<vmem>>, vector<1x17x128xf32>
    %1 = vector.shape_cast %0 : vector<1x17x128xf32> to vector<17x128xf32>
    %c0_2 = arith.constant 0 : index
    %c0_3 = arith.constant 0 : index
    %2 = vector.load %arg2[%c0_2, %c0_3] : memref<1x128xf32, #tpu.memory_space<vmem>>, vector<1x128xf32>
    %c0_4 = arith.constant 0 : index
    %c0_5 = arith.constant 0 : index
    %3 = vector.load %arg3[%c0_4, %c0_5] : memref<1x128xf32, #tpu.memory_space<vmem>>, vector<1x128xf32>
    %cst = arith.constant dense<0.000000e+00> : vector<17xf32>
    %4 = vector.multi_reduction <add>, %1, %cst [1] : vector<17x128xf32> to vector<17xf32>
    %5 = vector.shape_cast %4 : vector<17xf32> to vector<17x1xf32>
    %cst_6 = arith.constant 1.280000e+02 : f32
    %6 = vector.broadcast %cst_6 : f32 to vector<17x1xf32>
    %7 = arith.divf %5, %6 : vector<17x1xf32>
    %8 = vector.broadcast %7 : vector<17x1xf32> to vector<17x128xf32>
    %9 = arith.subf %1, %8 : vector<17x128xf32>
    %10 = arith.mulf %9, %9 : vector<17x128xf32>
    %cst_7 = arith.constant dense<0.000000e+00> : vector<17xf32>
    %11 = vector.multi_reduction <add>, %10, %cst_7 [1] : vector<17x128xf32> to vector<17xf32>
    %12 = vector.shape_cast %11 : vector<17xf32> to vector<17x1xf32>
    %cst_8 = arith.constant 1.280000e+02 : f32
    %13 = vector.broadcast %cst_8 : f32 to vector<17x1xf32>
    %14 = arith.divf %12, %13 : vector<17x1xf32>
    %15 = vector.broadcast %7 : vector<17x1xf32> to vector<17x128xf32>
    %16 = arith.subf %1, %15 : vector<17x128xf32>
    %cst_9 = arith.constant 9.99999974E-6 : f32
    %17 = vector.broadcast %cst_9 : f32 to vector<17x1xf32>
    %18 = arith.addf %14, %17 : vector<17x1xf32>
    %19 = math.rsqrt %18 : vector<17x1xf32>
    %20 = vector.broadcast %19 : vector<17x1xf32> to vector<17x128xf32>
    %21 = arith.mulf %16, %20 : vector<17x128xf32>
    %22 = vector.broadcast %2 : vector<1x128xf32> to vector<17x128xf32>
    %23 = arith.mulf %21, %22 : vector<17x128xf32>
    %24 = vector.broadcast %3 : vector<1x128xf32> to vector<17x128xf32>
    %25 = arith.addf %23, %24 : vector<17x128xf32>
    %26 = arith.truncf %25 : vector<17x128xf32> to vector<17x128xbf16>
    %c0_10 = arith.constant 0 : index
    %c0_11 = arith.constant 0 : index
    %27 = vector.load %arg4[%c0_10, %c0_11] : memref<128x384xbf16, #tpu.memory_space<vmem>>, vector<128x384xbf16>
    %cst_12 = arith.constant dense<0.000000e+00> : vector<17x384xf32>
    %28 = tpu.matmul %26, %27, %cst_12 {dimension_numbers = #tpu.dot_dimension_numbers<[1], [0], [0], [1], [0, 0, 1, 1], [], []>} : vector<17x128xbf16>, vector<128x384xbf16>, vector<17x384xf32> -> vector<17x384xf32>
    %c0_13 = arith.constant 0 : index
    %c0_14 = arith.constant 0 : index
    %29 = vector.load %arg5[%c0_13, %c0_14] : memref<1x384xf32, #tpu.memory_space<vmem>>, vector<1x384xf32>
    %30 = vector.broadcast %29 : vector<1x384xf32> to vector<17x384xf32>
    %31 = arith.addf %28, %30 : vector<17x384xf32>
    %cst_15 = arith.constant 0.000000e+00 : f32
    %32 = vector.broadcast %cst_15 : f32 to vector<17x128xf32>
    %33 = vector.extract_strided_slice %31 {offsets = [0, 0], sizes = [17, 32], strides = [1, 1]} : vector<17x384xf32> to vector<17x32xf32>
    %34 = arith.truncf %33 : vector<17x32xf32> to vector<17x32xbf16>
    %35 = vector.extract_strided_slice %31 {offsets = [0, 128], sizes = [17, 32], strides = [1, 1]} : vector<17x384xf32> to vector<17x32xf32>
    %36 = arith.truncf %35 : vector<17x32xf32> to vector<17x32xbf16>
    %37 = vector.extract_strided_slice %31 {offsets = [0, 256], sizes = [17, 32], strides = [1, 1]} : vector<17x384xf32> to vector<17x32xf32>
    %38 = arith.truncf %37 : vector<17x32xf32> to vector<17x32xbf16>
    %cst_16 = arith.constant dense<0.000000e+00> : vector<17x17xf32>
    %39 = tpu.matmul %34, %36, %cst_16 {dimension_numbers = #tpu.dot_dimension_numbers<[1], [1], [0], [0], [0, 0, 1, 0], [], []>} : vector<17x32xbf16>, vector<17x32xbf16>, vector<17x17xf32> -> vector<17x17xf32>
    %cst_17 = arith.constant 0.176776692 : f32
    %40 = vector.broadcast %cst_17 : f32 to vector<17x17xf32>
    %41 = arith.mulf %39, %40 : vector<17x17xf32>
    %cst_18 = arith.constant dense<0xFF800000> : vector<17xf32>
    %42 = vector.multi_reduction <maximumf>, %41, %cst_18 [1] : vector<17x17xf32> to vector<17xf32>
    %43 = vector.shape_cast %42 : vector<17xf32> to vector<17x1xf32>
    %44 = vector.broadcast %43 : vector<17x1xf32> to vector<17x17xf32>
    %45 = arith.subf %41, %44 : vector<17x17xf32>
    %46 = math.exp %45 : vector<17x17xf32>
    %cst_19 = arith.constant dense<0.000000e+00> : vector<17xf32>
    %47 = vector.multi_reduction <add>, %46, %cst_19 [1] : vector<17x17xf32> to vector<17xf32>
    %48 = vector.shape_cast %47 : vector<17xf32> to vector<17x1xf32>
    %49 = tpu.reciprocal %48 {approx = true} : vector<17x1xf32> -> vector<17x1xf32>
    %50 = vector.broadcast %49 : vector<17x1xf32> to vector<17x17xf32>
    %51 = arith.mulf %46, %50 : vector<17x17xf32>
    %52 = arith.truncf %51 : vector<17x17xf32> to vector<17x17xbf16>
    %cst_20 = arith.constant dense<0.000000e+00> : vector<17x32xf32>
    %53 = tpu.matmul %52, %38, %cst_20 {dimension_numbers = #tpu.dot_dimension_numbers<[1], [0], [0], [1], [0, 0, 1, 1], [], []>} : vector<17x17xbf16>, vector<17x32xbf16>, vector<17x32xf32> -> vector<17x32xf32>
    %54 = arith.truncf %53 : vector<17x32xf32> to vector<17x32xbf16>
    %c0_21 = arith.constant 0 : index
    %c0_22 = arith.constant 0 : index
    %55 = vector.load %arg6[%c0_21, %c0_22] : memref<128x128xbf16, #tpu.memory_space<vmem>>, vector<32x128xbf16>
    %cst_23 = arith.constant dense<0.000000e+00> : vector<17x128xf32>
    %56 = tpu.matmul %54, %55, %cst_23 {dimension_numbers = #tpu.dot_dimension_numbers<[1], [0], [0], [1], [0, 0, 1, 1], [], []>} : vector<17x32xbf16>, vector<32x128xbf16>, vector<17x128xf32> -> vector<17x128xf32>
    %57 = arith.addf %32, %56 : vector<17x128xf32>
    %58 = vector.extract_strided_slice %31 {offsets = [0, 32], sizes = [17, 32], strides = [1, 1]} : vector<17x384xf32> to vector<17x32xf32>
    %59 = arith.truncf %58 : vector<17x32xf32> to vector<17x32xbf16>
    %60 = vector.extract_strided_slice %31 {offsets = [0, 160], sizes = [17, 32], strides = [1, 1]} : vector<17x384xf32> to vector<17x32xf32>
    %61 = arith.truncf %60 : vector<17x32xf32> to vector<17x32xbf16>
    %62 = vector.extract_strided_slice %31 {offsets = [0, 288], sizes = [17, 32], strides = [1, 1]} : vector<17x384xf32> to vector<17x32xf32>
    %63 = arith.truncf %62 : vector<17x32xf32> to vector<17x32xbf16>
    %cst_24 = arith.constant dense<0.000000e+00> : vector<17x17xf32>
    %64 = tpu.matmul %59, %61, %cst_24 {dimension_numbers = #tpu.dot_dimension_numbers<[1], [1], [0], [0], [0, 0, 1, 0], [], []>} : vector<17x32xbf16>, vector<17x32xbf16>, vector<17x17xf32> -> vector<17x17xf32>
    %cst_25 = arith.constant 0.176776692 : f32
    %65 = vector.broadcast %cst_25 : f32 to vector<17x17xf32>
    %66 = arith.mulf %64, %65 : vector<17x17xf32>
    %cst_26 = arith.constant dense<0xFF800000> : vector<17xf32>
    %67 = vector.multi_reduction <maximumf>, %66, %cst_26 [1] : vector<17x17xf32> to vector<17xf32>
    %68 = vector.shape_cast %67 : vector<17xf32> to vector<17x1xf32>
    %69 = vector.broadcast %68 : vector<17x1xf32> to vector<17x17xf32>
    %70 = arith.subf %66, %69 : vector<17x17xf32>
    %71 = math.exp %70 : vector<17x17xf32>
    %cst_27 = arith.constant dense<0.000000e+00> : vector<17xf32>
    %72 = vector.multi_reduction <add>, %71, %cst_27 [1] : vector<17x17xf32> to vector<17xf32>
    %73 = vector.shape_cast %72 : vector<17xf32> to vector<17x1xf32>
    %74 = tpu.reciprocal %73 {approx = true} : vector<17x1xf32> -> vector<17x1xf32>
    %75 = vector.broadcast %74 : vector<17x1xf32> to vector<17x17xf32>
    %76 = arith.mulf %71, %75 : vector<17x17xf32>
    %77 = arith.truncf %76 : vector<17x17xf32> to vector<17x17xbf16>
    %cst_28 = arith.constant dense<0.000000e+00> : vector<17x32xf32>
    %78 = tpu.matmul %77, %63, %cst_28 {dimension_numbers = #tpu.dot_dimension_numbers<[1], [0], [0], [1], [0, 0, 1, 1], [], []>} : vector<17x17xbf16>, vector<17x32xbf16>, vector<17x32xf32> -> vector<17x32xf32>
    %79 = arith.truncf %78 : vector<17x32xf32> to vector<17x32xbf16>
    %c32 = arith.constant 32 : index
    %c0_29 = arith.constant 0 : index
    %80 = vector.load %arg6[%c32, %c0_29] : memref<128x128xbf16, #tpu.memory_space<vmem>>, vector<32x128xbf16>
    %cst_30 = arith.constant dense<0.000000e+00> : vector<17x128xf32>
    %81 = tpu.matmul %79, %80, %cst_30 {dimension_numbers = #tpu.dot_dimension_numbers<[1], [0], [0], [1], [0, 0, 1, 1], [], []>} : vector<17x32xbf16>, vector<32x128xbf16>, vector<17x128xf32> -> vector<17x128xf32>
    %82 = arith.addf %57, %81 : vector<17x128xf32>
    %83 = vector.extract_strided_slice %31 {offsets = [0, 64], sizes = [17, 32], strides = [1, 1]} : vector<17x384xf32> to vector<17x32xf32>
    %84 = arith.truncf %83 : vector<17x32xf32> to vector<17x32xbf16>
    %85 = vector.extract_strided_slice %31 {offsets = [0, 192], sizes = [17, 32], strides = [1, 1]} : vector<17x384xf32> to vector<17x32xf32>
    %86 = arith.truncf %85 : vector<17x32xf32> to vector<17x32xbf16>
    %87 = vector.extract_strided_slice %31 {offsets = [0, 320], sizes = [17, 32], strides = [1, 1]} : vector<17x384xf32> to vector<17x32xf32>
    %88 = arith.truncf %87 : vector<17x32xf32> to vector<17x32xbf16>
    %cst_31 = arith.constant dense<0.000000e+00> : vector<17x17xf32>
    %89 = tpu.matmul %84, %86, %cst_31 {dimension_numbers = #tpu.dot_dimension_numbers<[1], [1], [0], [0], [0, 0, 1, 0], [], []>} : vector<17x32xbf16>, vector<17x32xbf16>, vector<17x17xf32> -> vector<17x17xf32>
    %cst_32 = arith.constant 0.176776692 : f32
    %90 = vector.broadcast %cst_32 : f32 to vector<17x17xf32>
    %91 = arith.mulf %89, %90 : vector<17x17xf32>
    %cst_33 = arith.constant dense<0xFF800000> : vector<17xf32>
    %92 = vector.multi_reduction <maximumf>, %91, %cst_33 [1] : vector<17x17xf32> to vector<17xf32>
    %93 = vector.shape_cast %92 : vector<17xf32> to vector<17x1xf32>
    %94 = vector.broadcast %93 : vector<17x1xf32> to vector<17x17xf32>
    %95 = arith.subf %91, %94 : vector<17x17xf32>
    %96 = math.exp %95 : vector<17x17xf32>
    %cst_34 = arith.constant dense<0.000000e+00> : vector<17xf32>
    %97 = vector.multi_reduction <add>, %96, %cst_34 [1] : vector<17x17xf32> to vector<17xf32>
    %98 = vector.shape_cast %97 : vector<17xf32> to vector<17x1xf32>
    %99 = tpu.reciprocal %98 {approx = true} : vector<17x1xf32> -> vector<17x1xf32>
    %100 = vector.broadcast %99 : vector<17x1xf32> to vector<17x17xf32>
    %101 = arith.mulf %96, %100 : vector<17x17xf32>
    %102 = arith.truncf %101 : vector<17x17xf32> to vector<17x17xbf16>
    %cst_35 = arith.constant dense<0.000000e+00> : vector<17x32xf32>
    %103 = tpu.matmul %102, %88, %cst_35 {dimension_numbers = #tpu.dot_dimension_numbers<[1], [0], [0], [1], [0, 0, 1, 1], [], []>} : vector<17x17xbf16>, vector<17x32xbf16>, vector<17x32xf32> -> vector<17x32xf32>
    %104 = arith.truncf %103 : vector<17x32xf32> to vector<17x32xbf16>
    %c64 = arith.constant 64 : index
    %c0_36 = arith.constant 0 : index
    %105 = vector.load %arg6[%c64, %c0_36] : memref<128x128xbf16, #tpu.memory_space<vmem>>, vector<32x128xbf16>
    %cst_37 = arith.constant dense<0.000000e+00> : vector<17x128xf32>
    %106 = tpu.matmul %104, %105, %cst_37 {dimension_numbers = #tpu.dot_dimension_numbers<[1], [0], [0], [1], [0, 0, 1, 1], [], []>} : vector<17x32xbf16>, vector<32x128xbf16>, vector<17x128xf32> -> vector<17x128xf32>
    %107 = arith.addf %82, %106 : vector<17x128xf32>
    %108 = vector.extract_strided_slice %31 {offsets = [0, 96], sizes = [17, 32], strides = [1, 1]} : vector<17x384xf32> to vector<17x32xf32>
    %109 = arith.truncf %108 : vector<17x32xf32> to vector<17x32xbf16>
    %110 = vector.extract_strided_slice %31 {offsets = [0, 224], sizes = [17, 32], strides = [1, 1]} : vector<17x384xf32> to vector<17x32xf32>
    %111 = arith.truncf %110 : vector<17x32xf32> to vector<17x32xbf16>
    %112 = vector.extract_strided_slice %31 {offsets = [0, 352], sizes = [17, 32], strides = [1, 1]} : vector<17x384xf32> to vector<17x32xf32>
    %113 = arith.truncf %112 : vector<17x32xf32> to vector<17x32xbf16>
    %cst_38 = arith.constant dense<0.000000e+00> : vector<17x17xf32>
    %114 = tpu.matmul %109, %111, %cst_38 {dimension_numbers = #tpu.dot_dimension_numbers<[1], [1], [0], [0], [0, 0, 1, 0], [], []>} : vector<17x32xbf16>, vector<17x32xbf16>, vector<17x17xf32> -> vector<17x17xf32>
    %cst_39 = arith.constant 0.176776692 : f32
    %115 = vector.broadcast %cst_39 : f32 to vector<17x17xf32>
    %116 = arith.mulf %114, %115 : vector<17x17xf32>
    %cst_40 = arith.constant dense<0xFF800000> : vector<17xf32>
    %117 = vector.multi_reduction <maximumf>, %116, %cst_40 [1] : vector<17x17xf32> to vector<17xf32>
    %118 = vector.shape_cast %117 : vector<17xf32> to vector<17x1xf32>
    %119 = vector.broadcast %118 : vector<17x1xf32> to vector<17x17xf32>
    %120 = arith.subf %116, %119 : vector<17x17xf32>
    %121 = math.exp %120 : vector<17x17xf32>
    %cst_41 = arith.constant dense<0.000000e+00> : vector<17xf32>
    %122 = vector.multi_reduction <add>, %121, %cst_41 [1] : vector<17x17xf32> to vector<17xf32>
    %123 = vector.shape_cast %122 : vector<17xf32> to vector<17x1xf32>
    %124 = tpu.reciprocal %123 {approx = true} : vector<17x1xf32> -> vector<17x1xf32>
    %125 = vector.broadcast %124 : vector<17x1xf32> to vector<17x17xf32>
    %126 = arith.mulf %121, %125 : vector<17x17xf32>
    %127 = arith.truncf %126 : vector<17x17xf32> to vector<17x17xbf16>
    %cst_42 = arith.constant dense<0.000000e+00> : vector<17x32xf32>
    %128 = tpu.matmul %127, %113, %cst_42 {dimension_numbers = #tpu.dot_dimension_numbers<[1], [0], [0], [1], [0, 0, 1, 1], [], []>} : vector<17x17xbf16>, vector<17x32xbf16>, vector<17x32xf32> -> vector<17x32xf32>
    %129 = arith.truncf %128 : vector<17x32xf32> to vector<17x32xbf16>
    %c96 = arith.constant 96 : index
    %c0_43 = arith.constant 0 : index
    %130 = vector.load %arg6[%c96, %c0_43] : memref<128x128xbf16, #tpu.memory_space<vmem>>, vector<32x128xbf16>
    %cst_44 = arith.constant dense<0.000000e+00> : vector<17x128xf32>
    %131 = tpu.matmul %129, %130, %cst_44 {dimension_numbers = #tpu.dot_dimension_numbers<[1], [0], [0], [1], [0, 0, 1, 1], [], []>} : vector<17x32xbf16>, vector<32x128xbf16>, vector<17x128xf32> -> vector<17x128xf32>
    %132 = arith.addf %107, %131 : vector<17x128xf32>
    %133 = arith.addf %1, %132 : vector<17x128xf32>
    %c0_45 = arith.constant 0 : index
    %c0_46 = arith.constant 0 : index
    %134 = vector.load %arg7[%c0_45, %c0_46] : memref<1x128xf32, #tpu.memory_space<vmem>>, vector<1x128xf32>
    %135 = vector.broadcast %134 : vector<1x128xf32> to vector<17x128xf32>
    %136 = arith.addf %133, %135 : vector<17x128xf32>
    %c0_47 = arith.constant 0 : index
    %c0_48 = arith.constant 0 : index
    %137 = vector.load %arg8[%c0_47, %c0_48] : memref<1x128xf32, #tpu.memory_space<vmem>>, vector<1x128xf32>
    %c0_49 = arith.constant 0 : index
    %c0_50 = arith.constant 0 : index
    %138 = vector.load %arg9[%c0_49, %c0_50] : memref<1x128xf32, #tpu.memory_space<vmem>>, vector<1x128xf32>
    %cst_51 = arith.constant dense<0.000000e+00> : vector<17xf32>
    %139 = vector.multi_reduction <add>, %136, %cst_51 [1] : vector<17x128xf32> to vector<17xf32>
    %140 = vector.shape_cast %139 : vector<17xf32> to vector<17x1xf32>
    %cst_52 = arith.constant 1.280000e+02 : f32
    %141 = vector.broadcast %cst_52 : f32 to vector<17x1xf32>
    %142 = arith.divf %140, %141 : vector<17x1xf32>
    %143 = vector.broadcast %142 : vector<17x1xf32> to vector<17x128xf32>
    %144 = arith.subf %136, %143 : vector<17x128xf32>
    %145 = arith.mulf %144, %144 : vector<17x128xf32>
    %cst_53 = arith.constant dense<0.000000e+00> : vector<17xf32>
    %146 = vector.multi_reduction <add>, %145, %cst_53 [1] : vector<17x128xf32> to vector<17xf32>
    %147 = vector.shape_cast %146 : vector<17xf32> to vector<17x1xf32>
    %cst_54 = arith.constant 1.280000e+02 : f32
    %148 = vector.broadcast %cst_54 : f32 to vector<17x1xf32>
    %149 = arith.divf %147, %148 : vector<17x1xf32>
    %150 = vector.broadcast %142 : vector<17x1xf32> to vector<17x128xf32>
    %151 = arith.subf %136, %150 : vector<17x128xf32>
    %cst_55 = arith.constant 9.99999974E-6 : f32
    %152 = vector.broadcast %cst_55 : f32 to vector<17x1xf32>
    %153 = arith.addf %149, %152 : vector<17x1xf32>
    %154 = math.rsqrt %153 : vector<17x1xf32>
    %155 = vector.broadcast %154 : vector<17x1xf32> to vector<17x128xf32>
    %156 = arith.mulf %151, %155 : vector<17x128xf32>
    %157 = vector.broadcast %137 : vector<1x128xf32> to vector<17x128xf32>
    %158 = arith.mulf %156, %157 : vector<17x128xf32>
    %159 = vector.broadcast %138 : vector<1x128xf32> to vector<17x128xf32>
    %160 = arith.addf %158, %159 : vector<17x128xf32>
    %161 = arith.truncf %160 : vector<17x128xf32> to vector<17x128xbf16>
    %c0_56 = arith.constant 0 : index
    %c0_57 = arith.constant 0 : index
    %162 = vector.load %arg10[%c0_56, %c0_57] : memref<128x512xbf16, #tpu.memory_space<vmem>>, vector<128x512xbf16>
    %cst_58 = arith.constant dense<0.000000e+00> : vector<17x512xf32>
    %163 = tpu.matmul %161, %162, %cst_58 {dimension_numbers = #tpu.dot_dimension_numbers<[1], [0], [0], [1], [0, 0, 1, 1], [], []>} : vector<17x128xbf16>, vector<128x512xbf16>, vector<17x512xf32> -> vector<17x512xf32>
    %c0_59 = arith.constant 0 : index
    %c0_60 = arith.constant 0 : index
    %164 = vector.load %arg11[%c0_59, %c0_60] : memref<1x512xf32, #tpu.memory_space<vmem>>, vector<1x512xf32>
    %165 = vector.broadcast %164 : vector<1x512xf32> to vector<17x512xf32>
    %166 = arith.addf %163, %165 : vector<17x512xf32>
    %cst_61 = arith.constant -1.702000e+00 : f32
    %167 = vector.broadcast %cst_61 : f32 to vector<17x512xf32>
    %168 = arith.mulf %167, %166 : vector<17x512xf32>
    %169 = math.exp %168 : vector<17x512xf32>
    %cst_62 = arith.constant 1.000000e+00 : f32
    %170 = vector.broadcast %cst_62 : f32 to vector<17x512xf32>
    %171 = arith.addf %170, %169 : vector<17x512xf32>
    %172 = tpu.reciprocal %171 {approx = true} : vector<17x512xf32> -> vector<17x512xf32>
    %173 = arith.mulf %166, %172 : vector<17x512xf32>
    %174 = arith.truncf %173 : vector<17x512xf32> to vector<17x512xbf16>
    %c0_63 = arith.constant 0 : index
    %c0_64 = arith.constant 0 : index
    %175 = vector.load %arg12[%c0_63, %c0_64] : memref<512x128xbf16, #tpu.memory_space<vmem>>, vector<512x128xbf16>
    %cst_65 = arith.constant dense<0.000000e+00> : vector<17x128xf32>
    %176 = tpu.matmul %174, %175, %cst_65 {dimension_numbers = #tpu.dot_dimension_numbers<[1], [0], [0], [1], [0, 0, 1, 1], [], []>} : vector<17x512xbf16>, vector<512x128xbf16>, vector<17x128xf32> -> vector<17x128xf32>
    %c0_66 = arith.constant 0 : index
    %c0_67 = arith.constant 0 : index
    %177 = vector.load %arg13[%c0_66, %c0_67] : memref<1x128xf32, #tpu.memory_space<vmem>>, vector<1x128xf32>
    %178 = vector.broadcast %177 : vector<1x128xf32> to vector<17x128xf32>
    %179 = arith.addf %176, %178 : vector<17x128xf32>
    %180 = arith.addf %136, %179 : vector<17x128xf32>
    %c0_68 = arith.constant 0 : index
    %c0_69 = arith.constant 0 : index
    %c0_70 = arith.constant 0 : index
    %181 = vector.load %arg14[%c0_68, %c0_69, %c0_70] : memref<1x17x128xf32, #tpu.memory_space<vmem>>, vector<1x17x128xf32>
    %182 = vector.shape_cast %181 : vector<1x17x128xf32> to vector<17x128xf32>
    %183 = vector.shape_cast %180 : vector<17x128xf32> to vector<1x17x128xf32>
    tpu.vector_store %arg14[%c0_68, %c0_69, %c0_70], %183 {strides = array<i32>} : memref<1x17x128xf32, #tpu.memory_space<vmem>>, vector<1x17x128xf32>,
    return
  }
  func.func @transform_0(%arg0: i32) -> (i32, i32, i32) {
    %c0_i32 = arith.constant 0 : i32
    %c0_i32_0 = arith.constant 0 : i32
    %c0_i32_1 = arith.constant 0 : i32
    return %arg0, %c0_i32, %c0_i32_0 : i32, i32, i32
  }
  func.func @transform_1(%arg0: i32) -> (i32, i32) {
    %c0_i32 = arith.constant 0 : i32
    %c0_i32_0 = arith.constant 0 : i32
    %c0_i32_1 = arith.constant 0 : i32
    return %c0_i32, %c0_i32_0 : i32, i32
  }
  func.func @transform_2(%arg0: i32) -> (i32, i32) {
    %c0_i32 = arith.constant 0 : i32
    %c0_i32_0 = arith.constant 0 : i32
    %c0_i32_1 = arith.constant 0 : i32
    return %c0_i32, %c0_i32_0 : i32, i32
  }
  func.func @transform_3(%arg0: i32) -> (i32, i32) {
    %c0_i32 = arith.constant 0 : i32
    %c0_i32_0 = arith.constant 0 : i32
    %c0_i32_1 = arith.constant 0 : i32
    return %c0_i32, %c0_i32_0 : i32, i32
  }
  func.func @transform_4(%arg0: i32) -> (i32, i32) {
    %c0_i32 = arith.constant 0 : i32
    %c0_i32_0 = arith.constant 0 : i32
    %c0_i32_1 = arith.constant 0 : i32
    return %c0_i32, %c0_i32_0 : i32, i32
  }
  func.func @transform_5(%arg0: i32) -> (i32, i32) {
    %c0_i32 = arith.constant 0 : i32
    %c0_i32_0 = arith.constant 0 : i32
    %c0_i32_1 = arith.constant 0 : i32
    return %c0_i32, %c0_i32_0 : i32, i32
  }
  func.func @transform_6(%arg0: i32) -> (i32, i32) {
    %c0_i32 = arith.constant 0 : i32
    %c0_i32_0 = arith.constant 0 : i32
    %c0_i32_1 = arith.constant 0 : i32
    return %c0_i32, %c0_i32_0 : i32, i32
  }
  func.func @transform_7(%arg0: i32) -> (i32, i32) {
    %c0_i32 = arith.constant 0 : i32
    %c0_i32_0 = arith.constant 0 : i32
    %c0_i32_1 = arith.constant 0 : i32
    return %c0_i32, %c0_i32_0 : i32, i32
  }
  func.func @transform_8(%arg0: i32) -> (i32, i32) {
    %c0_i32 = arith.constant 0 : i32
    %c0_i32_0 = arith.constant 0 : i32
    %c0_i32_1 = arith.constant 0 : i32
    return %c0_i32, %c0_i32_0 : i32, i32
  }
  func.func @transform_9(%arg0: i32) -> (i32, i32) {
    %c0_i32 = arith.constant 0 : i32
    %c0_i32_0 = arith.constant 0 : i32
    %c0_i32_1 = arith.constant 0 : i32
    return %c0_i32, %c0_i32_0 : i32, i32
  }
  func.func @transform_10(%arg0: i32) -> (i32, i32) {
    %c0_i32 = arith.constant 0 : i32
    %c0_i32_0 = arith.constant 0 : i32
    %c0_i32_1 = arith.constant 0 : i32
    return %c0_i32, %c0_i32_0 : i32, i32
  }
  func.func @transform_11(%arg0: i32) -> (i32, i32) {
    %c0_i32 = arith.constant 0 : i32
    %c0_i32_0 = arith.constant 0 : i32
    %c0_i32_1 = arith.constant 0 : i32
    return %c0_i32, %c0_i32_0 : i32, i32
  }
  func.func @transform_12(%arg0: i32) -> (i32, i32) {
    %c0_i32 = arith.constant 0 : i32
    %c0_i32_0 = arith.constant 0 : i32
    %c0_i32_1 = arith.constant 0 : i32
    return %c0_i32, %c0_i32_0 : i32, i32
  }
  func.func @transform_13(%arg0: i32) -> (i32, i32, i32) {
    %c0_i32 = arith.constant 0 : i32
    %c0_i32_0 = arith.constant 0 : i32
    %c0_i32_1 = arith.constant 0 : i32
    return %arg0, %c0_i32, %c0_i32_0 : i32, i32, i32
  }
}

module attributes {stable_mosaic.version = 11 : i64} {
  func.func @_head_kernel(%arg0: memref<2x128xf32, #tpu.memory_space<vmem>>, %arg1: memref<1x128xf32, #tpu.memory_space<vmem>>, %arg2: memref<1x128xf32, #tpu.memory_space<vmem>>, %arg3: memref<128x128xbf16, #tpu.memory_space<vmem>>, %arg4: memref<2x128xf32, #tpu.memory_space<vmem>>) attributes {dimension_semantics = [], scalar_prefetch = 0 : i64, scratch_operands = 0 : i64, tpu.core_type = #tpu.core_type<tc>} {
    %c0 = arith.constant 0 : index
    %c0_0 = arith.constant 0 : index
    %0 = vector.load %arg0[%c0, %c0_0] : memref<2x128xf32, #tpu.memory_space<vmem>>, vector<2x128xf32>
    %c0_1 = arith.constant 0 : index
    %c0_2 = arith.constant 0 : index
    %1 = vector.load %arg1[%c0_1, %c0_2] : memref<1x128xf32, #tpu.memory_space<vmem>>, vector<1x128xf32>
    %c0_3 = arith.constant 0 : index
    %c0_4 = arith.constant 0 : index
    %2 = vector.load %arg2[%c0_3, %c0_4] : memref<1x128xf32, #tpu.memory_space<vmem>>, vector<1x128xf32>
    %cst = arith.constant dense<0.000000e+00> : vector<2xf32>
    %3 = vector.multi_reduction <add>, %0, %cst [1] : vector<2x128xf32> to vector<2xf32>
    %4 = vector.shape_cast %3 : vector<2xf32> to vector<2x1xf32>
    %cst_5 = arith.constant 1.280000e+02 : f32
    %5 = vector.broadcast %cst_5 : f32 to vector<2x1xf32>
    %6 = arith.divf %4, %5 : vector<2x1xf32>
    %7 = vector.broadcast %6 : vector<2x1xf32> to vector<2x128xf32>
    %8 = arith.subf %0, %7 : vector<2x128xf32>
    %9 = arith.mulf %8, %8 : vector<2x128xf32>
    %cst_6 = arith.constant dense<0.000000e+00> : vector<2xf32>
    %10 = vector.multi_reduction <add>, %9, %cst_6 [1] : vector<2x128xf32> to vector<2xf32>
    %11 = vector.shape_cast %10 : vector<2xf32> to vector<2x1xf32>
    %cst_7 = arith.constant 1.280000e+02 : f32
    %12 = vector.broadcast %cst_7 : f32 to vector<2x1xf32>
    %13 = arith.divf %11, %12 : vector<2x1xf32>
    %14 = vector.broadcast %6 : vector<2x1xf32> to vector<2x128xf32>
    %15 = arith.subf %0, %14 : vector<2x128xf32>
    %cst_8 = arith.constant 9.99999974E-6 : f32
    %16 = vector.broadcast %cst_8 : f32 to vector<2x1xf32>
    %17 = arith.addf %13, %16 : vector<2x1xf32>
    %18 = math.rsqrt %17 : vector<2x1xf32>
    %19 = vector.broadcast %18 : vector<2x1xf32> to vector<2x128xf32>
    %20 = arith.mulf %15, %19 : vector<2x128xf32>
    %21 = vector.broadcast %1 : vector<1x128xf32> to vector<2x128xf32>
    %22 = arith.mulf %20, %21 : vector<2x128xf32>
    %23 = vector.broadcast %2 : vector<1x128xf32> to vector<2x128xf32>
    %24 = arith.addf %22, %23 : vector<2x128xf32>
    %25 = arith.truncf %24 : vector<2x128xf32> to vector<2x128xbf16>
    %c0_9 = arith.constant 0 : index
    %c0_10 = arith.constant 0 : index
    %26 = vector.load %arg3[%c0_9, %c0_10] : memref<128x128xbf16, #tpu.memory_space<vmem>>, vector<128x128xbf16>
    %cst_11 = arith.constant dense<0.000000e+00> : vector<2x128xf32>
    %27 = tpu.matmul %25, %26, %cst_11 {dimension_numbers = #tpu.dot_dimension_numbers<[1], [0], [0], [1], [0, 0, 1, 1], [], []>} : vector<2x128xbf16>, vector<128x128xbf16>, vector<2x128xf32> -> vector<2x128xf32>
    %c0_12 = arith.constant 0 : index
    %c0_13 = arith.constant 0 : index
    %28 = vector.load %arg4[%c0_12, %c0_13] : memref<2x128xf32, #tpu.memory_space<vmem>>, vector<2x128xf32>
    tpu.vector_store %arg4[%c0_12, %c0_13], %27 {strides = array<i32>} : memref<2x128xf32, #tpu.memory_space<vmem>>, vector<2x128xf32>,
    return
  }
}

</mosaic_0001>

<llo_original>
// kernel: clip_featurizer_forward.7
$region0: #{clip_featurizer_forward.7}
  #allocation0 [shape = 'u32[]', space=smem, size = 0x4, offset = 0x4, fixed_abs, tag = 'smem constant byte address 0x4 - core index']
  #allocation1 [shape = 'u32[144,128]{1,0:T(1,128)}', space=vmem, size = 0x12000, scoped, tag = 'internal scratch']
  %s0 = inlined_call_operand.vmem [shape: f32[2,128], index: 0, kind: input, shape index: {}]
  %s1 = inlined_call_operand.vmem [shape: f32[1,128], index: 1, kind: input, shape index: {}]
  %s2 = inlined_call_operand.vmem [shape: f32[1,128], index: 2, kind: input, shape index: {}]
  %s3 = inlined_call_operand.vmem [shape: bf16[128,128], index: 3, kind: input, shape index: {}]
  %s4 = inlined_call_operand.hbm [shape: f32[2,128], index: 4, kind: output, shape index: {}]
  %s5 = sld [smem:[#allocation0]]
  $region26: #{clip_featurizer_forward.7} parent=0
    _
  %s7 = ssub.s32 1, %s5
  %s8 = scalar_select 0, %s7, %s5
  $region1: #{clip_featurizer_forward.7} parent=0
    #allocation2 [shape = 'u8[1024]{0}', space=vmem, size = 0x400, scoped, tag = 'output window, operand 0, single buffered']
    #allocation3 [shape = 's32[1]{0}', space=sflag, size = 0x4, scoped, tag = 'scoped memory for clip_featurizer_forward.7']
    %9 = vsyncpa [#allocation3], 0
    // Predicated region
    $region2: #{clip_featurizer_forward.7} parent=1 // pred_check
      _
    $region3: #{clip_featurizer_forward.7} parent=1 // pred_check_branch
      %11 = sbr.rel (0) target = $region5
    $region4: #{clip_featurizer_forward.7} parent=1 // pred_region
      _
    $region5: #{clip_featurizer_forward.7} parent=1 // pred_fallthru
      _
    // Predicated region
    $region6: #{clip_featurizer_forward.7} parent=1 // pred_check
      _
    $region7: #{clip_featurizer_forward.7} parent=1 // pred_check_branch
      %13 = sbr.rel (0) target = $region9
    $region8: #{clip_featurizer_forward.7} parent=1 // pred_region
      _
    $region9: #{clip_featurizer_forward.7} parent=1 // pred_fallthru
      _
    // Predicated region
    $region10: #{clip_featurizer_forward.7} parent=1 // pred_check
      _
    $region11: #{clip_featurizer_forward.7} parent=1 // pred_check_branch
      %15 = sbr.rel (0) target = $region13
    $region12: #{clip_featurizer_forward.7} parent=1 // pred_region
      _
    $region13: #{clip_featurizer_forward.7} parent=1 // pred_fallthru
      _
    // Predicated region
    $region14: #{clip_featurizer_forward.7} parent=1 // pred_check
      _
    $region15: #{clip_featurizer_forward.7} parent=1 // pred_check_branch
      %17 = sbr.rel (0) target = $region17
    $region16: #{clip_featurizer_forward.7} parent=1 // pred_region
      _
    $region17: #{clip_featurizer_forward.7} parent=1 // pred_fallthru
      _
    %v19 = vld [vmem:[%s0] sm:$0x3]
    %v20 = vld [vmem:[%s1] sm:$0x1]
    %v21 = vld [vmem:[%s2] sm:$0x1]
    %vm22 = vcmask 1041408
    %v23 = vsel %vm22, %v19, 0.0
    %24 = vadd.xlane.f32.xlu0 %v23
    %v25 = vpop.xlane.xlu0 %24
    %v26 = vrcp.pop 128.0
    %v27 = vmul.f32 %v25, %v26
    %v28 = vsub.f32 %v19, %v27
    %v29 = vmul.f32 %v28, %v28
    %v30 = vsel %vm22, %v29, 0.0
    %31 = vadd.xlane.f32.xlu0 %v30
    %v32 = vpop.xlane.xlu0 %31
    %v33 = vmul.f32 %v32, %v26
    %v34 = vadd.f32 %v33, 1e-05
    %v35 = vrsqrt.pop %v34
    %v36 = vmul.f32 %v28, %v35
    %v38 = vlaneseq
    %v39 = vshrl.u32 %v38, 7
    %v40 = vsub.s32 0, %v39
    %v41 = vrot.slane %v20, %v40
    %v43 = vmul.f32 %v36, %v41
    %v45 = vlaneseq
    %v46 = vshrl.u32 %v45, 7
    %v47 = vsub.s32 0, %v46
    %v48 = vrot.slane %v21, %v47
    %v50 = vadd.f32 %v43, %v48
    %v51 = vpack.c.bf16 %v50, %v50
    %v52 = vld [vmem:[%s3] sm:$0xf]
    %v53 = vld [vmem:[%s3 + $0x4] sm:$0xf]
    %v54 = vld [vmem:[%s3 + $0x8] sm:$0xf]
    %v55 = vld [vmem:[%s3 + $0xc] sm:$0xf]
    %v56 = vld [vmem:[%s3 + $0x10] sm:$0xf]
    %v57 = vld [vmem:[%s3 + $0x14] sm:$0xf]
    %v58 = vld [vmem:[%s3 + $0x18] sm:$0xf]
    %v59 = vld [vmem:[%s3 + $0x1c] sm:$0xf]
    %v60 = vld [vmem:[%s3 + $0x20] sm:$0xf]
    %v61 = vld [vmem:[%s3 + $0x24] sm:$0xf]
    %v62 = vld [vmem:[%s3 + $0x28] sm:$0xf]
    %v63 = vld [vmem:[%s3 + $0x2c] sm:$0xf]
    %v64 = vld [vmem:[%s3 + $0x30] sm:$0xf]
    %v65 = vld [vmem:[%s3 + $0x34] sm:$0xf]
    %v66 = vld [vmem:[%s3 + $0x38] sm:$0xf]
    %v67 = vld [vmem:[%s3 + $0x3c] sm:$0xf]
    %v84 = vunpack.c.l.b16 %v52
    %v85 = vunpack.c.l.b16 %v53
    %v86 = vunpack.c.l.b16 %v54
    %v87 = vunpack.c.l.b16 %v55
    %v88 = vunpack.c.l.b16 %v56
    %v89 = vunpack.c.l.b16 %v57
    %v90 = vunpack.c.l.b16 %v58
    %v91 = vunpack.c.l.b16 %v59
    %v92 = vunpack.c.l.b16 %v60
    %v93 = vunpack.c.l.b16 %v61
    %v94 = vunpack.c.l.b16 %v62
    %v95 = vunpack.c.l.b16 %v63
    %v96 = vunpack.c.l.b16 %v64
    %v97 = vunpack.c.l.b16 %v65
    %v98 = vunpack.c.l.b16 %v66
    %v99 = vunpack.c.l.b16 %v67
    %v100 = vpack.c.b16 %v85, %v84
    %v101 = vpack.c.b16 %v87, %v86
    %v102 = vpack.c.b16 %v89, %v88
    %v103 = vpack.c.b16 %v91, %v90
    %v104 = vpack.c.b16 %v93, %v92
    %v105 = vpack.c.b16 %v95, %v94
    %v106 = vpack.c.b16 %v97, %v96
    %v107 = vpack.c.b16 %v99, %v98
    %116 = vmatprep.subr.bf16.mxu0 0
    %117 = vmatpush1.bf16.msra.mxu0 %v100
    %118 = vmatprep.subr.bf16.mxu0 0
    %119 = vmatpush1.bf16.msra.mxu0 %v101
    %120 = vmatprep.subr.bf16.mxu0 0
    %121 = vmatpush1.bf16.msra.mxu0 %v102
    %122 = vmatprep.subr.bf16.mxu0 0
    %123 = vmatpush1.bf16.msra.mxu0 %v103
    %124 = vmatprep.subr.bf16.mxu0 0
    %125 = vmatpush1.bf16.msra.mxu0 %v104
    %126 = vmatprep.subr.bf16.mxu0 0
    %127 = vmatpush1.bf16.msra.mxu0 %v105
    %128 = vmatprep.subr.bf16.mxu0 0
    %129 = vmatpush1.bf16.msra.mxu0 %v106
    %130 = vmatprep.subr.bf16.mxu0 0
    %131 = vmatpush1.bf16.msra.mxu0 %v107
    %132 = vmatprep.subr.bf16.mxu0 0
    %133 = vmatpush1.bf16.msra.mxu0 0
    %134 = vmatprep.subr.bf16.mxu0 0
    %135 = vmatpush1.bf16.msra.mxu0 0
    %136 = vmatprep.subr.bf16.mxu0 0
    %137 = vmatpush1.bf16.msra.mxu0 0
    %138 = vmatprep.subr.bf16.mxu0 0
    %139 = vmatpush1.bf16.msra.mxu0 0
    %140 = vmatprep.subr.bf16.mxu0 0
    %141 = vmatpush1.bf16.msra.mxu0 0
    %142 = vmatprep.subr.bf16.mxu0 0
    %143 = vmatpush1.bf16.msra.mxu0 0
    %144 = vmatprep.subr.bf16.mxu0 0
    %145 = vmatpush1.bf16.msra.mxu0 0
    %146 = vmatprep.subr.bf16.mxu0 0
    %147 = vmatpush1.bf16.msra.mxu0 0
    %148 = vmatprep.mubr.bf16.mxu0 0
    %149 = vmatmul.mubr.bf16.gmra.mrb[0].mxu0 %v51
    %v150 = vpop.f32.mrb[0].mxu0
    %v151 = vadd.f32 0.0, %v150
    %v152 = vpop.f32.mrb[0].mxu0
    %v153 = vpop.f32.mrb[0].mxu0
    %v154 = vpop.f32.mrb[0].mxu0
    %155 = vdwg.mxu0
    %156 = vst [vmem:[#allocation2] sm:$0x3] %v151
    // Predicated region
    $region18: #{clip_featurizer_forward.7} parent=1 // pred_check
      _
    $region19: #{clip_featurizer_forward.7} parent=1 // pred_check_branch
      %158 = sbr.rel (0) target = $region21
    $region20: #{clip_featurizer_forward.7} parent=1 // pred_region
      %s160 = ssub.s32 32, 32
      %161 = vsyncadd [#allocation3], %s160
      %s163 = sshll.u32 [#allocation2], 4
      %s164 = int_to_ptr.vmem [resolvable:$true] %s163
      %166 = dma.vmem_to_hbm [thread:$0]  %s164, 32, %s4, [#allocation3]
    $region21: #{clip_featurizer_forward.7} parent=1 // pred_fallthru
      _
    // Predicated region
    $region22: #{clip_featurizer_forward.7} parent=1 // pred_check
      _
    $region23: #{clip_featurizer_forward.7} parent=1 // pred_check_branch
      %168 = sbr.rel (0) target = $region25
    $region24: #{clip_featurizer_forward.7} parent=1 // pred_region
      %169 = dma.done [#allocation3], 32
    $region25: #{clip_featurizer_forward.7} parent=1 // pred_fallthru
      _
    %170 = vsyncpa [#allocation3], 1

// kernel: clip_featurizer_forward.4
$region0: #{clip_featurizer_forward.4}
  #allocation0 [shape = 'u32[]', space=smem, size = 0x4, offset = 0x4, fixed_abs, tag = 'smem constant byte address 0x4 - core index']
  #allocation1 [shape = 'u32[144,128]{1,0:T(1,128)}', space=vmem, size = 0x12000, scoped, tag = 'internal scratch']
  %s0 = inlined_call_operand.vmem [shape: f32[2,17,192], index: 0, kind: input, shape index: {}]
  %s1 = inlined_call_operand.vmem [shape: bf16[192,128], index: 1, kind: input, shape index: {}]
  %s2 = inlined_call_operand.vmem [shape: f32[17,128], index: 2, kind: input, shape index: {}]
  %s3 = inlined_call_operand.vmem [shape: f32[1,128], index: 3, kind: input, shape index: {}]
  %s4 = inlined_call_operand.vmem [shape: f32[1,128], index: 4, kind: input, shape index: {}]
  %s5 = inlined_call_operand.vmem [shape: f32[2,17,128], index: 5, kind: output, shape index: {}]
  %s6 = sld [smem:[#allocation0]]
  $region53: #{clip_featurizer_forward.4} parent=0
    _
  %s8 = ssub.s32 1, %s6
  %s9 = scalar_select 0, %s8, %s6
  loop: start=0, step=1, limit=4
  $region2: #{clip_featurizer_forward.4} parent=0 // loop_pre_header
    _
  $region3: #{clip_featurizer_forward.4} parent=0 // loop_header
    %s11 = sphi 0, %s15
    %p12 = scmp.ge.s32.totalorder %s11, 4
    %s21 = sphi 0, %s23
    %s24 = sphi 0, %s21
    %s25 = sphi 0, %s24
    %s41 = sphi 0, %s25
    %s45 = sphi 0, %s45
    %s47 = sphi 0, %s45
    %s48 = sphi 0, %s47
    %s62 = sphi 0, %s48
    %s66 = sphi 0, %s66
    %s68 = sphi 0, %s66
    %s69 = sphi 0, %s68
    %s83 = sphi 0, %s69
    %s87 = sphi 0, %s87
    %s89 = sphi 0, %s87
    %s90 = sphi 0, %s89
    %s104 = sphi 0, %s90
    %s108 = sphi 0, %s108
    %s110 = sphi 0, %s108
    %s111 = sphi 0, %s110
    %s125 = sphi 0, %s111
    %s131 = sphi 0, %s133
    %s134 = sphi 0, %s131
    %s135 = sphi 0, %s134
    %s151 = sphi 0, %s135
  $region4: #{clip_featurizer_forward.4} parent=0 // loop_header_branch
    %14 = sbr.rel (%p12) target = $region8
  $region5: #{clip_featurizer_forward.4} parent=0 // loop_body
    %s16 = ssub.s32 %s11, 1
    %s17 = ssub.s32 %s11, 2
    %s18 = sadd.s32 %s11, 1
    %s19 = ssub.s32 %s11, %s18
    %p20 = scmp.eq.s32.totalorder %s19, 0
    %s22 = sadd.s32 %s21, 1
    %s23 = scalar_select %p20, %s21, %s22
    %p26 = pneg %p20
    %p27 = scmp.eq.s32.totalorder %s11, 1
    %p28 = por %p26, %p27
    %p29 = scmp.ne.s32.totalorder %s21, %s24
    %p30 = scmp.eq.s32.totalorder %s11, 0
    %p31 = por %p29, %p30
    %p32 = scmp.ne.s32.totalorder %s21, %s24
    %p33 = scmp.eq.s32.totalorder %s16, 1
    %p34 = por %p32, %p33
    %p35 = scmp.ne.s32.totalorder %s24, %s25
    %p36 = scmp.eq.s32.totalorder %s16, 0
    %p37 = por %p35, %p36
    %p38 = scmp.ne.s32.totalorder %s24, %s25
    %p39 = scmp.eq.s32.totalorder %s17, 1
    %p40 = por %p38, %p39
    %p42 = scmp.ne.s32.totalorder %s25, %s41
    %p43 = scmp.eq.s32.totalorder %s17, 0
    %p44 = por %p42, %p43
    %s46 = sadd.s32 %s45, 1
    %p49 = scmp.eq.s32.totalorder %s11, 1
    %p50 = scmp.ne.s32.totalorder %s45, %s47
    %p51 = scmp.eq.s32.totalorder %s11, 0
    %p52 = por %p50, %p51
    %p53 = scmp.ne.s32.totalorder %s45, %s47
    %p54 = scmp.eq.s32.totalorder %s16, 1
    %p55 = por %p53, %p54
    %p56 = scmp.ne.s32.totalorder %s47, %s48
    %p57 = scmp.eq.s32.totalorder %s16, 0
    %p58 = por %p56, %p57
    %p59 = scmp.ne.s32.totalorder %s47, %s48
    %p60 = scmp.eq.s32.totalorder %s17, 1
    %p61 = por %p59, %p60
    %p63 = scmp.ne.s32.totalorder %s48, %s62
    %p64 = scmp.eq.s32.totalorder %s17, 0
    %p65 = por %p63, %p64
    %s67 = sadd.s32 %s66, 1
    %p70 = scmp.eq.s32.totalorder %s11, 1
    %p71 = scmp.ne.s32.totalorder %s66, %s68
    %p72 = scmp.eq.s32.totalorder %s11, 0
    %p73 = por %p71, %p72
    %p74 = scmp.ne.s32.totalorder %s66, %s68
    %p75 = scmp.eq.s32.totalorder %s16, 1
    %p76 = por %p74, %p75
    %p77 = scmp.ne.s32.totalorder %s68, %s69
    %p78 = scmp.eq.s32.totalorder %s16, 0
    %p79 = por %p77, %p78
    %p80 = scmp.ne.s32.totalorder %s68, %s69
    %p81 = scmp.eq.s32.totalorder %s17, 1
    %p82 = por %p80, %p81
    %p84 = scmp.ne.s32.totalorder %s69, %s83
    %p85 = scmp.eq.s32.totalorder %s17, 0
    %p86 = por %p84, %p85
    %s88 = sadd.s32 %s87, 1
    %p91 = scmp.eq.s32.totalorder %s11, 1
    %p92 = scmp.ne.s32.totalorder %s87, %s89
    %p93 = scmp.eq.s32.totalorder %s11, 0
    %p94 = por %p92, %p93
    %p95 = scmp.ne.s32.totalorder %s87, %s89
    %p96 = scmp.eq.s32.totalorder %s16, 1
    %p97 = por %p95, %p96
    %p98 = scmp.ne.s32.totalorder %s89, %s90
    %p99 = scmp.eq.s32.totalorder %s16, 0
    %p100 = por %p98, %p99
    %p101 = scmp.ne.s32.totalorder %s89, %s90
    %p102 = scmp.eq.s32.totalorder %s17, 1
    %p103 = por %p101, %p102
    %p105 = scmp.ne.s32.totalorder %s90, %s104
    %p106 = scmp.eq.s32.totalorder %s17, 0
    %p107 = por %p105, %p106
    %s109 = sadd.s32 %s108, 1
    %p112 = scmp.eq.s32.totalorder %s11, 1
    %p113 = scmp.ne.s32.totalorder %s108, %s110
    %p114 = scmp.eq.s32.totalorder %s11, 0
    %p115 = por %p113, %p114
    %p116 = scmp.ne.s32.totalorder %s108, %s110
    %p117 = scmp.eq.s32.totalorder %s16, 1
    %p118 = por %p116, %p117
    %p119 = scmp.ne.s32.totalorder %s110, %s111
    %p120 = scmp.eq.s32.totalorder %s16, 0
    %p121 = por %p119, %p120
    %p122 = scmp.ne.s32.totalorder %s110, %s111
    %p123 = scmp.eq.s32.totalorder %s17, 1
    %p124 = por %p122, %p123
    %p126 = scmp.ne.s32.totalorder %s111, %s125
    %p127 = scmp.eq.s32.totalorder %s17, 0
    %p128 = por %p126, %p127
    %s129 = ssub.s32 %s11, %s18
    %p130 = scmp.eq.s32.totalorder %s129, 0
    %s132 = sadd.s32 %s131, 1
    %s133 = scalar_select %p130, %s131, %s132
    %p136 = pneg %p130
    %p137 = scmp.eq.s32.totalorder %s11, 1
    %p138 = por %p136, %p137
    %p139 = scmp.ne.s32.totalorder %s131, %s134
    %p140 = scmp.eq.s32.totalorder %s11, 0
    %p141 = por %p139, %p140
    %p142 = scmp.ne.s32.totalorder %s131, %s134
    %p143 = scmp.eq.s32.totalorder %s16, 1
    %p144 = por %p142, %p143
    %p145 = scmp.ne.s32.totalorder %s134, %s135
    %p146 = scmp.eq.s32.totalorder %s16, 0
    %p147 = por %p145, %p146
    %p148 = scmp.ne.s32.totalorder %s134, %s135
    %p149 = scmp.eq.s32.totalorder %s17, 1
    %p150 = por %p148, %p149
    %p152 = scmp.ne.s32.totalorder %s135, %s151
    %p153 = scmp.eq.s32.totalorder %s17, 0
    %p154 = por %p152, %p153
    %p155 = scmp.le.s32.totalorder 1, %s11
    %p156 = scmp.lt.s32.totalorder %s11, 3
    %p157 = pnand %p155, %p156
    %p158 = pneg %p157
    // Predicated region
    $region9: #{clip_featurizer_forward.4} parent=5 // pred_check
      _
    $region10: #{clip_featurizer_forward.4} parent=5 // pred_check_branch
      %160 = sbr.rel (%p157) target = $region12
    $region11: #{clip_featurizer_forward.4} parent=5 // pred_region
      %s161 = ssub.s32 %s11, 1
      // Predicated region
      $region13: #{clip_featurizer_forward.4} parent=11 // pred_check
        %p162 = pneg %p58
      $region14: #{clip_featurizer_forward.4} parent=11 // pred_check_branch
        %164 = sbr.rel (%p162) target = $region16
      $region15: #{clip_featurizer_forward.4} parent=11 // pred_region
        _
      $region16: #{clip_featurizer_forward.4} parent=11 // pred_fallthru
        _
      // Predicated region
      $region17: #{clip_featurizer_forward.4} parent=11 // pred_check
        %p165 = pneg %p79
      $region18: #{clip_featurizer_forward.4} parent=11 // pred_check_branch
        %167 = sbr.rel (%p165) target = $region20
      $region19: #{clip_featurizer_forward.4} parent=11 // pred_region
        _
      $region20: #{clip_featurizer_forward.4} parent=11 // pred_fallthru
        _
      // Predicated region
      $region21: #{clip_featurizer_forward.4} parent=11 // pred_check
        %p168 = pneg %p100
      $region22: #{clip_featurizer_forward.4} parent=11 // pred_check_branch
        %170 = sbr.rel (%p168) target = $region24
      $region23: #{clip_featurizer_forward.4} parent=11 // pred_region
        _
      $region24: #{clip_featurizer_forward.4} parent=11 // pred_fallthru
        _
      // Predicated region
      $region25: #{clip_featurizer_forward.4} parent=11 // pred_check
        %p171 = pneg %p121
      $region26: #{clip_featurizer_forward.4} parent=11 // pred_check_branch
        %173 = sbr.rel (%p171) target = $region28
      $region27: #{clip_featurizer_forward.4} parent=11 // pred_region
        _
      $region28: #{clip_featurizer_forward.4} parent=11 // pred_fallthru
        _
    $region12: #{clip_featurizer_forward.4} parent=5 // pred_fallthru
      _
    %p174 = scmp.lt.s32.totalorder %s11, 2
    // Predicated region
    $region29: #{clip_featurizer_forward.4} parent=5 // pred_check
      %p175 = pneg %p174
    $region30: #{clip_featurizer_forward.4} parent=5 // pred_check_branch
      %177 = sbr.rel (%p175) target = $region32
    $region31: #{clip_featurizer_forward.4} parent=5 // pred_region
      // Predicated region
      $region33: #{clip_featurizer_forward.4} parent=31 // pred_check
        %p178 = pneg %p31
      $region34: #{clip_featurizer_forward.4} parent=31 // pred_check_branch
        %180 = sbr.rel (%p178) target = $region36
      $region35: #{clip_featurizer_forward.4} parent=31 // pred_region
        %p181 = scmp.lt.s32.totalorder %s11, 1
        %s182 = scalar_select %p181, %s11, 1
        %s183 = smul.addr %s182, 6
        %s184 = smul.addr %s183, 8
        %s185 = scalar_lea.vmem %s0, %s184
      $region36: #{clip_featurizer_forward.4} parent=31 // pred_fallthru
        _
    $region32: #{clip_featurizer_forward.4} parent=5 // pred_fallthru
      _
    %p186 = scmp.le.s32.totalorder 1, %s11
    %p187 = scmp.lt.s32.totalorder %s11, 3
    %p188 = pnand %p186, %p187
    %p189 = pneg %p188
    // Predicated region
    $region37: #{clip_featurizer_forward.4} parent=5 // pred_check
      _
    $region38: #{clip_featurizer_forward.4} parent=5 // pred_check_branch
      %191 = sbr.rel (%p188) target = $region40
    $region39: #{clip_featurizer_forward.4} parent=5 // pred_region
      %s192 = ssub.s32 %s11, 1
      %p193 = scmp.lt.s32.totalorder %s16, 1
      %s194 = scalar_select %p193, %s16, 1
      %s195 = smul.addr %s194, 6
      %s196 = smul.addr %s195, 8
      %s197 = scalar_lea.vmem %s0, %s196
      %p198 = pneg %p37
      %p199 = pneg %p34
      %p200 = pneg %p58
      %p201 = pneg %p55
      %p202 = pneg %p79
      %p203 = pneg %p76
      %p204 = pneg %p100
      %p205 = pneg %p97
      %p206 = pneg %p121
      %p207 = pneg %p118
      %p208 = pneg %p147
      %p209 = pneg %p144
      %p210 = scmp.lt.s32.totalorder %s16, 1
      %s211 = scalar_select %p210, %s16, 1
      %s212 = smul.addr %s211, 3
      %s213 = smul.addr %s212, 8
      %s214 = scalar_lea.vmem %s5, %s213
      %p215 = scmp.lt.s32.totalorder %s16, 1
      %s216 = scalar_select %p215, %s16, 1
      %s217 = smul.addr %s216, 6
      %s218 = smul.addr %s217, 8
      %s219 = scalar_lea.vmem %s0, %s218
      %p220 = scmp.lt.s32.totalorder %s16, 1
      %s221 = scalar_select %p220, %s16, 1
      %s222 = smul.addr %s221, 3
      %s223 = smul.addr %s222, 8
      %s224 = scalar_lea.vmem %s5, %s223
      %v226 = vld [vmem:[%s219] sm:$0xff]
      %v227 = vld [vmem:[%s219 + $0x8] sm:$0xff]
      %v228 = vld [vmem:[%s219 + $0x10] sm:$0xff]
      %v229 = vld [vmem:[%s219 + $0x18] sm:$0xff]
      %v230 = vld [vmem:[%s219 + $0x20] sm:$0x1]
      %v231 = vld [vmem:[%s219 + $0x28] sm:$0x1]
      %v232 = vpack.c.bf16 %v228, %v226
      %v233 = vpack.c.bf16 %v229, %v227
      %v234 = vpack.c.bf16 %v230, %v230
      %v235 = vpack.c.bf16 %v231, %v231
      %v236 = vld [vmem:[%s1] sm:$0xf]
      %v237 = vld [vmem:[%s1 + $0x4] sm:$0xf]
      %v238 = vld [vmem:[%s1 + $0x8] sm:$0xf]
      %v239 = vld [vmem:[%s1 + $0xc] sm:$0xf]
      %v240 = vld [vmem:[%s1 + $0x10] sm:$0xf]
      %v241 = vld [vmem:[%s1 + $0x14] sm:$0xf]
      %v242 = vld [vmem:[%s1 + $0x18] sm:$0xf]
      %v243 = vld [vmem:[%s1 + $0x1c] sm:$0xf]
      %v244 = vld [vmem:[%s1 + $0x20] sm:$0xf]
      %v245 = vld [vmem:[%s1 + $0x24] sm:$0xf]
      %v246 = vld [vmem:[%s1 + $0x28] sm:$0xf]
      %v247 = vld [vmem:[%s1 + $0x2c] sm:$0xf]
      %v248 = vld [vmem:[%s1 + $0x30] sm:$0xf]
      %v249 = vld [vmem:[%s1 + $0x34] sm:$0xf]
      %v250 = vld [vmem:[%s1 + $0x38] sm:$0xf]
      %v251 = vld [vmem:[%s1 + $0x3c] sm:$0xf]
      %v252 = vld [vmem:[%s1 + $0x40] sm:$0xf]
      %v253 = vld [vmem:[%s1 + $0x44] sm:$0xf]
      %v254 = vld [vmem:[%s1 + $0x48] sm:$0xf]
      %v255 = vld [vmem:[%s1 + $0x4c] sm:$0xf]
      %v256 = vld [vmem:[%s1 + $0x50] sm:$0xf]
      %v257 = vld [vmem:[%s1 + $0x54] sm:$0xf]
      %v258 = vld [vmem:[%s1 + $0x58] sm:$0xf]
      %v259 = vld [vmem:[%s1 + $0x5c] sm:$0xf]
      %v260 = vld [vmem:[%s2] sm:$0xff]
      %v261 = vld [vmem:[%s2 + $0x8] sm:$0xff]
      %v262 = vld [vmem:[%s2 + $0x10] sm:$0x1]
      %v287 = vunpack.c.l.b16 %v236
      %v288 = vunpack.c.l.b16 %v237
      %v289 = vunpack.c.l.b16 %v238
      %v290 = vunpack.c.l.b16 %v239
      %v291 = vunpack.c.l.b16 %v240
      %v292 = vunpack.c.l.b16 %v241
      %v293 = vunpack.c.l.b16 %v242
      %v294 = vunpack.c.l.b16 %v243
      %v295 = vunpack.c.l.b16 %v244
      %v296 = vunpack.c.l.b16 %v245
      %v297 = vunpack.c.l.b16 %v246
      %v298 = vunpack.c.l.b16 %v247
      %v299 = vunpack.c.l.b16 %v248
      %v300 = vunpack.c.l.b16 %v249
      %v301 = vunpack.c.l.b16 %v250
      %v302 = vunpack.c.l.b16 %v251
      %v303 = vunpack.c.l.b16 %v252
      %v304 = vunpack.c.l.b16 %v253
      %v305 = vunpack.c.l.b16 %v254
      %v306 = vunpack.c.l.b16 %v255
      %v307 = vunpack.c.l.b16 %v256
      %v308 = vunpack.c.l.b16 %v257
      %v309 = vunpack.c.l.b16 %v258
      %v310 = vunpack.c.l.b16 %v259
      %v311 = vpack.c.b16 %v288, %v287
      %v312 = vpack.c.b16 %v290, %v289
      %v313 = vpack.c.b16 %v292, %v291
      %v314 = vpack.c.b16 %v294, %v293
      %v315 = vpack.c.b16 %v296, %v295
      %v316 = vpack.c.b16 %v298, %v297
      %v317 = vpack.c.b16 %v300, %v299
      %v318 = vpack.c.b16 %v302, %v301
      %v319 = vpack.c.b16 %v304, %v303
      %v320 = vpack.c.b16 %v306, %v305
      %v321 = vpack.c.b16 %v308, %v307
      %v322 = vpack.c.b16 %v310, %v309
      %vm335 = vcmask 523264
      %v337 = vsel %vm335, %v233, 0
      %v340 = vsel %vm335, %v235, 0
      %342 = vmatprep.subr.bf16.mxu0 0
      %343 = vmatpush1.bf16.msra.mxu0 %v311
      %344 = vmatprep.subr.bf16.mxu0 0
      %345 = vmatpush1.bf16.msra.mxu0 %v312
      %346 = vmatprep.subr.bf16.mxu0 0
      %347 = vmatpush1.bf16.msra.mxu0 %v313
      %348 = vmatprep.subr.bf16.mxu0 0
      %349 = vmatpush1.bf16.msra.mxu0 %v314
      %350 = vmatprep.subr.bf16.mxu0 0
      %351 = vmatpush1.bf16.msra.mxu0 %v315
      %352 = vmatprep.subr.bf16.mxu0 0
      %353 = vmatpush1.bf16.msra.mxu0 %v316
      %354 = vmatprep.subr.bf16.mxu0 0
      %355 = vmatpush1.bf16.msra.mxu0 %v317
      %356 = vmatprep.subr.bf16.mxu0 0
      %357 = vmatpush1.bf16.msra.mxu0 %v318
      %358 = vmatprep.subr.bf16.mxu0 0
      %359 = vmatpush1.bf16.msra.mxu0 %v319
      %360 = vmatprep.subr.bf16.mxu0 0
      %361 = vmatpush1.bf16.msra.mxu0 %v320
      %362 = vmatprep.subr.bf16.mxu0 0
      %363 = vmatpush1.bf16.msra.mxu0 %v321
      %364 = vmatprep.subr.bf16.mxu0 0
      %365 = vmatpush1.bf16.msra.mxu0 %v322
      %366 = vmatprep.subr.bf16.mxu0 0
      %367 = vmatpush1.bf16.msra.mxu0 0
      %368 = vmatprep.subr.bf16.mxu0 0
      %369 = vmatpush1.bf16.msra.mxu0 0
      %370 = vmatprep.subr.bf16.mxu0 0
      %371 = vmatpush1.bf16.msra.mxu0 0
      %372 = vmatprep.subr.bf16.mxu0 0
      %373 = vmatpush1.bf16.msra.mxu0 0
      %374 = vmatprep.mubr.bf16.mxu0 %v337
      %375 = vmatmul.mubr.bf16.gmra.mrb[0].mxu0 %v232
      %v376 = vpop.f32.mrb[0].mxu0
      %v377 = vadd.f32 %v260, %v376
      %v378 = vpop.f32.mrb[0].mxu0
      %v379 = vpop.f32.mrb[0].mxu0
      %v380 = vadd.f32 %v261, %v379
      %v381 = vpop.f32.mrb[0].mxu0
      %382 = vmatprep.mubr.bf16.mxu0 %v340
      %383 = vmatmul.mubr.bf16.gmra.mrb[0].mxu0 %v234
      %v384 = vpop.f32.mrb[0].mxu0
      %v385 = vadd.f32 %v262, %v384
      %v386 = vpop.f32.mrb[0].mxu0
      %v387 = vpop.f32.mrb[0].mxu0
      %v388 = vpop.f32.mrb[0].mxu0
      %389 = vdwg.mxu0
      %v390 = vld [vmem:[%s3] sm:$0x1]
      %v391 = vld [vmem:[%s4] sm:$0x1]
      %392 = vadd.xlane.f32.xlu0 %v377
      %v393 = vpop.xlane.xlu0 %392
      %394 = vadd.xlane.f32.xlu0 %v380
      %v395 = vpop.xlane.xlu0 %394
      %vm396 = vcmask 1040384
      %v397 = vsel %vm396, %v385, 0.0
      %398 = vadd.xlane.f32.xlu0 %v397
      %v399 = vpop.xlane.xlu0 %398
      %v400 = vrcp.pop 128.0
      %v401 = vmul.f32 %v393, %v400
      %v402 = vmul.f32 %v395, %v400
      %v403 = vmul.f32 %v399, %v400
      %v404 = vsub.f32 %v377, %v401
      %v405 = vsub.f32 %v380, %v402
      %v406 = vsub.f32 %v385, %v403
      %v407 = vmul.f32 %v404, %v404
      %v408 = vmul.f32 %v405, %v405
      %v409 = vmul.f32 %v406, %v406
      %410 = vadd.xlane.f32.xlu0 %v407
      %v411 = vpop.xlane.xlu0 %410
      %412 = vadd.xlane.f32.xlu0 %v408
      %v413 = vpop.xlane.xlu0 %412
      %v414 = vsel %vm396, %v409, 0.0
      %415 = vadd.xlane.f32.xlu0 %v414
      %v416 = vpop.xlane.xlu0 %415
      %v417 = vmul.f32 %v411, %v400
      %v418 = vmul.f32 %v413, %v400
      %v419 = vmul.f32 %v416, %v400
      %v420 = vadd.f32 %v417, 1e-05
      %v421 = vadd.f32 %v418, 1e-05
      %v422 = vadd.f32 %v419, 1e-05
      %v423 = vrsqrt.pop %v420
      %v424 = vrsqrt.pop %v421
      %v425 = vrsqrt.pop %v422
      %v426 = vmul.f32 %v404, %v423
      %v427 = vmul.f32 %v405, %v424
      %v428 = vmul.f32 %v406, %v425
      %v430 = vlaneseq
      %v431 = vshrl.u32 %v430, 7
      %v432 = vsub.s32 0, %v431
      %v433 = vrot.slane %v390, %v432
      %v435 = vmul.f32 %v426, %v433
      %v436 = vmul.f32 %v427, %v433
      %v437 = vmul.f32 %v428, %v433
      %v439 = vlaneseq
      %v440 = vshrl.u32 %v439, 7
      %v441 = vsub.s32 0, %v440
      %v442 = vrot.slane %v391, %v441
      %v444 = vadd.f32 %v435, %v442
      %v445 = vadd.f32 %v436, %v442
      %v446 = vadd.f32 %v437, %v442
      %447 = vst [vmem:[%s224] sm:$0xff] %v444
      %448 = vst [vmem:[%s224 + $0x8] sm:$0xff] %v445
      %449 = vst [vmem:[%s224 + $0x10] sm:$0x1] %v446
      %p450 = scmp.lt.s32.totalorder %s16, 1
      %s451 = scalar_select %p450, %s16, 1
      %s452 = smul.addr %s451, 3
      %s453 = smul.addr %s452, 8
      %s454 = scalar_lea.vmem %s5, %s453
      // Predicated region
      $region41: #{clip_featurizer_forward.4} parent=39 // pred_check
        %p455 = pneg %p144
      $region42: #{clip_featurizer_forward.4} parent=39 // pred_check_branch
        %457 = sbr.rel (%p455) target = $region44
      $region43: #{clip_featurizer_forward.4} parent=39 // pred_region
        _
      $region44: #{clip_featurizer_forward.4} parent=39 // pred_fallthru
        _
    $region40: #{clip_featurizer_forward.4} parent=5 // pred_fallthru
      _
    %p458 = scmp.le.s32.totalorder 2, %s11
    // Predicated region
    $region45: #{clip_featurizer_forward.4} parent=5 // pred_check
      %p459 = pneg %p458
    $region46: #{clip_featurizer_forward.4} parent=5 // pred_check_branch
      %461 = sbr.rel (%p459) target = $region48
    $region47: #{clip_featurizer_forward.4} parent=5 // pred_region
      %s462 = ssub.s32 %s11, 2
      // Predicated region
      $region49: #{clip_featurizer_forward.4} parent=47 // pred_check
        %p463 = pneg %p150
      $region50: #{clip_featurizer_forward.4} parent=47 // pred_check_branch
        %465 = sbr.rel (%p463) target = $region52
      $region51: #{clip_featurizer_forward.4} parent=47 // pred_region
        %p466 = scmp.lt.s32.totalorder %s17, 1
        %s467 = scalar_select %p466, %s17, 1
        %s468 = smul.addr %s467, 3
        %s469 = smul.addr %s468, 8
        %s470 = scalar_lea.vmem %s5, %s469
      $region52: #{clip_featurizer_forward.4} parent=47 // pred_fallthru
        _
    $region48: #{clip_featurizer_forward.4} parent=5 // pred_fallthru
      _
  $region6: #{clip_featurizer_forward.4} parent=0 // loop_footer
    %s15 = sadd.s32 1, %s11
  $region7: #{clip_featurizer_forward.4} parent=0 // loop_footer_branch
    %10 = sbr.rel target = $region3
  $region8: #{clip_featurizer_forward.4} parent=0 // loop_exit
    _

// kernel: clip_featurizer_forward.5
$region0: #{clip_featurizer_forward.5}
  #allocation0 [shape = 'u32[]', space=smem, size = 0x4, offset = 0x4, fixed_abs, tag = 'smem constant byte address 0x4 - core index']
  #allocation1 [shape = 'u32[144,128]{1,0:T(1,128)}', space=vmem, size = 0x12000, scoped, tag = 'internal scratch']
  %s0 = inlined_call_operand.vmem [shape: f32[2,17,128], index: 0, kind: input, shape index: {}]
  %s1 = inlined_call_operand.vmem [shape: f32[1,128], index: 1, kind: input, shape index: {}]
  %s2 = inlined_call_operand.vmem [shape: f32[1,128], index: 2, kind: input, shape index: {}]
  %s3 = inlined_call_operand.vmem [shape: bf16[128,384], index: 3, kind: input, shape index: {}]
  %s4 = inlined_call_operand.vmem [shape: f32[1,384], index: 4, kind: input, shape index: {}]
  %s5 = inlined_call_operand.vmem [shape: bf16[128,128], index: 5, kind: input, shape index: {}]
  %s6 = inlined_call_operand.vmem [shape: f32[1,128], index: 6, kind: input, shape index: {}]
  %s7 = inlined_call_operand.vmem [shape: f32[1,128], index: 7, kind: input, shape index: {}]
  %s8 = inlined_call_operand.vmem [shape: f32[1,128], index: 8, kind: input, shape index: {}]
  %s9 = inlined_call_operand.vmem [shape: bf16[128,512], index: 9, kind: input, shape index: {}]
  %s10 = inlined_call_operand.vmem [shape: f32[1,512], index: 10, kind: input, shape index: {}]
  %s11 = inlined_call_operand.vmem [shape: bf16[512,128], index: 11, kind: input, shape index: {}]
  %s12 = inlined_call_operand.vmem [shape: f32[1,128], index: 12, kind: input, shape index: {}]
  %s13 = inlined_call_operand.vmem [shape: f32[2,17,128], index: 13, kind: output, shape index: {}]
  %s14 = sld [smem:[#allocation0]]
  $region85: #{clip_featurizer_forward.5} parent=0
    _
  %s16 = ssub.s32 1, %s14
  %s17 = scalar_select 0, %s16, %s14
  loop: start=0, step=1, limit=4
  $region2: #{clip_featurizer_forward.5} parent=0 // loop_pre_header
    _
  $region3: #{clip_featurizer_forward.5} parent=0 // loop_header
    %s19 = sphi 0, %s23
    %p20 = scmp.ge.s32.totalorder %s19, 4
    %s29 = sphi 0, %s31
    %s32 = sphi 0, %s29
    %s33 = sphi 0, %s32
    %s49 = sphi 0, %s33
    %s53 = sphi 0, %s53
    %s55 = sphi 0, %s53
    %s56 = sphi 0, %s55
    %s70 = sphi 0, %s56
    %s74 = sphi 0, %s74
    %s76 = sphi 0, %s74
    %s77 = sphi 0, %s76
    %s91 = sphi 0, %s77
    %s95 = sphi 0, %s95
    %s97 = sphi 0, %s95
    %s98 = sphi 0, %s97
    %s112 = sphi 0, %s98
    %s116 = sphi 0, %s116
    %s118 = sphi 0, %s116
    %s119 = sphi 0, %s118
    %s133 = sphi 0, %s119
    %s137 = sphi 0, %s137
    %s139 = sphi 0, %s137
    %s140 = sphi 0, %s139
    %s154 = sphi 0, %s140
    %s158 = sphi 0, %s158
    %s160 = sphi 0, %s158
    %s161 = sphi 0, %s160
    %s175 = sphi 0, %s161
    %s179 = sphi 0, %s179
    %s181 = sphi 0, %s179
    %s182 = sphi 0, %s181
    %s196 = sphi 0, %s182
    %s200 = sphi 0, %s200
    %s202 = sphi 0, %s200
    %s203 = sphi 0, %s202
    %s217 = sphi 0, %s203
    %s221 = sphi 0, %s221
    %s223 = sphi 0, %s221
    %s224 = sphi 0, %s223
    %s238 = sphi 0, %s224
    %s242 = sphi 0, %s242
    %s244 = sphi 0, %s242
    %s245 = sphi 0, %s244
    %s259 = sphi 0, %s245
    %s263 = sphi 0, %s263
    %s265 = sphi 0, %s263
    %s266 = sphi 0, %s265
    %s280 = sphi 0, %s266
    %s284 = sphi 0, %s284
    %s286 = sphi 0, %s284
    %s287 = sphi 0, %s286
    %s301 = sphi 0, %s287
    %s307 = sphi 0, %s309
    %s310 = sphi 0, %s307
    %s311 = sphi 0, %s310
    %s327 = sphi 0, %s311
  $region4: #{clip_featurizer_forward.5} parent=0 // loop_header_branch
    %22 = sbr.rel (%p20) target = $region8
  $region5: #{clip_featurizer_forward.5} parent=0 // loop_body
    %s24 = ssub.s32 %s19, 1
    %s25 = ssub.s32 %s19, 2
    %s26 = sadd.s32 %s19, 1
    %s27 = ssub.s32 %s19, %s26
    %p28 = scmp.eq.s32.totalorder %s27, 0
    %s30 = sadd.s32 %s29, 1
    %s31 = scalar_select %p28, %s29, %s30
    %p34 = pneg %p28
    %p35 = scmp.eq.s32.totalorder %s19, 1
    %p36 = por %p34, %p35
    %p37 = scmp.ne.s32.totalorder %s29, %s32
    %p38 = scmp.eq.s32.totalorder %s19, 0
    %p39 = por %p37, %p38
    %p40 = scmp.ne.s32.totalorder %s29, %s32
    %p41 = scmp.eq.s32.totalorder %s24, 1
    %p42 = por %p40, %p41
    %p43 = scmp.ne.s32.totalorder %s32, %s33
    %p44 = scmp.eq.s32.totalorder %s24, 0
    %p45 = por %p43, %p44
    %p46 = scmp.ne.s32.totalorder %s32, %s33
    %p47 = scmp.eq.s32.totalorder %s25, 1
    %p48 = por %p46, %p47
    %p50 = scmp.ne.s32.totalorder %s33, %s49
    %p51 = scmp.eq.s32.totalorder %s25, 0
    %p52 = por %p50, %p51
    %s54 = sadd.s32 %s53, 1
    %p57 = scmp.eq.s32.totalorder %s19, 1
    %p58 = scmp.ne.s32.totalorder %s53, %s55
    %p59 = scmp.eq.s32.totalorder %s19, 0
    %p60 = por %p58, %p59
    %p61 = scmp.ne.s32.totalorder %s53, %s55
    %p62 = scmp.eq.s32.totalorder %s24, 1
    %p63 = por %p61, %p62
    %p64 = scmp.ne.s32.totalorder %s55, %s56
    %p65 = scmp.eq.s32.totalorder %s24, 0
    %p66 = por %p64, %p65
    %p67 = scmp.ne.s32.totalorder %s55, %s56
    %p68 = scmp.eq.s32.totalorder %s25, 1
    %p69 = por %p67, %p68
    %p71 = scmp.ne.s32.totalorder %s56, %s70
    %p72 = scmp.eq.s32.totalorder %s25, 0
    %p73 = por %p71, %p72
    %s75 = sadd.s32 %s74, 1
    %p78 = scmp.eq.s32.totalorder %s19, 1
    %p79 = scmp.ne.s32.totalorder %s74, %s76
    %p80 = scmp.eq.s32.totalorder %s19, 0
    %p81 = por %p79, %p80
    %p82 = scmp.ne.s32.totalorder %s74, %s76
    %p83 = scmp.eq.s32.totalorder %s24, 1
    %p84 = por %p82, %p83
    %p85 = scmp.ne.s32.totalorder %s76, %s77
    %p86 = scmp.eq.s32.totalorder %s24, 0
    %p87 = por %p85, %p86
    %p88 = scmp.ne.s32.totalorder %s76, %s77
    %p89 = scmp.eq.s32.totalorder %s25, 1
    %p90 = por %p88, %p89
    %p92 = scmp.ne.s32.totalorder %s77, %s91
    %p93 = scmp.eq.s32.totalorder %s25, 0
    %p94 = por %p92, %p93
    %s96 = sadd.s32 %s95, 1
    %p99 = scmp.eq.s32.totalorder %s19, 1
    %p100 = scmp.ne.s32.totalorder %s95, %s97
    %p101 = scmp.eq.s32.totalorder %s19, 0
    %p102 = por %p100, %p101
    %p103 = scmp.ne.s32.totalorder %s95, %s97
    %p104 = scmp.eq.s32.totalorder %s24, 1
    %p105 = por %p103, %p104
    %p106 = scmp.ne.s32.totalorder %s97, %s98
    %p107 = scmp.eq.s32.totalorder %s24, 0
    %p108 = por %p106, %p107
    %p109 = scmp.ne.s32.totalorder %s97, %s98
    %p110 = scmp.eq.s32.totalorder %s25, 1
    %p111 = por %p109, %p110
    %p113 = scmp.ne.s32.totalorder %s98, %s112
    %p114 = scmp.eq.s32.totalorder %s25, 0
    %p115 = por %p113, %p114
    %s117 = sadd.s32 %s116, 1
    %p120 = scmp.eq.s32.totalorder %s19, 1
    %p121 = scmp.ne.s32.totalorder %s116, %s118
    %p122 = scmp.eq.s32.totalorder %s19, 0
    %p123 = por %p121, %p122
    %p124 = scmp.ne.s32.totalorder %s116, %s118
    %p125 = scmp.eq.s32.totalorder %s24, 1
    %p126 = por %p124, %p125
    %p127 = scmp.ne.s32.totalorder %s118, %s119
    %p128 = scmp.eq.s32.totalorder %s24, 0
    %p129 = por %p127, %p128
    %p130 = scmp.ne.s32.totalorder %s118, %s119
    %p131 = scmp.eq.s32.totalorder %s25, 1
    %p132 = por %p130, %p131
    %p134 = scmp.ne.s32.totalorder %s119, %s133
    %p135 = scmp.eq.s32.totalorder %s25, 0
    %p136 = por %p134, %p135
    %s138 = sadd.s32 %s137, 1
    %p141 = scmp.eq.s32.totalorder %s19, 1
    %p142 = scmp.ne.s32.totalorder %s137, %s139
    %p143 = scmp.eq.s32.totalorder %s19, 0
    %p144 = por %p142, %p143
    %p145 = scmp.ne.s32.totalorder %s137, %s139
    %p146 = scmp.eq.s32.totalorder %s24, 1
    %p147 = por %p145, %p146
    %p148 = scmp.ne.s32.totalorder %s139, %s140
    %p149 = scmp.eq.s32.totalorder %s24, 0
    %p150 = por %p148, %p149
    %p151 = scmp.ne.s32.totalorder %s139, %s140
    %p152 = scmp.eq.s32.totalorder %s25, 1
    %p153 = por %p151, %p152
    %p155 = scmp.ne.s32.totalorder %s140, %s154
    %p156 = scmp.eq.s32.totalorder %s25, 0
    %p157 = por %p155, %p156
    %s159 = sadd.s32 %s158, 1
    %p162 = scmp.eq.s32.totalorder %s19, 1
    %p163 = scmp.ne.s32.totalorder %s158, %s160
    %p164 = scmp.eq.s32.totalorder %s19, 0
    %p165 = por %p163, %p164
    %p166 = scmp.ne.s32.totalorder %s158, %s160
    %p167 = scmp.eq.s32.totalorder %s24, 1
    %p168 = por %p166, %p167
    %p169 = scmp.ne.s32.totalorder %s160, %s161
    %p170 = scmp.eq.s32.totalorder %s24, 0
    %p171 = por %p169, %p170
    %p172 = scmp.ne.s32.totalorder %s160, %s161
    %p173 = scmp.eq.s32.totalorder %s25, 1
    %p174 = por %p172, %p173
    %p176 = scmp.ne.s32.totalorder %s161, %s175
    %p177 = scmp.eq.s32.totalorder %s25, 0
    %p178 = por %p176, %p177
    %s180 = sadd.s32 %s179, 1
    %p183 = scmp.eq.s32.totalorder %s19, 1
    %p184 = scmp.ne.s32.totalorder %s179, %s181
    %p185 = scmp.eq.s32.totalorder %s19, 0
    %p186 = por %p184, %p185
    %p187 = scmp.ne.s32.totalorder %s179, %s181
    %p188 = scmp.eq.s32.totalorder %s24, 1
    %p189 = por %p187, %p188
    %p190 = scmp.ne.s32.totalorder %s181, %s182
    %p191 = scmp.eq.s32.totalorder %s24, 0
    %p192 = por %p190, %p191
    %p193 = scmp.ne.s32.totalorder %s181, %s182
    %p194 = scmp.eq.s32.totalorder %s25, 1
    %p195 = por %p193, %p194
    %p197 = scmp.ne.s32.totalorder %s182, %s196
    %p198 = scmp.eq.s32.totalorder %s25, 0
    %p199 = por %p197, %p198
    %s201 = sadd.s32 %s200, 1
    %p204 = scmp.eq.s32.totalorder %s19, 1
    %p205 = scmp.ne.s32.totalorder %s200, %s202
    %p206 = scmp.eq.s32.totalorder %s19, 0
    %p207 = por %p205, %p206
    %p208 = scmp.ne.s32.totalorder %s200, %s202
    %p209 = scmp.eq.s32.totalorder %s24, 1
    %p210 = por %p208, %p209
    %p211 = scmp.ne.s32.totalorder %s202, %s203
    %p212 = scmp.eq.s32.totalorder %s24, 0
    %p213 = por %p211, %p212
    %p214 = scmp.ne.s32.totalorder %s202, %s203
    %p215 = scmp.eq.s32.totalorder %s25, 1
    %p216 = por %p214, %p215
    %p218 = scmp.ne.s32.totalorder %s203, %s217
    %p219 = scmp.eq.s32.totalorder %s25, 0
    %p220 = por %p218, %p219
    %s222 = sadd.s32 %s221, 1
    %p225 = scmp.eq.s32.totalorder %s19, 1
    %p226 = scmp.ne.s32.totalorder %s221, %s223
    %p227 = scmp.eq.s32.totalorder %s19, 0
    %p228 = por %p226, %p227
    %p229 = scmp.ne.s32.totalorder %s221, %s223
    %p230 = scmp.eq.s32.totalorder %s24, 1
    %p231 = por %p229, %p230
    %p232 = scmp.ne.s32.totalorder %s223, %s224
    %p233 = scmp.eq.s32.totalorder %s24, 0
    %p234 = por %p232, %p233
    %p235 = scmp.ne.s32.totalorder %s223, %s224
    %p236 = scmp.eq.s32.totalorder %s25, 1
    %p237 = por %p235, %p236
    %p239 = scmp.ne.s32.totalorder %s224, %s238
    %p240 = scmp.eq.s32.totalorder %s25, 0
    %p241 = por %p239, %p240
    %s243 = sadd.s32 %s242, 1
    %p246 = scmp.eq.s32.totalorder %s19, 1
    %p247 = scmp.ne.s32.totalorder %s242, %s244
    %p248 = scmp.eq.s32.totalorder %s19, 0
    %p249 = por %p247, %p248
    %p250 = scmp.ne.s32.totalorder %s242, %s244
    %p251 = scmp.eq.s32.totalorder %s24, 1
    %p252 = por %p250, %p251
    %p253 = scmp.ne.s32.totalorder %s244, %s245
    %p254 = scmp.eq.s32.totalorder %s24, 0
    %p255 = por %p253, %p254
    %p256 = scmp.ne.s32.totalorder %s244, %s245
    %p257 = scmp.eq.s32.totalorder %s25, 1
    %p258 = por %p256, %p257
    %p260 = scmp.ne.s32.totalorder %s245, %s259
    %p261 = scmp.eq.s32.totalorder %s25, 0
    %p262 = por %p260, %p261
    %s264 = sadd.s32 %s263, 1
    %p267 = scmp.eq.s32.totalorder %s19, 1
    %p268 = scmp.ne.s32.totalorder %s263, %s265
    %p269 = scmp.eq.s32.totalorder %s19, 0
    %p270 = por %p268, %p269
    %p271 = scmp.ne.s32.totalorder %s263, %s265
    %p272 = scmp.eq.s32.totalorder %s24, 1
    %p273 = por %p271, %p272
    %p274 = scmp.ne.s32.totalorder %s265, %s266
    %p275 = scmp.eq.s32.totalorder %s24, 0
    %p276 = por %p274, %p275
    %p277 = scmp.ne.s32.totalorder %s265, %s266
    %p278 = scmp.eq.s32.totalorder %s25, 1
    %p279 = por %p277, %p278
    %p281 = scmp.ne.s32.totalorder %s266, %s280
    %p282 = scmp.eq.s32.totalorder %s25, 0
    %p283 = por %p281, %p282
    %s285 = sadd.s32 %s284, 1
    %p288 = scmp.eq.s32.totalorder %s19, 1
    %p289 = scmp.ne.s32.totalorder %s284, %s286
    %p290 = scmp.eq.s32.totalorder %s19, 0
    %p291 = por %p289, %p290
    %p292 = scmp.ne.s32.totalorder %s284, %s286
    %p293 = scmp.eq.s32.totalorder %s24, 1
    %p294 = por %p292, %p293
    %p295 = scmp.ne.s32.totalorder %s286, %s287
    %p296 = scmp.eq.s32.totalorder %s24, 0
    %p297 = por %p295, %p296
    %p298 = scmp.ne.s32.totalorder %s286, %s287
    %p299 = scmp.eq.s32.totalorder %s25, 1
    %p300 = por %p298, %p299
    %p302 = scmp.ne.s32.totalorder %s287, %s301
    %p303 = scmp.eq.s32.totalorder %s25, 0
    %p304 = por %p302, %p303
    %s305 = ssub.s32 %s19, %s26
    %p306 = scmp.eq.s32.totalorder %s305, 0
    %s308 = sadd.s32 %s307, 1
    %s309 = scalar_select %p306, %s307, %s308
    %p312 = pneg %p306
    %p313 = scmp.eq.s32.totalorder %s19, 1
    %p314 = por %p312, %p313
    %p315 = scmp.ne.s32.totalorder %s307, %s310
    %p316 = scmp.eq.s32.totalorder %s19, 0
    %p317 = por %p315, %p316
    %p318 = scmp.ne.s32.totalorder %s307, %s310
    %p319 = scmp.eq.s32.totalorder %s24, 1
    %p320 = por %p318, %p319
    %p321 = scmp.ne.s32.totalorder %s310, %s311
    %p322 = scmp.eq.s32.totalorder %s24, 0
    %p323 = por %p321, %p322
    %p324 = scmp.ne.s32.totalorder %s310, %s311
    %p325 = scmp.eq.s32.totalorder %s25, 1
    %p326 = por %p324, %p325
    %p328 = scmp.ne.s32.totalorder %s311, %s327
    %p329 = scmp.eq.s32.totalorder %s25, 0
    %p330 = por %p328, %p329
    %p331 = scmp.le.s32.totalorder 1, %s19
    %p332 = scmp.lt.s32.totalorder %s19, 3
    %p333 = pnand %p331, %p332
    %p334 = pneg %p333
    // Predicated region
    $region9: #{clip_featurizer_forward.5} parent=5 // pred_check
      _
    $region10: #{clip_featurizer_forward.5} parent=5 // pred_check_branch
      %336 = sbr.rel (%p333) target = $region12
    $region11: #{clip_featurizer_forward.5} parent=5 // pred_region
      %s337 = ssub.s32 %s19, 1
      // Predicated region
      $region13: #{clip_featurizer_forward.5} parent=11 // pred_check
        %p338 = pneg %p66
      $region14: #{clip_featurizer_forward.5} parent=11 // pred_check_branch
        %340 = sbr.rel (%p338) target = $region16
      $region15: #{clip_featurizer_forward.5} parent=11 // pred_region
        _
      $region16: #{clip_featurizer_forward.5} parent=11 // pred_fallthru
        _
      // Predicated region
      $region17: #{clip_featurizer_forward.5} parent=11 // pred_check
        %p341 = pneg %p87
      $region18: #{clip_featurizer_forward.5} parent=11 // pred_check_branch
        %343 = sbr.rel (%p341) target = $region20
      $region19: #{clip_featurizer_forward.5} parent=11 // pred_region
        _
      $region20: #{clip_featurizer_forward.5} parent=11 // pred_fallthru
        _
      // Predicated region
      $region21: #{clip_featurizer_forward.5} parent=11 // pred_check
        %p344 = pneg %p108
      $region22: #{clip_featurizer_forward.5} parent=11 // pred_check_branch
        %346 = sbr.rel (%p344) target = $region24
      $region23: #{clip_featurizer_forward.5} parent=11 // pred_region
        _
      $region24: #{clip_featurizer_forward.5} parent=11 // pred_fallthru
        _
      // Predicated region
      $region25: #{clip_featurizer_forward.5} parent=11 // pred_check
        %p347 = pneg %p129
      $region26: #{clip_featurizer_forward.5} parent=11 // pred_check_branch
        %349 = sbr.rel (%p347) target = $region28
      $region27: #{clip_featurizer_forward.5} parent=11 // pred_region
        _
      $region28: #{clip_featurizer_forward.5} parent=11 // pred_fallthru
        _
      // Predicated region
      $region29: #{clip_featurizer_forward.5} parent=11 // pred_check
        %p350 = pneg %p150
      $region30: #{clip_featurizer_forward.5} parent=11 // pred_check_branch
        %352 = sbr.rel (%p350) target = $region32
      $region31: #{clip_featurizer_forward.5} parent=11 // pred_region
        _
      $region32: #{clip_featurizer_forward.5} parent=11 // pred_fallthru
        _
      // Predicated region
      $region33: #{clip_featurizer_forward.5} parent=11 // pred_check
        %p353 = pneg %p171
      $region34: #{clip_featurizer_forward.5} parent=11 // pred_check_branch
        %355 = sbr.rel (%p353) target = $region36
      $region35: #{clip_featurizer_forward.5} parent=11 // pred_region
        _
      $region36: #{clip_featurizer_forward.5} parent=11 // pred_fallthru
        _
      // Predicated region
      $region37: #{clip_featurizer_forward.5} parent=11 // pred_check
        %p356 = pneg %p192
      $region38: #{clip_featurizer_forward.5} parent=11 // pred_check_branch
        %358 = sbr.rel (%p356) target = $region40
      $region39: #{clip_featurizer_forward.5} parent=11 // pred_region
        _
      $region40: #{clip_featurizer_forward.5} parent=11 // pred_fallthru
        _
      // Predicated region
      $region41: #{clip_featurizer_forward.5} parent=11 // pred_check
        %p359 = pneg %p213
      $region42: #{clip_featurizer_forward.5} parent=11 // pred_check_branch
        %361 = sbr.rel (%p359) target = $region44
      $region43: #{clip_featurizer_forward.5} parent=11 // pred_region
        _
      $region44: #{clip_featurizer_forward.5} parent=11 // pred_fallthru
        _
      // Predicated region
      $region45: #{clip_featurizer_forward.5} parent=11 // pred_check
        %p362 = pneg %p234
      $region46: #{clip_featurizer_forward.5} parent=11 // pred_check_branch
        %364 = sbr.rel (%p362) target = $region48
      $region47: #{clip_featurizer_forward.5} parent=11 // pred_region
        _
      $region48: #{clip_featurizer_forward.5} parent=11 // pred_fallthru
        _
      // Predicated region
      $region49: #{clip_featurizer_forward.5} parent=11 // pred_check
        %p365 = pneg %p255
      $region50: #{clip_featurizer_forward.5} parent=11 // pred_check_branch
        %367 = sbr.rel (%p365) target = $region52
      $region51: #{clip_featurizer_forward.5} parent=11 // pred_region
        _
      $region52: #{clip_featurizer_forward.5} parent=11 // pred_fallthru
        _
      // Predicated region
      $region53: #{clip_featurizer_forward.5} parent=11 // pred_check
        %p368 = pneg %p276
      $region54: #{clip_featurizer_forward.5} parent=11 // pred_check_branch
        %370 = sbr.rel (%p368) target = $region56
      $region55: #{clip_featurizer_forward.5} parent=11 // pred_region
        _
      $region56: #{clip_featurizer_forward.5} parent=11 // pred_fallthru
        _
      // Predicated region
      $region57: #{clip_featurizer_forward.5} parent=11 // pred_check
        %p371 = pneg %p297
      $region58: #{clip_featurizer_forward.5} parent=11 // pred_check_branch
        %373 = sbr.rel (%p371) target = $region60
      $region59: #{clip_featurizer_forward.5} parent=11 // pred_region
        _
      $region60: #{clip_featurizer_forward.5} parent=11 // pred_fallthru
        _
    $region12: #{clip_featurizer_forward.5} parent=5 // pred_fallthru
      _
    %p374 = scmp.lt.s32.totalorder %s19, 2
    // Predicated region
    $region61: #{clip_featurizer_forward.5} parent=5 // pred_check
      %p375 = pneg %p374
    $region62: #{clip_featurizer_forward.5} parent=5 // pred_check_branch
      %377 = sbr.rel (%p375) target = $region64
    $region63: #{clip_featurizer_forward.5} parent=5 // pred_region
      // Predicated region
      $region65: #{clip_featurizer_forward.5} parent=63 // pred_check
        %p378 = pneg %p39
      $region66: #{clip_featurizer_forward.5} parent=63 // pred_check_branch
        %380 = sbr.rel (%p378) target = $region68
      $region67: #{clip_featurizer_forward.5} parent=63 // pred_region
        %p381 = scmp.lt.s32.totalorder %s19, 1
        %s382 = scalar_select %p381, %s19, 1
        %s383 = smul.addr %s382, 3
        %s384 = smul.addr %s383, 8
        %s385 = scalar_lea.vmem %s0, %s384
      $region68: #{clip_featurizer_forward.5} parent=63 // pred_fallthru
        _
    $region64: #{clip_featurizer_forward.5} parent=5 // pred_fallthru
      _
    %p386 = scmp.le.s32.totalorder 1, %s19
    %p387 = scmp.lt.s32.totalorder %s19, 3
    %p388 = pnand %p386, %p387
    %p389 = pneg %p388
    // Predicated region
    $region69: #{clip_featurizer_forward.5} parent=5 // pred_check
      _
    $region70: #{clip_featurizer_forward.5} parent=5 // pred_check_branch
      %391 = sbr.rel (%p388) target = $region72
    $region71: #{clip_featurizer_forward.5} parent=5 // pred_region
      %s392 = ssub.s32 %s19, 1
      %p393 = scmp.lt.s32.totalorder %s24, 1
      %s394 = scalar_select %p393, %s24, 1
      %s395 = smul.addr %s394, 3
      %s396 = smul.addr %s395, 8
      %s397 = scalar_lea.vmem %s0, %s396
      %p398 = pneg %p45
      %p399 = pneg %p42
      %p400 = pneg %p66
      %p401 = pneg %p63
      %p402 = pneg %p87
      %p403 = pneg %p84
      %p404 = pneg %p108
      %p405 = pneg %p105
      %p406 = pneg %p129
      %p407 = pneg %p126
      %p408 = pneg %p150
      %p409 = pneg %p147
      %p410 = pneg %p171
      %p411 = pneg %p168
      %p412 = pneg %p192
      %p413 = pneg %p189
      %p414 = pneg %p213
      %p415 = pneg %p210
      %p416 = pneg %p234
      %p417 = pneg %p231
      %p418 = pneg %p255
      %p419 = pneg %p252
      %p420 = pneg %p276
      %p421 = pneg %p273
      %p422 = pneg %p297
      %p423 = pneg %p294
      %p424 = pneg %p323
      %p425 = pneg %p320
      %p426 = scmp.lt.s32.totalorder %s24, 1
      %s427 = scalar_select %p426, %s24, 1
      %s428 = smul.addr %s427, 3
      %s429 = smul.addr %s428, 8
      %s430 = scalar_lea.vmem %s13, %s429
      %p431 = scmp.lt.s32.totalorder %s24, 1
      %s432 = scalar_select %p431, %s24, 1
      %s433 = smul.addr %s432, 3
      %s434 = smul.addr %s433, 8
      %s435 = scalar_lea.vmem %s0, %s434
      %p436 = scmp.lt.s32.totalorder %s24, 1
      %s437 = scalar_select %p436, %s24, 1
      %s438 = smul.addr %s437, 3
      %s439 = smul.addr %s438, 8
      %s440 = scalar_lea.vmem %s13, %s439
      %v442 = vld [vmem:[%s435] sm:$0xff]
      %v443 = vld [vmem:[%s435 + $0x8] sm:$0xff]
      %v444 = vld [vmem:[%s435 + $0x10] sm:$0x1]
      %v445 = vld [vmem:[%s1] sm:$0x1]
      %v446 = vld [vmem:[%s2] sm:$0x1]
      %447 = vadd.xlane.f32.xlu0 %v442
      %v448 = vpop.xlane.xlu0 %447
      %449 = vadd.xlane.f32.xlu0 %v443
      %v450 = vpop.xlane.xlu0 %449
      %vm451 = vcmask 1040384
      %v452 = vsel %vm451, %v444, 0.0
      %453 = vadd.xlane.f32.xlu0 %v452
      %v454 = vpop.xlane.xlu0 %453
      %v455 = vrcp.pop 128.0
      %v456 = vmul.f32 %v448, %v455
      %v457 = vmul.f32 %v450, %v455
      %v458 = vmul.f32 %v454, %v455
      %v459 = vsub.f32 %v442, %v456
      %v460 = vsub.f32 %v443, %v457
      %v461 = vsub.f32 %v444, %v458
      %v462 = vmul.f32 %v459, %v459
      %v463 = vmul.f32 %v460, %v460
      %v464 = vmul.f32 %v461, %v461
      %465 = vadd.xlane.f32.xlu0 %v462
      %v466 = vpop.xlane.xlu0 %465
      %467 = vadd.xlane.f32.xlu0 %v463
      %v468 = vpop.xlane.xlu0 %467
      %v469 = vsel %vm451, %v464, 0.0
      %470 = vadd.xlane.f32.xlu0 %v469
      %v471 = vpop.xlane.xlu0 %470
      %v472 = vmul.f32 %v466, %v455
      %v473 = vmul.f32 %v468, %v455
      %v474 = vmul.f32 %v471, %v455
      %v475 = vadd.f32 %v472, 1e-05
      %v476 = vadd.f32 %v473, 1e-05
      %v477 = vadd.f32 %v474, 1e-05
      %v478 = vrsqrt.pop %v475
      %v479 = vrsqrt.pop %v476
      %v480 = vrsqrt.pop %v477
      %v481 = vmul.f32 %v459, %v478
      %v482 = vmul.f32 %v460, %v479
      %v483 = vmul.f32 %v461, %v480
      %v485 = vlaneseq
      %v486 = vshrl.u32 %v485, 7
      %v487 = vsub.s32 0, %v486
      %v488 = vrot.slane %v445, %v487
      %v490 = vmul.f32 %v481, %v488
      %v491 = vmul.f32 %v482, %v488
      %v492 = vmul.f32 %v483, %v488
      %v494 = vlaneseq
      %v495 = vshrl.u32 %v494, 7
      %v496 = vsub.s32 0, %v495
      %v497 = vrot.slane %v446, %v496
      %v499 = vadd.f32 %v490, %v497
      %v500 = vadd.f32 %v491, %v497
      %v501 = vadd.f32 %v492, %v497
      %v502 = vpack.c.bf16 %v500, %v499
      %v503 = vpack.c.bf16 %v501, %v501
      %v504 = vld [vmem:[%s3] sm:$0xff]
      %v505 = vld [vmem:[%s3 + $0x8] sm:$0xf]
      %v506 = vld [vmem:[%s3 + $0xc] sm:$0xff]
      %v507 = vld [vmem:[%s3 + $0x14] sm:$0xf]
      %v508 = vld [vmem:[%s3 + $0x18] sm:$0xff]
      %v509 = vld [vmem:[%s3 + $0x20] sm:$0xf]
      %v510 = vld [vmem:[%s3 + $0x24] sm:$0xff]
      %v511 = vld [vmem:[%s3 + $0x2c] sm:$0xf]
      %v512 = vld [vmem:[%s3 + $0x30] sm:$0xff]
      %v513 = vld [vmem:[%s3 + $0x38] sm:$0xf]
      %v514 = vld [vmem:[%s3 + $0x3c] sm:$0xff]
      %v515 = vld [vmem:[%s3 + $0x44] sm:$0xf]
      %v516 = vld [vmem:[%s3 + $0x48] sm:$0xff]
      %v517 = vld [vmem:[%s3 + $0x50] sm:$0xf]
      %v518 = vld [vmem:[%s3 + $0x54] sm:$0xff]
      %v519 = vld [vmem:[%s3 + $0x5c] sm:$0xf]
      %v520 = vld [vmem:[%s3 + $0x60] sm:$0xff]
      %v521 = vld [vmem:[%s3 + $0x68] sm:$0xf]
      %v522 = vld [vmem:[%s3 + $0x6c] sm:$0xff]
      %v523 = vld [vmem:[%s3 + $0x74] sm:$0xf]
      %v524 = vld [vmem:[%s3 + $0x78] sm:$0xff]
      %v525 = vld [vmem:[%s3 + $0x80] sm:$0xf]
      %v526 = vld [vmem:[%s3 + $0x84] sm:$0xff]
      %v527 = vld [vmem:[%s3 + $0x8c] sm:$0xf]
      %v528 = vld [vmem:[%s3 + $0x90] sm:$0xff]
      %v529 = vld [vmem:[%s3 + $0x98] sm:$0xf]
      %v530 = vld [vmem:[%s3 + $0x9c] sm:$0xff]
      %v531 = vld [vmem:[%s3 + $0xa4] sm:$0xf]
      %v532 = vld [vmem:[%s3 + $0xa8] sm:$0xff]
      %v533 = vld [vmem:[%s3 + $0xb0] sm:$0xf]
      %v534 = vld [vmem:[%s3 + $0xb4] sm:$0xff]
      %v535 = vld [vmem:[%s3 + $0xbc] sm:$0xf]
      %v536 = vld [vmem:[%s4] sm:$0x7]
      %v538 = vlaneseq
      %v539 = vshrl.u32 %v538, 7
      %v540 = vsub.s32 0, %v539
      %v541 = vrot.slane %v536, %v540
      %v542 = vlaneseq
      %v543 = vshrl.u32 %v542, 7
      %v544 = vsub.s32 1, %v543
      %v545 = vrot.slane %v536, %v544
      %v546 = vlaneseq
      %v547 = vshrl.u32 %v546, 7
      %v548 = vsub.s32 2, %v547
      %v549 = vrot.slane %v536, %v548
      %v585 = vunpack.c.l.b16 %v504
      %v586 = vunpack.c.h.b16 %v504
      %v587 = vunpack.c.l.b16 %v505
      %v588 = vunpack.c.l.b16 %v506
      %v589 = vunpack.c.h.b16 %v506
      %v590 = vunpack.c.l.b16 %v507
      %v591 = vunpack.c.l.b16 %v508
      %v592 = vunpack.c.h.b16 %v508
      %v593 = vunpack.c.l.b16 %v509
      %v594 = vunpack.c.l.b16 %v510
      %v595 = vunpack.c.h.b16 %v510
      %v596 = vunpack.c.l.b16 %v511
      %v597 = vunpack.c.l.b16 %v512
      %v598 = vunpack.c.h.b16 %v512
      %v599 = vunpack.c.l.b16 %v513
      %v600 = vunpack.c.l.b16 %v514
      %v601 = vunpack.c.h.b16 %v514
      %v602 = vunpack.c.l.b16 %v515
      %v603 = vunpack.c.l.b16 %v516
      %v604 = vunpack.c.h.b16 %v516
      %v605 = vunpack.c.l.b16 %v517
      %v606 = vunpack.c.l.b16 %v518
      %v607 = vunpack.c.h.b16 %v518
      %v608 = vunpack.c.l.b16 %v519
      %v609 = vunpack.c.l.b16 %v520
      %v610 = vunpack.c.h.b16 %v520
      %v611 = vunpack.c.l.b16 %v521
      %v612 = vunpack.c.l.b16 %v522
      %v613 = vunpack.c.h.b16 %v522
      %v614 = vunpack.c.l.b16 %v523
      %v615 = vunpack.c.l.b16 %v524
      %v616 = vunpack.c.h.b16 %v524
      %v617 = vunpack.c.l.b16 %v525
      %v618 = vunpack.c.l.b16 %v526
      %v619 = vunpack.c.h.b16 %v526
      %v620 = vunpack.c.l.b16 %v527
      %v621 = vunpack.c.l.b16 %v528
      %v622 = vunpack.c.h.b16 %v528
      %v623 = vunpack.c.l.b16 %v529
      %v624 = vunpack.c.l.b16 %v530
      %v625 = vunpack.c.h.b16 %v530
      %v626 = vunpack.c.l.b16 %v531
      %v627 = vunpack.c.l.b16 %v532
      %v628 = vunpack.c.h.b16 %v532
      %v629 = vunpack.c.l.b16 %v533
      %v630 = vunpack.c.l.b16 %v534
      %v631 = vunpack.c.h.b16 %v534
      %v632 = vunpack.c.l.b16 %v535
      %v633 = vpack.c.b16 %v588, %v585
      %v634 = vpack.c.b16 %v589, %v586
      %v635 = vpack.c.b16 %v590, %v587
      %v636 = vpack.c.b16 %v594, %v591
      %v637 = vpack.c.b16 %v595, %v592
      %v638 = vpack.c.b16 %v596, %v593
      %v639 = vpack.c.b16 %v600, %v597
      %v640 = vpack.c.b16 %v601, %v598
      %v641 = vpack.c.b16 %v602, %v599
      %v642 = vpack.c.b16 %v606, %v603
      %v643 = vpack.c.b16 %v607, %v604
      %v644 = vpack.c.b16 %v608, %v605
      %v645 = vpack.c.b16 %v612, %v609
      %v646 = vpack.c.b16 %v613, %v610
      %v647 = vpack.c.b16 %v614, %v611
      %v648 = vpack.c.b16 %v618, %v615
      %v649 = vpack.c.b16 %v619, %v616
      %v650 = vpack.c.b16 %v620, %v617
      %v651 = vpack.c.b16 %v624, %v621
      %v652 = vpack.c.b16 %v625, %v622
      %v653 = vpack.c.b16 %v626, %v623
      %v654 = vpack.c.b16 %v630, %v627
      %v655 = vpack.c.b16 %v631, %v628
      %v656 = vpack.c.b16 %v632, %v629
      %681 = vmatprep.subr.bf16.mxu0 %v634
      %682 = vmatpush1.bf16.msra.mxu0 %v633
      %683 = vmatprep.subr.bf16.mxu0 %v637
      %684 = vmatpush1.bf16.msra.mxu0 %v636
      %685 = vmatprep.subr.bf16.mxu0 %v640
      %686 = vmatpush1.bf16.msra.mxu0 %v639
      %687 = vmatprep.subr.bf16.mxu0 %v643
      %688 = vmatpush1.bf16.msra.mxu0 %v642
      %689 = vmatprep.subr.bf16.mxu0 %v646
      %690 = vmatpush1.bf16.msra.mxu0 %v645
      %691 = vmatprep.subr.bf16.mxu0 %v649
      %692 = vmatpush1.bf16.msra.mxu0 %v648
      %693 = vmatprep.subr.bf16.mxu0 %v652
      %694 = vmatpush1.bf16.msra.mxu0 %v651
      %695 = vmatprep.subr.bf16.mxu0 %v655
      %696 = vmatpush1.bf16.msra.mxu0 %v654
      %697 = vmatprep.subr.bf16.mxu0 0
      %698 = vmatpush1.bf16.msra.mxu0 0
      %699 = vmatprep.subr.bf16.mxu0 0
      %700 = vmatpush1.bf16.msra.mxu0 0
      %701 = vmatprep.subr.bf16.mxu0 0
      %702 = vmatpush1.bf16.msra.mxu0 0
      %703 = vmatprep.subr.bf16.mxu0 0
      %704 = vmatpush1.bf16.msra.mxu0 0
      %705 = vmatprep.subr.bf16.mxu0 0
      %706 = vmatpush1.bf16.msra.mxu0 0
      %707 = vmatprep.subr.bf16.mxu0 0
      %708 = vmatpush1.bf16.msra.mxu0 0
      %709 = vmatprep.subr.bf16.mxu0 0
      %710 = vmatpush1.bf16.msra.mxu0 0
      %711 = vmatprep.subr.bf16.mxu0 0
      %712 = vmatpush1.bf16.msra.mxu0 0
      %713 = vmatprep.mubr.bf16.mxu0 0
      %714 = vmatmul.mubr.bf16.gmra.mrb[0].mxu0 %v502
      %v715 = vpop.f32.mrb[0].mxu0
      %v716 = vadd.f32 %v541, %v715
      %v717 = vpop.f32.mrb[0].mxu0
      %v718 = vadd.f32 %v545, %v717
      %v719 = vpop.f32.mrb[0].mxu0
      %v720 = vadd.f32 %v541, %v719
      %v721 = vpop.f32.mrb[0].mxu0
      %v722 = vadd.f32 %v545, %v721
      %723 = vmatprep.mubr.bf16.mxu0 0
      %724 = vmatmul.mubr.bf16.gmra.mrb[0].mxu0 %v503
      %v725 = vpop.f32.mrb[0].mxu0
      %v726 = vadd.f32 %v541, %v725
      %v727 = vpop.f32.mrb[0].mxu0
      %v728 = vadd.f32 %v545, %v727
      %v729 = vpop.f32.mrb[0].mxu0
      %v730 = vpop.f32.mrb[0].mxu0
      %731 = vdwg.mxu0
      %732 = vmatprep.subr.bf16.mxu0 0
      %733 = vmatpush1.bf16.msra.mxu0 %v635
      %734 = vmatprep.subr.bf16.mxu0 0
      %735 = vmatpush1.bf16.msra.mxu0 %v638
      %736 = vmatprep.subr.bf16.mxu0 0
      %737 = vmatpush1.bf16.msra.mxu0 %v641
      %738 = vmatprep.subr.bf16.mxu0 0
      %739 = vmatpush1.bf16.msra.mxu0 %v644
      %740 = vmatprep.subr.bf16.mxu0 0
      %741 = vmatpush1.bf16.msra.mxu0 %v647
      %742 = vmatprep.subr.bf16.mxu0 0
      %743 = vmatpush1.bf16.msra.mxu0 %v650
      %744 = vmatprep.subr.bf16.mxu0 0
      %745 = vmatpush1.bf16.msra.mxu0 %v653
      %746 = vmatprep.subr.bf16.mxu0 0
      %747 = vmatpush1.bf16.msra.mxu0 %v656
      %748 = vmatprep.subr.bf16.mxu0 0
      %749 = vmatpush1.bf16.msra.mxu0 0
      %750 = vmatprep.subr.bf16.mxu0 0
      %751 = vmatpush1.bf16.msra.mxu0 0
      %752 = vmatprep.subr.bf16.mxu0 0
      %753 = vmatpush1.bf16.msra.mxu0 0
      %754 = vmatprep.subr.bf16.mxu0 0
      %755 = vmatpush1.bf16.msra.mxu0 0
      %756 = vmatprep.subr.bf16.mxu0 0
      %757 = vmatpush1.bf16.msra.mxu0 0
      %758 = vmatprep.subr.bf16.mxu0 0
      %759 = vmatpush1.bf16.msra.mxu0 0
      %760 = vmatprep.subr.bf16.mxu0 0
      %761 = vmatpush1.bf16.msra.mxu0 0
      %762 = vmatprep.subr.bf16.mxu0 0
      %763 = vmatpush1.bf16.msra.mxu0 0
      %764 = vmatprep.mubr.bf16.mxu0 0
      %765 = vmatmul.mubr.bf16.gmra.mrb[0].mxu0 %v502
      %v766 = vpop.f32.mrb[0].mxu0
      %v767 = vadd.f32 %v549, %v766
      %v768 = vpop.f32.mrb[0].mxu0
      %v769 = vpop.f32.mrb[0].mxu0
      %v770 = vadd.f32 %v549, %v769
      %v771 = vpop.f32.mrb[0].mxu0
      %772 = vmatprep.mubr.bf16.mxu0 0
      %773 = vmatmul.mubr.bf16.gmra.mrb[0].mxu0 %v503
      %v774 = vpop.f32.mrb[0].mxu0
      %v775 = vadd.f32 %v549, %v774
      %v776 = vpop.f32.mrb[0].mxu0
      %v777 = vpop.f32.mrb[0].mxu0
      %v778 = vpop.f32.mrb[0].mxu0
      %779 = vdwg.mxu0
      %v780 = vpack.c.bf16 %v720, %v716
      %v781 = vpack.c.bf16 %v726, %v726
      %v782 = vpack.c.bf16 %v722, %v718
      %v783 = vpack.c.bf16 %v728, %v728
      %v784 = vpack.c.bf16 %v770, %v767
      %v785 = vpack.c.bf16 %v775, %v775
      %vm786 = vcmask 261120
      %v788 = vsel %vm786, %v780, 0
      %v791 = vsel %vm786, %v781, 0
      %v794 = vsel %vm786, %v782, 0
      %v797 = vsel %vm786, %v783, 0
      %799 = vmatprep.subr.bf16.mxu0 0
      %800 = vmatpush1.bf16.xpose.msra.mxu0 %v794
      %801 = vmatprep.subr.bf16.mxu0 0
      %802 = vmatpush1.bf16.xpose.msra.mxu0 %v797
      %803 = vmatprep.subr.bf16.mxu0 0
      %804 = vmatpush1.bf16.xpose.msra.mxu0 0
      %805 = vmatprep.subr.bf16.mxu0 0
      %806 = vmatpush1.bf16.xpose.msra.mxu0 0
      %807 = vmatprep.subr.bf16.mxu0 0
      %808 = vmatpush1.bf16.xpose.msra.mxu0 0
      %809 = vmatprep.subr.bf16.mxu0 0
      %810 = vmatpush1.bf16.xpose.msra.mxu0 0
      %811 = vmatprep.subr.bf16.mxu0 0
      %812 = vmatpush1.bf16.xpose.msra.mxu0 0
      %813 = vmatprep.subr.bf16.mxu0 0
      %814 = vmatpush1.bf16.xpose.msra.mxu0 0
      %815 = vmatprep.subr.bf16.mxu0 0
      %816 = vmatpush1.bf16.xpose.msra.mxu0 0
      %817 = vmatprep.subr.bf16.mxu0 0
      %818 = vmatpush1.bf16.xpose.msra.mxu0 0
      %819 = vmatprep.subr.bf16.mxu0 0
      %820 = vmatpush1.bf16.xpose.msra.mxu0 0
      %821 = vmatprep.subr.bf16.mxu0 0
      %822 = vmatpush1.bf16.xpose.msra.mxu0 0
      %823 = vmatprep.subr.bf16.mxu0 0
      %824 = vmatpush1.bf16.xpose.msra.mxu0 0
      %825 = vmatprep.subr.bf16.mxu0 0
      %826 = vmatpush1.bf16.xpose.msra.mxu0 0
      %827 = vmatprep.subr.bf16.mxu0 0
      %828 = vmatpush1.bf16.xpose.msra.mxu0 0
      %829 = vmatprep.subr.bf16.mxu0 0
      %830 = vmatpush1.bf16.xpose.msra.mxu0 0
      %831 = vmatprep.mubr.bf16.mxu0 0
      %832 = vmatmul.mubr.bf16.gmra.mrb[0].mxu0 %v788
      %v833 = vpop.f32.mrb[0].mxu0
      %v834 = vadd.f32 0.0, %v833
      %v835 = vpop.f32.mrb[0].mxu0
      %v836 = vpop.f32.mrb[0].mxu0
      %v837 = vadd.f32 0.0, %v836
      %v838 = vpop.f32.mrb[0].mxu0
      %839 = vmatprep.mubr.bf16.mxu0 0
      %840 = vmatmul.mubr.bf16.gmra.mrb[0].mxu0 %v791
      %v841 = vpop.f32.mrb[0].mxu0
      %v842 = vadd.f32 0.0, %v841
      %v843 = vpop.f32.mrb[0].mxu0
      %v844 = vpop.f32.mrb[0].mxu0
      %v845 = vpop.f32.mrb[0].mxu0
      %846 = vdwg.mxu0
      %v847 = vmul.f32 %v834, 0.17677669
      %v848 = vmul.f32 %v837, 0.17677669
      %v849 = vmul.f32 %v842, 0.17677669
      %vm850 = vcmask 138240
      %v851 = vsel %vm850, %v847, -inf
      %852 = vmax.xlane.f32.xlu0 %v851
      %v853 = vpop.xlane.xlu0 %852
      %v854 = vsel %vm850, %v848, -inf
      %855 = vmax.xlane.f32.xlu0 %v854
      %v856 = vpop.xlane.xlu0 %855
      %vm857 = vcmask 131072
      %v858 = vsel %vm857, %v849, -inf
      %859 = vmax.xlane.f32.xlu0 %v858
      %v860 = vpop.xlane.xlu0 %859
      %v861 = vsub.f32 %v847, %v853
      %v862 = vsub.f32 %v848, %v856
      %v863 = vsub.f32 %v849, %v860
      %v864 = vmul.f32 %v861, 1.442695
      %v865 = vpow.pop %v864
      %v866 = vmul.f32 %v862, 1.442695
      %v867 = vpow.pop %v866
      %v868 = vmul.f32 %v863, 1.442695
      %v869 = vpow.pop %v868
      %v870 = vsel %vm850, %v865, 0.0
      %871 = vadd.xlane.f32.xlu0 %v870
      %v872 = vpop.xlane.xlu0 %871
      %v873 = vsel %vm850, %v867, 0.0
      %874 = vadd.xlane.f32.xlu0 %v873
      %v875 = vpop.xlane.xlu0 %874
      %v876 = vsel %vm857, %v869, 0.0
      %877 = vadd.xlane.f32.xlu0 %v876
      %v878 = vpop.xlane.xlu0 %877
      %v879 = vrcp.pop %v872
      %v880 = vrcp.pop %v875
      %v881 = vrcp.pop %v878
      %v882 = vmul.f32 %v865, %v879
      %v883 = vmul.f32 %v867, %v880
      %v884 = vmul.f32 %v869, %v881
      %v885 = vpack.c.bf16 %v883, %v882
      %v886 = vpack.c.bf16 %v884, %v884
      %v888 = vsel %vm850, %v885, 0
      %v891 = vsel %vm850, %v886, 0
      %v893 = vsel 0, 4294967295, 65535
      %v894 = vsel %vm451, %v893, 0
      %v896 = vand.u32 %v785, %v894
      %898 = vmatprep.subr.bf16.mxu0 0
      %899 = vmatpush1.bf16.msra.mxu0 %v784
      %900 = vmatprep.subr.bf16.mxu0 0
      %901 = vmatpush1.bf16.msra.mxu0 %v896
      %902 = vmatprep.subr.bf16.mxu0 0
      %903 = vmatpush1.bf16.msra.mxu0 0
      %904 = vmatprep.subr.bf16.mxu0 0
      %905 = vmatpush1.bf16.msra.mxu0 0
      %906 = vmatprep.subr.bf16.mxu0 0
      %907 = vmatpush1.bf16.msra.mxu0 0
      %908 = vmatprep.subr.bf16.mxu0 0
      %909 = vmatpush1.bf16.msra.mxu0 0
      %910 = vmatprep.subr.bf16.mxu0 0
      %911 = vmatpush1.bf16.msra.mxu0 0
      %912 = vmatprep.subr.bf16.mxu0 0
      %913 = vmatpush1.bf16.msra.mxu0 0
      %914 = vmatprep.subr.bf16.mxu0 0
      %915 = vmatpush1.bf16.msra.mxu0 0
      %916 = vmatprep.subr.bf16.mxu0 0
      %917 = vmatpush1.bf16.msra.mxu0 0
      %918 = vmatprep.subr.bf16.mxu0 0
      %919 = vmatpush1.bf16.msra.mxu0 0
      %920 = vmatprep.subr.bf16.mxu0 0
      %921 = vmatpush1.bf16.msra.mxu0 0
      %922 = vmatprep.subr.bf16.mxu0 0
      %923 = vmatpush1.bf16.msra.mxu0 0
      %924 = vmatprep.subr.bf16.mxu0 0
      %925 = vmatpush1.bf16.msra.mxu0 0
      %926 = vmatprep.subr.bf16.mxu0 0
      %927 = vmatpush1.bf16.msra.mxu0 0
      %928 = vmatprep.subr.bf16.mxu0 0
      %929 = vmatpush1.bf16.msra.mxu0 0
      %930 = vmatprep.mubr.bf16.mxu0 0
      %931 = vmatmul.mubr.bf16.gmra.mrb[0].mxu0 %v888
      %v932 = vpop.f32.mrb[0].mxu0
      %v933 = vadd.f32 0.0, %v932
      %v934 = vpop.f32.mrb[0].mxu0
      %v935 = vpop.f32.mrb[0].mxu0
      %v936 = vadd.f32 0.0, %v935
      %v937 = vpop.f32.mrb[0].mxu0
      %938 = vmatprep.mubr.bf16.mxu0 0
      %939 = vmatmul.mubr.bf16.gmra.mrb[0].mxu0 %v891
      %v940 = vpop.f32.mrb[0].mxu0
      %v941 = vadd.f32 0.0, %v940
      %v942 = vpop.f32.mrb[0].mxu0
      %v943 = vpop.f32.mrb[0].mxu0
      %v944 = vpop.f32.mrb[0].mxu0
      %945 = vdwg.mxu0
      %v946 = vpack.c.bf16 %v936, %v933
      %v947 = vpack.c.bf16 %v941, %v941
      %v948 = vld [vmem:[%s5] sm:$0xf]
      %v949 = vld [vmem:[%s5 + $0x4] sm:$0xf]
      %v950 = vld [vmem:[%s5 + $0x8] sm:$0xf]
      %v951 = vld [vmem:[%s5 + $0xc] sm:$0xf]
      %954 = vrot.lane.b32.xlu0 %v780, 96
      %v955 = vpop.permute.xlu0 %954
      %956 = vrot.lane.b32.xlu0 %v781, 96
      %v957 = vpop.permute.xlu0 %956
      %960 = vrot.lane.b32.xlu0 %v782, 96
      %v961 = vpop.permute.xlu0 %960
      %962 = vrot.lane.b32.xlu0 %v783, 96
      %v963 = vpop.permute.xlu0 %962
      %v965 = vsel %vm786, %v955, 0
      %v968 = vsel %vm786, %v957, 0
      %v971 = vsel %vm786, %v961, 0
      %v974 = vsel %vm786, %v963, 0
      %976 = vmatprep.subr.bf16.mxu0 0
      %977 = vmatpush1.bf16.xpose.msra.mxu0 %v971
      %978 = vmatprep.subr.bf16.mxu0 0
      %979 = vmatpush1.bf16.xpose.msra.mxu0 %v974
      %980 = vmatprep.subr.bf16.mxu0 0
      %981 = vmatpush1.bf16.xpose.msra.mxu0 0
      %982 = vmatprep.subr.bf16.mxu0 0
      %983 = vmatpush1.bf16.xpose.msra.mxu0 0
      %984 = vmatprep.subr.bf16.mxu0 0
      %985 = vmatpush1.bf16.xpose.msra.mxu0 0
      %986 = vmatprep.subr.bf16.mxu0 0
      %987 = vmatpush1.bf16.xpose.msra.mxu0 0
      %988 = vmatprep.subr.bf16.mxu0 0
      %989 = vmatpush1.bf16.xpose.msra.mxu0 0
      %990 = vmatprep.subr.bf16.mxu0 0
      %991 = vmatpush1.bf16.xpose.msra.mxu0 0
      %992 = vmatprep.subr.bf16.mxu0 0
      %993 = vmatpush1.bf16.xpose.msra.mxu0 0
      %994 = vmatprep.subr.bf16.mxu0 0
      %995 = vmatpush1.bf16.xpose.msra.mxu0 0
      %996 = vmatprep.subr.bf16.mxu0 0
      %997 = vmatpush1.bf16.xpose.msra.mxu0 0
      %998 = vmatprep.subr.bf16.mxu0 0
      %999 = vmatpush1.bf16.xpose.msra.mxu0 0
      %1000 = vmatprep.subr.bf16.mxu0 0
      %1001 = vmatpush1.bf16.xpose.msra.mxu0 0
      %1002 = vmatprep.subr.bf16.mxu0 0
      %1003 = vmatpush1.bf16.xpose.msra.mxu0 0
      %1004 = vmatprep.subr.bf16.mxu0 0
      %1005 = vmatpush1.bf16.xpose.msra.mxu0 0
      %1006 = vmatprep.subr.bf16.mxu0 0
      %1007 = vmatpush1.bf16.xpose.msra.mxu0 0
      %1008 = vmatprep.mubr.bf16.mxu0 0
      %1009 = vmatmul.mubr.bf16.gmra.mrb[0].mxu0 %v965
      %v1010 = vpop.f32.mrb[0].mxu0
      %v1011 = vadd.f32 0.0, %v1010
      %v1012 = vpop.f32.mrb[0].mxu0
      %v1013 = vpop.f32.mrb[0].mxu0
      %v1014 = vadd.f32 0.0, %v1013
      %v1015 = vpop.f32.mrb[0].mxu0
      %1016 = vmatprep.mubr.bf16.mxu0 0
      %1017 = vmatmul.mubr.bf16.gmra.mrb[0].mxu0 %v968
      %v1018 = vpop.f32.mrb[0].mxu0
      %v1019 = vadd.f32 0.0, %v1018
      %v1020 = vpop.f32.mrb[0].mxu0
      %v1021 = vpop.f32.mrb[0].mxu0
      %v1022 = vpop.f32.mrb[0].mxu0
      %1023 = vdwg.mxu0
      %v1024 = vmul.f32 %v1011, 0.17677669
      %v1025 = vmul.f32 %v1014, 0.17677669
      %v1026 = vmul.f32 %v1019, 0.17677669
      %v1027 = vsel %vm850, %v1024, -inf
      %1028 = vmax.xlane.f32.xlu0 %v1027
      %v1029 = vpop.xlane.xlu0 %1028
      %v1030 = vsel %vm850, %v1025, -inf
      %1031 = vmax.xlane.f32.xlu0 %v1030
      %v1032 = vpop.xlane.xlu0 %1031
      %v1033 = vsel %vm857, %v1026, -inf
      %1034 = vmax.xlane.f32.xlu0 %v1033
      %v1035 = vpop.xlane.xlu0 %1034
      %v1036 = vsub.f32 %v1024, %v1029
      %v1037 = vsub.f32 %v1025, %v1032
      %v1038 = vsub.f32 %v1026, %v1035
      %v1039 = vmul.f32 %v1036, 1.442695
      %v1040 = vpow.pop %v1039
      %v1041 = vmul.f32 %v1037, 1.442695
      %v1042 = vpow.pop %v1041
      %v1043 = vmul.f32 %v1038, 1.442695
      %v1044 = vpow.pop %v1043
      %v1045 = vsel %vm850, %v1040, 0.0
      %1046 = vadd.xlane.f32.xlu0 %v1045
      %v1047 = vpop.xlane.xlu0 %1046
      %v1048 = vsel %vm850, %v1042, 0.0
      %1049 = vadd.xlane.f32.xlu0 %v1048
      %v1050 = vpop.xlane.xlu0 %1049
      %v1051 = vsel %vm857, %v1044, 0.0
      %1052 = vadd.xlane.f32.xlu0 %v1051
      %v1053 = vpop.xlane.xlu0 %1052
      %v1054 = vrcp.pop %v1047
      %v1055 = vrcp.pop %v1050
      %v1056 = vrcp.pop %v1053
      %v1057 = vmul.f32 %v1040, %v1054
      %v1058 = vmul.f32 %v1042, %v1055
      %v1059 = vmul.f32 %v1044, %v1056
      %v1060 = vpack.c.bf16 %v1058, %v1057
      %v1061 = vpack.c.bf16 %v1059, %v1059
      %1064 = vrot.lane.b32.xlu0 %v784, 96
      %v1065 = vpop.permute.xlu0 %1064
      %1066 = vrot.lane.b32.xlu0 %v785, 96
      %v1067 = vpop.permute.xlu0 %1066
      %v1070 = vsel %vm850, %v1060, 0
      %v1073 = vsel %vm850, %v1061, 0
      %v1076 = vand.u32 %v1067, %v894
      %1078 = vmatprep.subr.bf16.mxu0 0
      %1079 = vmatpush1.bf16.msra.mxu0 %v1065
      %1080 = vmatprep.subr.bf16.mxu0 0
      %1081 = vmatpush1.bf16.msra.mxu0 %v1076
      %1082 = vmatprep.subr.bf16.mxu0 0
      %1083 = vmatpush1.bf16.msra.mxu0 0
      %1084 = vmatprep.subr.bf16.mxu0 0
      %1085 = vmatpush1.bf16.msra.mxu0 0
      %1086 = vmatprep.subr.bf16.mxu0 0
      %1087 = vmatpush1.bf16.msra.mxu0 0
      %1088 = vmatprep.subr.bf16.mxu0 0
      %1089 = vmatpush1.bf16.msra.mxu0 0
      %1090 = vmatprep.subr.bf16.mxu0 0
      %1091 = vmatpush1.bf16.msra.mxu0 0
      %1092 = vmatprep.subr.bf16.mxu0 0
      %1093 = vmatpush1.bf16.msra.mxu0 0
      %1094 = vmatprep.subr.bf16.mxu0 0
      %1095 = vmatpush1.bf16.msra.mxu0 0
      %1096 = vmatprep.subr.bf16.mxu0 0
      %1097 = vmatpush1.bf16.msra.mxu0 0
      %1098 = vmatprep.subr.bf16.mxu0 0
      %1099 = vmatpush1.bf16.msra.mxu0 0
      %1100 = vmatprep.subr.bf16.mxu0 0
      %1101 = vmatpush1.bf16.msra.mxu0 0
      %1102 = vmatprep.subr.bf16.mxu0 0
      %1103 = vmatpush1.bf16.msra.mxu0 0
      %1104 = vmatprep.subr.bf16.mxu0 0
      %1105 = vmatpush1.bf16.msra.mxu0 0
      %1106 = vmatprep.subr.bf16.mxu0 0
      %1107 = vmatpush1.bf16.msra.mxu0 0
      %1108 = vmatprep.subr.bf16.mxu0 0
      %1109 = vmatpush1.bf16.msra.mxu0 0
      %1110 = vmatprep.mubr.bf16.mxu0 0
      %1111 = vmatmul.mubr.bf16.gmra.mrb[0].mxu0 %v1070
      %v1112 = vpop.f32.mrb[0].mxu0
      %v1113 = vadd.f32 0.0, %v1112
      %v1114 = vpop.f32.mrb[0].mxu0
      %v1115 = vpop.f32.mrb[0].mxu0
      %v1116 = vadd.f32 0.0, %v1115
      %v1117 = vpop.f32.mrb[0].mxu0
      %1118 = vmatprep.mubr.bf16.mxu0 0
      %1119 = vmatmul.mubr.bf16.gmra.mrb[0].mxu0 %v1073
      %v1120 = vpop.f32.mrb[0].mxu0
      %v1121 = vadd.f32 0.0, %v1120
      %v1122 = vpop.f32.mrb[0].mxu0
      %v1123 = vpop.f32.mrb[0].mxu0
      %v1124 = vpop.f32.mrb[0].mxu0
      %1125 = vdwg.mxu0
      %v1126 = vpack.c.bf16 %v1116, %v1113
      %v1127 = vpack.c.bf16 %v1121, %v1121
      %v1128 = vld [vmem:[%s5 + $0x10] sm:$0xf]
      %v1129 = vld [vmem:[%s5 + $0x14] sm:$0xf]
      %v1130 = vld [vmem:[%s5 + $0x18] sm:$0xf]
      %v1131 = vld [vmem:[%s5 + $0x1c] sm:$0xf]
      %v1136 = vunpack.c.l.b16 %v1128
      %v1137 = vunpack.c.l.b16 %v1129
      %v1138 = vunpack.c.l.b16 %v1130
      %v1139 = vunpack.c.l.b16 %v1131
      %v1140 = vpack.c.b16 %v1137, %v1136
      %v1141 = vpack.c.b16 %v1139, %v1138
      %v1145 = vsel %vm786, %v1126, 0
      %v1148 = vsel %vm786, %v1127, 0
      %1150 = vmatprep.subr.bf16.mxu0 0
      %1151 = vmatpush1.bf16.msra.mxu0 %v1140
      %1152 = vmatprep.subr.bf16.mxu0 0
      %1153 = vmatpush1.bf16.msra.mxu0 %v1141
      %1154 = vmatprep.subr.bf16.mxu0 0
      %1155 = vmatpush1.bf16.msra.mxu0 0
      %1156 = vmatprep.subr.bf16.mxu0 0
      %1157 = vmatpush1.bf16.msra.mxu0 0
      %1158 = vmatprep.subr.bf16.mxu0 0
      %1159 = vmatpush1.bf16.msra.mxu0 0
      %1160 = vmatprep.subr.bf16.mxu0 0
      %1161 = vmatpush1.bf16.msra.mxu0 0
      %1162 = vmatprep.subr.bf16.mxu0 0
      %1163 = vmatpush1.bf16.msra.mxu0 0
      %1164 = vmatprep.subr.bf16.mxu0 0
      %1165 = vmatpush1.bf16.msra.mxu0 0
      %1166 = vmatprep.subr.bf16.mxu0 0
      %1167 = vmatpush1.bf16.msra.mxu0 0
      %1168 = vmatprep.subr.bf16.mxu0 0
      %1169 = vmatpush1.bf16.msra.mxu0 0
      %1170 = vmatprep.subr.bf16.mxu0 0
      %1171 = vmatpush1.bf16.msra.mxu0 0
      %1172 = vmatprep.subr.bf16.mxu0 0
      %1173 = vmatpush1.bf16.msra.mxu0 0
      %1174 = vmatprep.subr.bf16.mxu0 0
      %1175 = vmatpush1.bf16.msra.mxu0 0
      %1176 = vmatprep.subr.bf16.mxu0 0
      %1177 = vmatpush1.bf16.msra.mxu0 0
      %1178 = vmatprep.subr.bf16.mxu0 0
      %1179 = vmatpush1.bf16.msra.mxu0 0
      %1180 = vmatprep.subr.bf16.mxu0 0
      %1181 = vmatpush1.bf16.msra.mxu0 0
      %1182 = vmatprep.mubr.bf16.mxu0 0
      %1183 = vmatmul.mubr.bf16.gmra.mrb[0].mxu0 %v1145
      %v1184 = vpop.f32.mrb[0].mxu0
      %v1185 = vadd.f32 0.0, %v1184
      %v1186 = vpop.f32.mrb[0].mxu0
      %v1187 = vpop.f32.mrb[0].mxu0
      %v1188 = vadd.f32 0.0, %v1187
      %v1189 = vpop.f32.mrb[0].mxu0
      %1190 = vmatprep.mubr.bf16.mxu0 0
      %1191 = vmatmul.mubr.bf16.gmra.mrb[0].mxu0 %v1148
      %v1192 = vpop.f32.mrb[0].mxu0
      %v1193 = vadd.f32 0.0, %v1192
      %v1194 = vpop.f32.mrb[0].mxu0
      %v1195 = vpop.f32.mrb[0].mxu0
      %v1196 = vpop.f32.mrb[0].mxu0
      %1197 = vdwg.mxu0
      %v1202 = vunpack.c.l.b16 %v948
      %v1203 = vunpack.c.l.b16 %v949
      %v1204 = vunpack.c.l.b16 %v950
      %v1205 = vunpack.c.l.b16 %v951
      %v1206 = vpack.c.b16 %v1203, %v1202
      %v1207 = vpack.c.b16 %v1205, %v1204
      %v1211 = vsel %vm786, %v946, 0
      %v1214 = vsel %vm786, %v947, 0
      %1216 = vmatprep.subr.bf16.mxu0 0
      %1217 = vmatpush1.bf16.msra.mxu0 %v1206
      %1218 = vmatprep.subr.bf16.mxu0 0
      %1219 = vmatpush1.bf16.msra.mxu0 %v1207
      %1220 = vmatprep.subr.bf16.mxu0 0
      %1221 = vmatpush1.bf16.msra.mxu0 0
      %1222 = vmatprep.subr.bf16.mxu0 0
      %1223 = vmatpush1.bf16.msra.mxu0 0
      %1224 = vmatprep.subr.bf16.mxu0 0
      %1225 = vmatpush1.bf16.msra.mxu0 0
      %1226 = vmatprep.subr.bf16.mxu0 0
      %1227 = vmatpush1.bf16.msra.mxu0 0
      %1228 = vmatprep.subr.bf16.mxu0 0
      %1229 = vmatpush1.bf16.msra.mxu0 0
      %1230 = vmatprep.subr.bf16.mxu0 0
      %1231 = vmatpush1.bf16.msra.mxu0 0
      %1232 = vmatprep.subr.bf16.mxu0 0
      %1233 = vmatpush1.bf16.msra.mxu0 0
      %1234 = vmatprep.subr.bf16.mxu0 0
      %1235 = vmatpush1.bf16.msra.mxu0 0
      %1236 = vmatprep.subr.bf16.mxu0 0
      %1237 = vmatpush1.bf16.msra.mxu0 0
      %1238 = vmatprep.subr.bf16.mxu0 0
      %1239 = vmatpush1.bf16.msra.mxu0 0
      %1240 = vmatprep.subr.bf16.mxu0 0
      %1241 = vmatpush1.bf16.msra.mxu0 0
      %1242 = vmatprep.subr.bf16.mxu0 0
      %1243 = vmatpush1.bf16.msra.mxu0 0
      %1244 = vmatprep.subr.bf16.mxu0 0
      %1245 = vmatpush1.bf16.msra.mxu0 0
      %1246 = vmatprep.subr.bf16.mxu0 0
      %1247 = vmatpush1.bf16.msra.mxu0 0
      %1248 = vmatprep.mubr.bf16.mxu0 0
      %1249 = vmatmul.mubr.bf16.gmra.mrb[0].mxu0 %v1211
      %v1250 = vpop.f32.mrb[0].mxu0
      %v1251 = vadd.f32 %v1185, %v1250
      %v1252 = vpop.f32.mrb[0].mxu0
      %v1253 = vpop.f32.mrb[0].mxu0
      %v1254 = vadd.f32 %v1188, %v1253
      %v1255 = vpop.f32.mrb[0].mxu0
      %1256 = vmatprep.mubr.bf16.mxu0 0
      %1257 = vmatmul.mubr.bf16.gmra.mrb[0].mxu0 %v1214
      %v1258 = vpop.f32.mrb[0].mxu0
      %v1259 = vadd.f32 %v1193, %v1258
      %v1260 = vpop.f32.mrb[0].mxu0
      %v1261 = vpop.f32.mrb[0].mxu0
      %v1262 = vpop.f32.mrb[0].mxu0
      %1263 = vdwg.mxu0
      %1264 = vrot.lane.b32.xlu0 %v780, 64
      %v1265 = vpop.permute.xlu0 %1264
      %1266 = vrot.lane.b32.xlu0 %v781, 64
      %v1267 = vpop.permute.xlu0 %1266
      %1268 = vrot.lane.b32.xlu0 %v782, 64
      %v1269 = vpop.permute.xlu0 %1268
      %1270 = vrot.lane.b32.xlu0 %v783, 64
      %v1271 = vpop.permute.xlu0 %1270
      %v1273 = vsel %vm786, %v1265, 0
      %v1276 = vsel %vm786, %v1267, 0
      %v1279 = vsel %vm786, %v1269, 0
      %v1282 = vsel %vm786, %v1271, 0
      %1284 = vmatprep.subr.bf16.mxu0 0
      %1285 = vmatpush1.bf16.xpose.msra.mxu0 %v1279
      %1286 = vmatprep.subr.bf16.mxu0 0
      %1287 = vmatpush1.bf16.xpose.msra.mxu0 %v1282
      %1288 = vmatprep.subr.bf16.mxu0 0
      %1289 = vmatpush1.bf16.xpose.msra.mxu0 0
      %1290 = vmatprep.subr.bf16.mxu0 0
      %1291 = vmatpush1.bf16.xpose.msra.mxu0 0
      %1292 = vmatprep.subr.bf16.mxu0 0
      %1293 = vmatpush1.bf16.xpose.msra.mxu0 0
      %1294 = vmatprep.subr.bf16.mxu0 0
      %1295 = vmatpush1.bf16.xpose.msra.mxu0 0
      %1296 = vmatprep.subr.bf16.mxu0 0
      %1297 = vmatpush1.bf16.xpose.msra.mxu0 0
      %1298 = vmatprep.subr.bf16.mxu0 0
      %1299 = vmatpush1.bf16.xpose.msra.mxu0 0
      %1300 = vmatprep.subr.bf16.mxu0 0
      %1301 = vmatpush1.bf16.xpose.msra.mxu0 0
      %1302 = vmatprep.subr.bf16.mxu0 0
      %1303 = vmatpush1.bf16.xpose.msra.mxu0 0
      %1304 = vmatprep.subr.bf16.mxu0 0
      %1305 = vmatpush1.bf16.xpose.msra.mxu0 0
      %1306 = vmatprep.subr.bf16.mxu0 0
      %1307 = vmatpush1.bf16.xpose.msra.mxu0 0
      %1308 = vmatprep.subr.bf16.mxu0 0
      %1309 = vmatpush1.bf16.xpose.msra.mxu0 0
      %1310 = vmatprep.subr.bf16.mxu0 0
      %1311 = vmatpush1.bf16.xpose.msra.mxu0 0
      %1312 = vmatprep.subr.bf16.mxu0 0
      %1313 = vmatpush1.bf16.xpose.msra.mxu0 0
      %1314 = vmatprep.subr.bf16.mxu0 0
      %1315 = vmatpush1.bf16.xpose.msra.mxu0 0
      %1316 = vmatprep.mubr.bf16.mxu0 0
      %1317 = vmatmul.mubr.bf16.gmra.mrb[0].mxu0 %v1273
      %v1318 = vpop.f32.mrb[0].mxu0
      %v1319 = vadd.f32 0.0, %v1318
      %v1320 = vpop.f32.mrb[0].mxu0
      %v1321 = vpop.f32.mrb[0].mxu0
      %v1322 = vadd.f32 0.0, %v1321
      %v1323 = vpop.f32.mrb[0].mxu0
      %1324 = vmatprep.mubr.bf16.mxu0 0
      %1325 = vmatmul.mubr.bf16.gmra.mrb[0].mxu0 %v1276
      %v1326 = vpop.f32.mrb[0].mxu0
      %v1327 = vadd.f32 0.0, %v1326
      %v1328 = vpop.f32.mrb[0].mxu0
      %v1329 = vpop.f32.mrb[0].mxu0
      %v1330 = vpop.f32.mrb[0].mxu0
      %1331 = vdwg.mxu0
      %v1332 = vmul.f32 %v1319, 0.17677669
      %v1333 = vmul.f32 %v1322, 0.17677669
      %v1334 = vmul.f32 %v1327, 0.17677669
      %v1335 = vsel %vm850, %v1332, -inf
      %1336 = vmax.xlane.f32.xlu0 %v1335
      %v1337 = vpop.xlane.xlu0 %1336
      %v1338 = vsel %vm850, %v1333, -inf
      %1339 = vmax.xlane.f32.xlu0 %v1338
      %v1340 = vpop.xlane.xlu0 %1339
      %v1341 = vsel %vm857, %v1334, -inf
      %1342 = vmax.xlane.f32.xlu0 %v1341
      %v1343 = vpop.xlane.xlu0 %1342
      %v1344 = vsub.f32 %v1332, %v1337
      %v1345 = vsub.f32 %v1333, %v1340
      %v1346 = vsub.f32 %v1334, %v1343
      %v1347 = vmul.f32 %v1344, 1.442695
      %v1348 = vpow.pop %v1347
      %v1349 = vmul.f32 %v1345, 1.442695
      %v1350 = vpow.pop %v1349
      %v1351 = vmul.f32 %v1346, 1.442695
      %v1352 = vpow.pop %v1351
      %v1353 = vsel %vm850, %v1348, 0.0
      %1354 = vadd.xlane.f32.xlu0 %v1353
      %v1355 = vpop.xlane.xlu0 %1354
      %v1356 = vsel %vm850, %v1350, 0.0
      %1357 = vadd.xlane.f32.xlu0 %v1356
      %v1358 = vpop.xlane.xlu0 %1357
      %v1359 = vsel %vm857, %v1352, 0.0
      %1360 = vadd.xlane.f32.xlu0 %v1359
      %v1361 = vpop.xlane.xlu0 %1360
      %v1362 = vrcp.pop %v1355
      %v1363 = vrcp.pop %v1358
      %v1364 = vrcp.pop %v1361
      %v1365 = vmul.f32 %v1348, %v1362
      %v1366 = vmul.f32 %v1350, %v1363
      %v1367 = vmul.f32 %v1352, %v1364
      %v1368 = vpack.c.bf16 %v1366, %v1365
      %v1369 = vpack.c.bf16 %v1367, %v1367
      %1370 = vrot.lane.b32.xlu0 %v784, 64
      %v1371 = vpop.permute.xlu0 %1370
      %1372 = vrot.lane.b32.xlu0 %v785, 64
      %v1373 = vpop.permute.xlu0 %1372
      %v1376 = vsel %vm850, %v1368, 0
      %v1379 = vsel %vm850, %v1369, 0
      %v1382 = vand.u32 %v1373, %v894
      %1384 = vmatprep.subr.bf16.mxu0 0
      %1385 = vmatpush1.bf16.msra.mxu0 %v1371
      %1386 = vmatprep.subr.bf16.mxu0 0
      %1387 = vmatpush1.bf16.msra.mxu0 %v1382
      %1388 = vmatprep.subr.bf16.mxu0 0
      %1389 = vmatpush1.bf16.msra.mxu0 0
      %1390 = vmatprep.subr.bf16.mxu0 0
      %1391 = vmatpush1.bf16.msra.mxu0 0
      %1392 = vmatprep.subr.bf16.mxu0 0
      %1393 = vmatpush1.bf16.msra.mxu0 0
      %1394 = vmatprep.subr.bf16.mxu0 0
      %1395 = vmatpush1.bf16.msra.mxu0 0
      %1396 = vmatprep.subr.bf16.mxu0 0
      %1397 = vmatpush1.bf16.msra.mxu0 0
      %1398 = vmatprep.subr.bf16.mxu0 0
      %1399 = vmatpush1.bf16.msra.mxu0 0
      %1400 = vmatprep.subr.bf16.mxu0 0
      %1401 = vmatpush1.bf16.msra.mxu0 0
      %1402 = vmatprep.subr.bf16.mxu0 0
      %1403 = vmatpush1.bf16.msra.mxu0 0
      %1404 = vmatprep.subr.bf16.mxu0 0
      %1405 = vmatpush1.bf16.msra.mxu0 0
      %1406 = vmatprep.subr.bf16.mxu0 0
      %1407 = vmatpush1.bf16.msra.mxu0 0
      %1408 = vmatprep.subr.bf16.mxu0 0
      %1409 = vmatpush1.bf16.msra.mxu0 0
      %1410 = vmatprep.subr.bf16.mxu0 0
      %1411 = vmatpush1.bf16.msra.mxu0 0
      %1412 = vmatprep.subr.bf16.mxu0 0
      %1413 = vmatpush1.bf16.msra.mxu0 0
      %1414 = vmatprep.subr.bf16.mxu0 0
      %1415 = vmatpush1.bf16.msra.mxu0 0
      %1416 = vmatprep.mubr.bf16.mxu0 0
      %1417 = vmatmul.mubr.bf16.gmra.mrb[0].mxu0 %v1376
      %v1418 = vpop.f32.mrb[0].mxu0
      %v1419 = vadd.f32 0.0, %v1418
      %v1420 = vpop.f32.mrb[0].mxu0
      %v1421 = vpop.f32.mrb[0].mxu0
      %v1422 = vadd.f32 0.0, %v1421
      %v1423 = vpop.f32.mrb[0].mxu0
      %1424 = vmatprep.mubr.bf16.mxu0 0
      %1425 = vmatmul.mubr.bf16.gmra.mrb[0].mxu0 %v1379
      %v1426 = vpop.f32.mrb[0].mxu0
      %v1427 = vadd.f32 0.0, %v1426
      %v1428 = vpop.f32.mrb[0].mxu0
      %v1429 = vpop.f32.mrb[0].mxu0
      %v1430 = vpop.f32.mrb[0].mxu0
      %1431 = vdwg.mxu0
      %v1432 = vpack.c.bf16 %v1422, %v1419
      %v1433 = vpack.c.bf16 %v1427, %v1427
      %v1434 = vld [vmem:[%s5 + $0x20] sm:$0xf]
      %v1435 = vld [vmem:[%s5 + $0x24] sm:$0xf]
      %v1436 = vld [vmem:[%s5 + $0x28] sm:$0xf]
      %v1437 = vld [vmem:[%s5 + $0x2c] sm:$0xf]
      %v1442 = vunpack.c.l.b16 %v1434
      %v1443 = vunpack.c.l.b16 %v1435
      %v1444 = vunpack.c.l.b16 %v1436
      %v1445 = vunpack.c.l.b16 %v1437
      %v1446 = vpack.c.b16 %v1443, %v1442
      %v1447 = vpack.c.b16 %v1445, %v1444
      %v1451 = vsel %vm786, %v1432, 0
      %v1454 = vsel %vm786, %v1433, 0
      %1456 = vmatprep.subr.bf16.mxu0 0
      %1457 = vmatpush1.bf16.msra.mxu0 %v1446
      %1458 = vmatprep.subr.bf16.mxu0 0
      %1459 = vmatpush1.bf16.msra.mxu0 %v1447
      %1460 = vmatprep.subr.bf16.mxu0 0
      %1461 = vmatpush1.bf16.msra.mxu0 0
      %1462 = vmatprep.subr.bf16.mxu0 0
      %1463 = vmatpush1.bf16.msra.mxu0 0
      %1464 = vmatprep.subr.bf16.mxu0 0
      %1465 = vmatpush1.bf16.msra.mxu0 0
      %1466 = vmatprep.subr.bf16.mxu0 0
      %1467 = vmatpush1.bf16.msra.mxu0 0
      %1468 = vmatprep.subr.bf16.mxu0 0
      %1469 = vmatpush1.bf16.msra.mxu0 0
      %1470 = vmatprep.subr.bf16.mxu0 0
      %1471 = vmatpush1.bf16.msra.mxu0 0
      %1472 = vmatprep.subr.bf16.mxu0 0
      %1473 = vmatpush1.bf16.msra.mxu0 0
      %1474 = vmatprep.subr.bf16.mxu0 0
      %1475 = vmatpush1.bf16.msra.mxu0 0
      %1476 = vmatprep.subr.bf16.mxu0 0
      %1477 = vmatpush1.bf16.msra.mxu0 0
      %1478 = vmatprep.subr.bf16.mxu0 0
      %1479 = vmatpush1.bf16.msra.mxu0 0
      %1480 = vmatprep.subr.bf16.mxu0 0
      %1481 = vmatpush1.bf16.msra.mxu0 0
      %1482 = vmatprep.subr.bf16.mxu0 0
      %1483 = vmatpush1.bf16.msra.mxu0 0
      %1484 = vmatprep.subr.bf16.mxu0 0
      %1485 = vmatpush1.bf16.msra.mxu0 0
      %1486 = vmatprep.subr.bf16.mxu0 0
      %1487 = vmatpush1.bf16.msra.mxu0 0
      %1488 = vmatprep.mubr.bf16.mxu0 0
      %1489 = vmatmul.mubr.bf16.gmra.mrb[0].mxu0 %v1451
      %v1490 = vpop.f32.mrb[0].mxu0
      %v1491 = vadd.f32 0.0, %v1490
      %v1492 = vpop.f32.mrb[0].mxu0
      %v1493 = vpop.f32.mrb[0].mxu0
      %v1494 = vadd.f32 0.0, %v1493
      %v1495 = vpop.f32.mrb[0].mxu0
      %1496 = vmatprep.mubr.bf16.mxu0 0
      %1497 = vmatmul.mubr.bf16.gmra.mrb[0].mxu0 %v1454
      %v1498 = vpop.f32.mrb[0].mxu0
      %v1499 = vadd.f32 0.0, %v1498
      %v1500 = vpop.f32.mrb[0].mxu0
      %v1501 = vpop.f32.mrb[0].mxu0
      %v1502 = vpop.f32.mrb[0].mxu0
      %1503 = vdwg.mxu0
      %v1504 = vadd.f32 %v1251, %v1491
      %v1505 = vadd.f32 %v1254, %v1494
      %v1506 = vadd.f32 %v1259, %v1499
      %1507 = vrot.lane.b32.xlu0 %v780, 32
      %v1508 = vpop.permute.xlu0 %1507
      %1509 = vrot.lane.b32.xlu0 %v781, 32
      %v1510 = vpop.permute.xlu0 %1509
      %1511 = vrot.lane.b32.xlu0 %v782, 32
      %v1512 = vpop.permute.xlu0 %1511
      %1513 = vrot.lane.b32.xlu0 %v783, 32
      %v1514 = vpop.permute.xlu0 %1513
      %v1516 = vsel %vm786, %v1508, 0
      %v1519 = vsel %vm786, %v1510, 0
      %v1522 = vsel %vm786, %v1512, 0
      %v1525 = vsel %vm786, %v1514, 0
      %1527 = vmatprep.subr.bf16.mxu0 0
      %1528 = vmatpush1.bf16.xpose.msra.mxu0 %v1522
      %1529 = vmatprep.subr.bf16.mxu0 0
      %1530 = vmatpush1.bf16.xpose.msra.mxu0 %v1525
      %1531 = vmatprep.subr.bf16.mxu0 0
      %1532 = vmatpush1.bf16.xpose.msra.mxu0 0
      %1533 = vmatprep.subr.bf16.mxu0 0
      %1534 = vmatpush1.bf16.xpose.msra.mxu0 0
      %1535 = vmatprep.subr.bf16.mxu0 0
      %1536 = vmatpush1.bf16.xpose.msra.mxu0 0
      %1537 = vmatprep.subr.bf16.mxu0 0
      %1538 = vmatpush1.bf16.xpose.msra.mxu0 0
      %1539 = vmatprep.subr.bf16.mxu0 0
      %1540 = vmatpush1.bf16.xpose.msra.mxu0 0
      %1541 = vmatprep.subr.bf16.mxu0 0
      %1542 = vmatpush1.bf16.xpose.msra.mxu0 0
      %1543 = vmatprep.subr.bf16.mxu0 0
      %1544 = vmatpush1.bf16.xpose.msra.mxu0 0
      %1545 = vmatprep.subr.bf16.mxu0 0
      %1546 = vmatpush1.bf16.xpose.msra.mxu0 0
      %1547 = vmatprep.subr.bf16.mxu0 0
      %1548 = vmatpush1.bf16.xpose.msra.mxu0 0
      %1549 = vmatprep.subr.bf16.mxu0 0
      %1550 = vmatpush1.bf16.xpose.msra.mxu0 0
      %1551 = vmatprep.subr.bf16.mxu0 0
      %1552 = vmatpush1.bf16.xpose.msra.mxu0 0
      %1553 = vmatprep.subr.bf16.mxu0 0
      %1554 = vmatpush1.bf16.xpose.msra.mxu0 0
      %1555 = vmatprep.subr.bf16.mxu0 0
      %1556 = vmatpush1.bf16.xpose.msra.mxu0 0
      %1557 = vmatprep.subr.bf16.mxu0 0
      %1558 = vmatpush1.bf16.xpose.msra.mxu0 0
      %1559 = vmatprep.mubr.bf16.mxu0 0
      %1560 = vmatmul.mubr.bf16.gmra.mrb[0].mxu0 %v1516
      %v1561 = vpop.f32.mrb[0].mxu0
      %v1562 = vadd.f32 0.0, %v1561
      %v1563 = vpop.f32.mrb[0].mxu0
      %v1564 = vpop.f32.mrb[0].mxu0
      %v1565 = vadd.f32 0.0, %v1564
      %v1566 = vpop.f32.mrb[0].mxu0
      %1567 = vmatprep.mubr.bf16.mxu0 0
      %1568 = vmatmul.mubr.bf16.gmra.mrb[0].mxu0 %v1519
      %v1569 = vpop.f32.mrb[0].mxu0
      %v1570 = vadd.f32 0.0, %v1569
      %v1571 = vpop.f32.mrb[0].mxu0
      %v1572 = vpop.f32.mrb[0].mxu0
      %v1573 = vpop.f32.mrb[0].mxu0
      %1574 = vdwg.mxu0
      %v1575 = vmul.f32 %v1562, 0.17677669
      %v1576 = vmul.f32 %v1565, 0.17677669
      %v1577 = vmul.f32 %v1570, 0.17677669
      %v1578 = vsel %vm850, %v1575, -inf
      %1579 = vmax.xlane.f32.xlu0 %v1578
      %v1580 = vpop.xlane.xlu0 %1579
      %v1581 = vsel %vm850, %v1576, -inf
      %1582 = vmax.xlane.f32.xlu0 %v1581
      %v1583 = vpop.xlane.xlu0 %1582
      %v1584 = vsel %vm857, %v1577, -inf
      %1585 = vmax.xlane.f32.xlu0 %v1584
      %v1586 = vpop.xlane.xlu0 %1585
      %v1587 = vsub.f32 %v1575, %v1580
      %v1588 = vsub.f32 %v1576, %v1583
      %v1589 = vsub.f32 %v1577, %v1586
      %v1590 = vmul.f32 %v1587, 1.442695
      %v1591 = vpow.pop %v1590
      %v1592 = vmul.f32 %v1588, 1.442695
      %v1593 = vpow.pop %v1592
      %v1594 = vmul.f32 %v1589, 1.442695
      %v1595 = vpow.pop %v1594
      %v1596 = vsel %vm850, %v1591, 0.0
      %1597 = vadd.xlane.f32.xlu0 %v1596
      %v1598 = vpop.xlane.xlu0 %1597
      %v1599 = vsel %vm850, %v1593, 0.0
      %1600 = vadd.xlane.f32.xlu0 %v1599
      %v1601 = vpop.xlane.xlu0 %1600
      %v1602 = vsel %vm857, %v1595, 0.0
      %1603 = vadd.xlane.f32.xlu0 %v1602
      %v1604 = vpop.xlane.xlu0 %1603
      %v1605 = vrcp.pop %v1598
      %v1606 = vrcp.pop %v1601
      %v1607 = vrcp.pop %v1604
      %v1608 = vmul.f32 %v1591, %v1605
      %v1609 = vmul.f32 %v1593, %v1606
      %v1610 = vmul.f32 %v1595, %v1607
      %v1611 = vpack.c.bf16 %v1609, %v1608
      %v1612 = vpack.c.bf16 %v1610, %v1610
      %1613 = vrot.lane.b32.xlu0 %v784, 32
      %v1614 = vpop.permute.xlu0 %1613
      %1615 = vrot.lane.b32.xlu0 %v785, 32
      %v1616 = vpop.permute.xlu0 %1615
      %v1619 = vsel %vm850, %v1611, 0
      %v1622 = vsel %vm850, %v1612, 0
      %v1625 = vand.u32 %v1616, %v894
      %1627 = vmatprep.subr.bf16.mxu0 0
      %1628 = vmatpush1.bf16.msra.mxu0 %v1614
      %1629 = vmatprep.subr.bf16.mxu0 0
      %1630 = vmatpush1.bf16.msra.mxu0 %v1625
      %1631 = vmatprep.subr.bf16.mxu0 0
      %1632 = vmatpush1.bf16.msra.mxu0 0
      %1633 = vmatprep.subr.bf16.mxu0 0
      %1634 = vmatpush1.bf16.msra.mxu0 0
      %1635 = vmatprep.subr.bf16.mxu0 0
      %1636 = vmatpush1.bf16.msra.mxu0 0
      %1637 = vmatprep.subr.bf16.mxu0 0
      %1638 = vmatpush1.bf16.msra.mxu0 0
      %1639 = vmatprep.subr.bf16.mxu0 0
      %1640 = vmatpush1.bf16.msra.mxu0 0
      %1641 = vmatprep.subr.bf16.mxu0 0
      %1642 = vmatpush1.bf16.msra.mxu0 0
      %1643 = vmatprep.subr.bf16.mxu0 0
      %1644 = vmatpush1.bf16.msra.mxu0 0
      %1645 = vmatprep.subr.bf16.mxu0 0
      %1646 = vmatpush1.bf16.msra.mxu0 0
      %1647 = vmatprep.subr.bf16.mxu0 0
      %1648 = vmatpush1.bf16.msra.mxu0 0
      %1649 = vmatprep.subr.bf16.mxu0 0
      %1650 = vmatpush1.bf16.msra.mxu0 0
      %1651 = vmatprep.subr.bf16.mxu0 0
      %1652 = vmatpush1.bf16.msra.mxu0 0
      %1653 = vmatprep.subr.bf16.mxu0 0
      %1654 = vmatpush1.bf16.msra.mxu0 0
      %1655 = vmatprep.subr.bf16.mxu0 0
      %1656 = vmatpush1.bf16.msra.mxu0 0
      %1657 = vmatprep.subr.bf16.mxu0 0
      %1658 = vmatpush1.bf16.msra.mxu0 0
      %1659 = vmatprep.mubr.bf16.mxu0 0
      %1660 = vmatmul.mubr.bf16.gmra.mrb[0].mxu0 %v1619
      %v1661 = vpop.f32.mrb[0].mxu0
      %v1662 = vadd.f32 0.0, %v1661
      %v1663 = vpop.f32.mrb[0].mxu0
      %v1664 = vpop.f32.mrb[0].mxu0
      %v1665 = vadd.f32 0.0, %v1664
      %v1666 = vpop.f32.mrb[0].mxu0
      %1667 = vmatprep.mubr.bf16.mxu0 0
      %1668 = vmatmul.mubr.bf16.gmra.mrb[0].mxu0 %v1622
      %v1669 = vpop.f32.mrb[0].mxu0
      %v1670 = vadd.f32 0.0, %v1669
      %v1671 = vpop.f32.mrb[0].mxu0
      %v1672 = vpop.f32.mrb[0].mxu0
      %v1673 = vpop.f32.mrb[0].mxu0
      %1674 = vdwg.mxu0
      %v1675 = vpack.c.bf16 %v1665, %v1662
      %v1676 = vpack.c.bf16 %v1670, %v1670
      %v1677 = vld [vmem:[%s5 + $0x30] sm:$0xf]
      %v1678 = vld [vmem:[%s5 + $0x34] sm:$0xf]
      %v1679 = vld [vmem:[%s5 + $0x38] sm:$0xf]
      %v1680 = vld [vmem:[%s5 + $0x3c] sm:$0xf]
      %v1685 = vunpack.c.l.b16 %v1677
      %v1686 = vunpack.c.l.b16 %v1678
      %v1687 = vunpack.c.l.b16 %v1679
      %v1688 = vunpack.c.l.b16 %v1680
      %v1689 = vpack.c.b16 %v1686, %v1685
      %v1690 = vpack.c.b16 %v1688, %v1687
      %v1694 = vsel %vm786, %v1675, 0
      %v1697 = vsel %vm786, %v1676, 0
      %1699 = vmatprep.subr.bf16.mxu0 0
      %1700 = vmatpush1.bf16.msra.mxu0 %v1689
      %1701 = vmatprep.subr.bf16.mxu0 0
      %1702 = vmatpush1.bf16.msra.mxu0 %v1690
      %1703 = vmatprep.subr.bf16.mxu0 0
      %1704 = vmatpush1.bf16.msra.mxu0 0
      %1705 = vmatprep.subr.bf16.mxu0 0
      %1706 = vmatpush1.bf16.msra.mxu0 0
      %1707 = vmatprep.subr.bf16.mxu0 0
      %1708 = vmatpush1.bf16.msra.mxu0 0
      %1709 = vmatprep.subr.bf16.mxu0 0
      %1710 = vmatpush1.bf16.msra.mxu0 0
      %1711 = vmatprep.subr.bf16.mxu0 0
      %1712 = vmatpush1.bf16.msra.mxu0 0
      %1713 = vmatprep.subr.bf16.mxu0 0
      %1714 = vmatpush1.bf16.msra.mxu0 0
      %1715 = vmatprep.subr.bf16.mxu0 0
      %1716 = vmatpush1.bf16.msra.mxu0 0
      %1717 = vmatprep.subr.bf16.mxu0 0
      %1718 = vmatpush1.bf16.msra.mxu0 0
      %1719 = vmatprep.subr.bf16.mxu0 0
      %1720 = vmatpush1.bf16.msra.mxu0 0
      %1721 = vmatprep.subr.bf16.mxu0 0
      %1722 = vmatpush1.bf16.msra.mxu0 0
      %1723 = vmatprep.subr.bf16.mxu0 0
      %1724 = vmatpush1.bf16.msra.mxu0 0
      %1725 = vmatprep.subr.bf16.mxu0 0
      %1726 = vmatpush1.bf16.msra.mxu0 0
      %1727 = vmatprep.subr.bf16.mxu0 0
      %1728 = vmatpush1.bf16.msra.mxu0 0
      %1729 = vmatprep.subr.bf16.mxu0 0
      %1730 = vmatpush1.bf16.msra.mxu0 0
      %1731 = vmatprep.mubr.bf16.mxu0 0
      %1732 = vmatmul.mubr.bf16.gmra.mrb[0].mxu0 %v1694
      %v1733 = vpop.f32.mrb[0].mxu0
      %v1734 = vadd.f32 0.0, %v1733
      %v1735 = vpop.f32.mrb[0].mxu0
      %v1736 = vpop.f32.mrb[0].mxu0
      %v1737 = vadd.f32 0.0, %v1736
      %v1738 = vpop.f32.mrb[0].mxu0
      %1739 = vmatprep.mubr.bf16.mxu0 0
      %1740 = vmatmul.mubr.bf16.gmra.mrb[0].mxu0 %v1697
      %v1741 = vpop.f32.mrb[0].mxu0
      %v1742 = vadd.f32 0.0, %v1741
      %v1743 = vpop.f32.mrb[0].mxu0
      %v1744 = vpop.f32.mrb[0].mxu0
      %v1745 = vpop.f32.mrb[0].mxu0
      %1746 = vdwg.mxu0
      %v1747 = vadd.f32 %v1504, %v1734
      %v1748 = vadd.f32 %v1505, %v1737
      %v1749 = vadd.f32 %v1506, %v1742
      %v1750 = vadd.f32 %v442, %v1747
      %v1751 = vadd.f32 %v443, %v1748
      %v1752 = vadd.f32 %v444, %v1749
      %v1753 = vld [vmem:[%s6] sm:$0x1]
      %v1755 = vlaneseq
      %v1756 = vshrl.u32 %v1755, 7
      %v1757 = vsub.s32 0, %v1756
      %v1758 = vrot.slane %v1753, %v1757
      %v1760 = vadd.f32 %v1750, %v1758
      %v1761 = vadd.f32 %v1751, %v1758
      %v1762 = vadd.f32 %v1752, %v1758
      %v1763 = vld [vmem:[%s7] sm:$0x1]
      %v1764 = vld [vmem:[%s8] sm:$0x1]
      %1765 = vadd.xlane.f32.xlu0 %v1760
      %v1766 = vpop.xlane.xlu0 %1765
      %1767 = vadd.xlane.f32.xlu0 %v1761
      %v1768 = vpop.xlane.xlu0 %1767
      %v1769 = vsel %vm451, %v1762, 0.0
      %1770 = vadd.xlane.f32.xlu0 %v1769
      %v1771 = vpop.xlane.xlu0 %1770
      %v1772 = vmul.f32 %v1766, %v455
      %v1773 = vmul.f32 %v1768, %v455
      %v1774 = vmul.f32 %v1771, %v455
      %v1775 = vsub.f32 %v1760, %v1772
      %v1776 = vsub.f32 %v1761, %v1773
      %v1777 = vsub.f32 %v1762, %v1774
      %v1778 = vmul.f32 %v1775, %v1775
      %v1779 = vmul.f32 %v1776, %v1776
      %v1780 = vmul.f32 %v1777, %v1777
      %1781 = vadd.xlane.f32.xlu0 %v1778
      %v1782 = vpop.xlane.xlu0 %1781
      %1783 = vadd.xlane.f32.xlu0 %v1779
      %v1784 = vpop.xlane.xlu0 %1783
      %v1785 = vsel %vm451, %v1780, 0.0
      %1786 = vadd.xlane.f32.xlu0 %v1785
      %v1787 = vpop.xlane.xlu0 %1786
      %v1788 = vmul.f32 %v1782, %v455
      %v1789 = vmul.f32 %v1784, %v455
      %v1790 = vmul.f32 %v1787, %v455
      %v1791 = vadd.f32 %v1788, 1e-05
      %v1792 = vadd.f32 %v1789, 1e-05
      %v1793 = vadd.f32 %v1790, 1e-05
      %v1794 = vrsqrt.pop %v1791
      %v1795 = vrsqrt.pop %v1792
      %v1796 = vrsqrt.pop %v1793
      %v1797 = vmul.f32 %v1775, %v1794
      %v1798 = vmul.f32 %v1776, %v1795
      %v1799 = vmul.f32 %v1777, %v1796
      %v1801 = vlaneseq
      %v1802 = vshrl.u32 %v1801, 7
      %v1803 = vsub.s32 0, %v1802
      %v1804 = vrot.slane %v1763, %v1803
      %v1806 = vmul.f32 %v1797, %v1804
      %v1807 = vmul.f32 %v1798, %v1804
      %v1808 = vmul.f32 %v1799, %v1804
      %v1810 = vlaneseq
      %v1811 = vshrl.u32 %v1810, 7
      %v1812 = vsub.s32 0, %v1811
      %v1813 = vrot.slane %v1764, %v1812
      %v1815 = vadd.f32 %v1806, %v1813
      %v1816 = vadd.f32 %v1807, %v1813
      %v1817 = vadd.f32 %v1808, %v1813
      %v1818 = vpack.c.bf16 %v1816, %v1815
      %v1819 = vpack.c.bf16 %v1817, %v1817
      %v1820 = vld [vmem:[%s9] sm:$0xff]
      %v1821 = vld [vmem:[%s9 + $0x8] sm:$0xff]
      %v1822 = vld [vmem:[%s9 + $0x10] sm:$0xff]
      %v1823 = vld [vmem:[%s9 + $0x18] sm:$0xff]
      %v1824 = vld [vmem:[%s9 + $0x20] sm:$0xff]
      %v1825 = vld [vmem:[%s9 + $0x28] sm:$0xff]
      %v1826 = vld [vmem:[%s9 + $0x30] sm:$0xff]
      %v1827 = vld [vmem:[%s9 + $0x38] sm:$0xff]
      %v1828 = vld [vmem:[%s9 + $0x40] sm:$0xff]
      %v1829 = vld [vmem:[%s9 + $0x48] sm:$0xff]
      %v1830 = vld [vmem:[%s9 + $0x50] sm:$0xff]
      %v1831 = vld [vmem:[%s9 + $0x58] sm:$0xff]
      %v1832 = vld [vmem:[%s9 + $0x60] sm:$0xff]
      %v1833 = vld [vmem:[%s9 + $0x68] sm:$0xff]
      %v1834 = vld [vmem:[%s9 + $0x70] sm:$0xff]
      %v1835 = vld [vmem:[%s9 + $0x78] sm:$0xff]
      %v1836 = vld [vmem:[%s9 + $0x80] sm:$0xff]
      %v1837 = vld [vmem:[%s9 + $0x88] sm:$0xff]
      %v1838 = vld [vmem:[%s9 + $0x90] sm:$0xff]
      %v1839 = vld [vmem:[%s9 + $0x98] sm:$0xff]
      %v1840 = vld [vmem:[%s9 + $0xa0] sm:$0xff]
      %v1841 = vld [vmem:[%s9 + $0xa8] sm:$0xff]
      %v1842 = vld [vmem:[%s9 + $0xb0] sm:$0xff]
      %v1843 = vld [vmem:[%s9 + $0xb8] sm:$0xff]
      %v1844 = vld [vmem:[%s9 + $0xc0] sm:$0xff]
      %v1845 = vld [vmem:[%s9 + $0xc8] sm:$0xff]
      %v1846 = vld [vmem:[%s9 + $0xd0] sm:$0xff]
      %v1847 = vld [vmem:[%s9 + $0xd8] sm:$0xff]
      %v1848 = vld [vmem:[%s9 + $0xe0] sm:$0xff]
      %v1849 = vld [vmem:[%s9 + $0xe8] sm:$0xff]
      %v1850 = vld [vmem:[%s9 + $0xf0] sm:$0xff]
      %v1851 = vld [vmem:[%s9 + $0xf8] sm:$0xff]
      %v1852 = vld [vmem:[%s10] sm:$0xf]
      %v1854 = vlaneseq
      %v1855 = vshrl.u32 %v1854, 7
      %v1856 = vsub.s32 0, %v1855
      %v1857 = vrot.slane %v1852, %v1856
      %v1858 = vlaneseq
      %v1859 = vshrl.u32 %v1858, 7
      %v1860 = vsub.s32 1, %v1859
      %v1861 = vrot.slane %v1852, %v1860
      %v1862 = vlaneseq
      %v1863 = vshrl.u32 %v1862, 7
      %v1864 = vsub.s32 2, %v1863
      %v1865 = vrot.slane %v1852, %v1864
      %v1866 = vlaneseq
      %v1867 = vshrl.u32 %v1866, 7
      %v1868 = vsub.s32 3, %v1867
      %v1869 = vrot.slane %v1852, %v1868
      %v1906 = vunpack.c.l.b16 %v1820
      %v1907 = vunpack.c.h.b16 %v1820
      %v1908 = vunpack.c.l.b16 %v1821
      %v1909 = vunpack.c.h.b16 %v1821
      %v1910 = vunpack.c.l.b16 %v1822
      %v1911 = vunpack.c.h.b16 %v1822
      %v1912 = vunpack.c.l.b16 %v1823
      %v1913 = vunpack.c.h.b16 %v1823
      %v1914 = vunpack.c.l.b16 %v1824
      %v1915 = vunpack.c.h.b16 %v1824
      %v1916 = vunpack.c.l.b16 %v1825
      %v1917 = vunpack.c.h.b16 %v1825
      %v1918 = vunpack.c.l.b16 %v1826
      %v1919 = vunpack.c.h.b16 %v1826
      %v1920 = vunpack.c.l.b16 %v1827
      %v1921 = vunpack.c.h.b16 %v1827
      %v1922 = vunpack.c.l.b16 %v1828
      %v1923 = vunpack.c.h.b16 %v1828
      %v1924 = vunpack.c.l.b16 %v1829
      %v1925 = vunpack.c.h.b16 %v1829
      %v1926 = vunpack.c.l.b16 %v1830
      %v1927 = vunpack.c.h.b16 %v1830
      %v1928 = vunpack.c.l.b16 %v1831
      %v1929 = vunpack.c.h.b16 %v1831
      %v1930 = vunpack.c.l.b16 %v1832
      %v1931 = vunpack.c.h.b16 %v1832
      %v1932 = vunpack.c.l.b16 %v1833
      %v1933 = vunpack.c.h.b16 %v1833
      %v1934 = vunpack.c.l.b16 %v1834
      %v1935 = vunpack.c.h.b16 %v1834
      %v1936 = vunpack.c.l.b16 %v1835
      %v1937 = vunpack.c.h.b16 %v1835
      %v1938 = vunpack.c.l.b16 %v1836
      %v1939 = vunpack.c.h.b16 %v1836
      %v1940 = vunpack.c.l.b16 %v1837
      %v1941 = vunpack.c.h.b16 %v1837
      %v1942 = vunpack.c.l.b16 %v1838
      %v1943 = vunpack.c.h.b16 %v1838
      %v1944 = vunpack.c.l.b16 %v1839
      %v1945 = vunpack.c.h.b16 %v1839
      %v1946 = vunpack.c.l.b16 %v1840
      %v1947 = vunpack.c.h.b16 %v1840
      %v1948 = vunpack.c.l.b16 %v1841
      %v1949 = vunpack.c.h.b16 %v1841
      %v1950 = vunpack.c.l.b16 %v1842
      %v1951 = vunpack.c.h.b16 %v1842
      %v1952 = vunpack.c.l.b16 %v1843
      %v1953 = vunpack.c.h.b16 %v1843
      %v1954 = vunpack.c.l.b16 %v1844
      %v1955 = vunpack.c.h.b16 %v1844
      %v1956 = vunpack.c.l.b16 %v1845
      %v1957 = vunpack.c.h.b16 %v1845
      %v1958 = vunpack.c.l.b16 %v1846
      %v1959 = vunpack.c.h.b16 %v1846
      %v1960 = vunpack.c.l.b16 %v1847
      %v1961 = vunpack.c.h.b16 %v1847
      %v1962 = vunpack.c.l.b16 %v1848
      %v1963 = vunpack.c.h.b16 %v1848
      %v1964 = vunpack.c.l.b16 %v1849
      %v1965 = vunpack.c.h.b16 %v1849
      %v1966 = vunpack.c.l.b16 %v1850
      %v1967 = vunpack.c.h.b16 %v1850
      %v1968 = vunpack.c.l.b16 %v1851
      %v1969 = vunpack.c.h.b16 %v1851
      %v1970 = vpack.c.b16 %v1910, %v1906
      %v1971 = vpack.c.b16 %v1911, %v1907
      %v1972 = vpack.c.b16 %v1912, %v1908
      %v1973 = vpack.c.b16 %v1913, %v1909
      %v1974 = vpack.c.b16 %v1918, %v1914
      %v1975 = vpack.c.b16 %v1919, %v1915
      %v1976 = vpack.c.b16 %v1920, %v1916
      %v1977 = vpack.c.b16 %v1921, %v1917
      %v1978 = vpack.c.b16 %v1926, %v1922
      %v1979 = vpack.c.b16 %v1927, %v1923
      %v1980 = vpack.c.b16 %v1928, %v1924
      %v1981 = vpack.c.b16 %v1929, %v1925
      %v1982 = vpack.c.b16 %v1934, %v1930
      %v1983 = vpack.c.b16 %v1935, %v1931
      %v1984 = vpack.c.b16 %v1936, %v1932
      %v1985 = vpack.c.b16 %v1937, %v1933
      %v1986 = vpack.c.b16 %v1942, %v1938
      %v1987 = vpack.c.b16 %v1943, %v1939
      %v1988 = vpack.c.b16 %v1944, %v1940
      %v1989 = vpack.c.b16 %v1945, %v1941
      %v1990 = vpack.c.b16 %v1950, %v1946
      %v1991 = vpack.c.b16 %v1951, %v1947
      %v1992 = vpack.c.b16 %v1952, %v1948
      %v1993 = vpack.c.b16 %v1953, %v1949
      %v1994 = vpack.c.b16 %v1958, %v1954
      %v1995 = vpack.c.b16 %v1959, %v1955
      %v1996 = vpack.c.b16 %v1960, %v1956
      %v1997 = vpack.c.b16 %v1961, %v1957
      %v1998 = vpack.c.b16 %v1966, %v1962
      %v1999 = vpack.c.b16 %v1967, %v1963
      %v2000 = vpack.c.b16 %v1968, %v1964
      %v2001 = vpack.c.b16 %v1969, %v1965
      %2034 = vmatprep.subr.bf16.mxu0 %v1971
      %2035 = vmatpush1.bf16.msra.mxu0 %v1970
      %2036 = vmatprep.subr.bf16.mxu0 %v1975
      %2037 = vmatpush1.bf16.msra.mxu0 %v1974
      %2038 = vmatprep.subr.bf16.mxu0 %v1979
      %2039 = vmatpush1.bf16.msra.mxu0 %v1978
      %2040 = vmatprep.subr.bf16.mxu0 %v1983
      %2041 = vmatpush1.bf16.msra.mxu0 %v1982
      %2042 = vmatprep.subr.bf16.mxu0 %v1987
      %2043 = vmatpush1.bf16.msra.mxu0 %v1986
      %2044 = vmatprep.subr.bf16.mxu0 %v1991
      %2045 = vmatpush1.bf16.msra.mxu0 %v1990
      %2046 = vmatprep.subr.bf16.mxu0 %v1995
      %2047 = vmatpush1.bf16.msra.mxu0 %v1994
      %2048 = vmatprep.subr.bf16.mxu0 %v1999
      %2049 = vmatpush1.bf16.msra.mxu0 %v1998
      %2050 = vmatprep.subr.bf16.mxu0 0
      %2051 = vmatpush1.bf16.msra.mxu0 0
      %2052 = vmatprep.subr.bf16.mxu0 0
      %2053 = vmatpush1.bf16.msra.mxu0 0
      %2054 = vmatprep.subr.bf16.mxu0 0
      %2055 = vmatpush1.bf16.msra.mxu0 0
      %2056 = vmatprep.subr.bf16.mxu0 0
      %2057 = vmatpush1.bf16.msra.mxu0 0
      %2058 = vmatprep.subr.bf16.mxu0 0
      %2059 = vmatpush1.bf16.msra.mxu0 0
      %2060 = vmatprep.subr.bf16.mxu0 0
      %2061 = vmatpush1.bf16.msra.mxu0 0
      %2062 = vmatprep.subr.bf16.mxu0 0
      %2063 = vmatpush1.bf16.msra.mxu0 0
      %2064 = vmatprep.subr.bf16.mxu0 0
      %2065 = vmatpush1.bf16.msra.mxu0 0
      %2066 = vmatprep.mubr.bf16.mxu0 0
      %2067 = vmatmul.mubr.bf16.gmra.mrb[0].mxu0 %v1818
      %v2068 = vpop.f32.mrb[0].mxu0
      %v2069 = vadd.f32 %v1857, %v2068
      %v2070 = vpop.f32.mrb[0].mxu0
      %v2071 = vadd.f32 %v1861, %v2070
      %v2072 = vpop.f32.mrb[0].mxu0
      %v2073 = vadd.f32 %v1857, %v2072
      %v2074 = vpop.f32.mrb[0].mxu0
      %v2075 = vadd.f32 %v1861, %v2074
      %2076 = vmatprep.mubr.bf16.mxu0 0
      %2077 = vmatmul.mubr.bf16.gmra.mrb[0].mxu0 %v1819
      %v2078 = vpop.f32.mrb[0].mxu0
      %v2079 = vadd.f32 %v1857, %v2078
      %v2080 = vpop.f32.mrb[0].mxu0
      %v2081 = vadd.f32 %v1861, %v2080
      %v2082 = vpop.f32.mrb[0].mxu0
      %v2083 = vpop.f32.mrb[0].mxu0
      %2084 = vdwg.mxu0
      %2085 = vmatprep.subr.bf16.mxu0 %v1973
      %2086 = vmatpush1.bf16.msra.mxu0 %v1972
      %2087 = vmatprep.subr.bf16.mxu0 %v1977
      %2088 = vmatpush1.bf16.msra.mxu0 %v1976
      %2089 = vmatprep.subr.bf16.mxu0 %v1981
      %2090 = vmatpush1.bf16.msra.mxu0 %v1980
      %2091 = vmatprep.subr.bf16.mxu0 %v1985
      %2092 = vmatpush1.bf16.msra.mxu0 %v1984
      %2093 = vmatprep.subr.bf16.mxu0 %v1989
      %2094 = vmatpush1.bf16.msra.mxu0 %v1988
      %2095 = vmatprep.subr.bf16.mxu0 %v1993
      %2096 = vmatpush1.bf16.msra.mxu0 %v1992
      %2097 = vmatprep.subr.bf16.mxu0 %v1997
      %2098 = vmatpush1.bf16.msra.mxu0 %v1996
      %2099 = vmatprep.subr.bf16.mxu0 %v2001
      %2100 = vmatpush1.bf16.msra.mxu0 %v2000
      %2101 = vmatprep.subr.bf16.mxu0 0
      %2102 = vmatpush1.bf16.msra.mxu0 0
      %2103 = vmatprep.subr.bf16.mxu0 0
      %2104 = vmatpush1.bf16.msra.mxu0 0
      %2105 = vmatprep.subr.bf16.mxu0 0
      %2106 = vmatpush1.bf16.msra.mxu0 0
      %2107 = vmatprep.subr.bf16.mxu0 0
      %2108 = vmatpush1.bf16.msra.mxu0 0
      %2109 = vmatprep.subr.bf16.mxu0 0
      %2110 = vmatpush1.bf16.msra.mxu0 0
      %2111 = vmatprep.subr.bf16.mxu0 0
      %2112 = vmatpush1.bf16.msra.mxu0 0
      %2113 = vmatprep.subr.bf16.mxu0 0
      %2114 = vmatpush1.bf16.msra.mxu0 0
      %2115 = vmatprep.subr.bf16.mxu0 0
      %2116 = vmatpush1.bf16.msra.mxu0 0
      %2117 = vmatprep.mubr.bf16.mxu0 0
      %2118 = vmatmul.mubr.bf16.gmra.mrb[0].mxu0 %v1818
      %v2119 = vpop.f32.mrb[0].mxu0
      %v2120 = vadd.f32 %v1865, %v2119
      %v2121 = vpop.f32.mrb[0].mxu0
      %v2122 = vadd.f32 %v1869, %v2121
      %v2123 = vpop.f32.mrb[0].mxu0
      %v2124 = vadd.f32 %v1865, %v2123
      %v2125 = vpop.f32.mrb[0].mxu0
      %v2126 = vadd.f32 %v1869, %v2125
      %2127 = vmatprep.mubr.bf16.mxu0 0
      %2128 = vmatmul.mubr.bf16.gmra.mrb[0].mxu0 %v1819
      %v2129 = vpop.f32.mrb[0].mxu0
      %v2130 = vadd.f32 %v1865, %v2129
      %v2131 = vpop.f32.mrb[0].mxu0
      %v2132 = vadd.f32 %v1869, %v2131
      %v2133 = vpop.f32.mrb[0].mxu0
      %v2134 = vpop.f32.mrb[0].mxu0
      %2135 = vdwg.mxu0
      %v2136 = vmul.f32 %v2069, -1.702
      %v2137 = vmul.f32 %v2071, -1.702
      %v2138 = vmul.f32 %v2120, -1.702
      %v2139 = vmul.f32 %v2122, -1.702
      %v2140 = vmul.f32 %v2073, -1.702
      %v2141 = vmul.f32 %v2075, -1.702
      %v2142 = vmul.f32 %v2124, -1.702
      %v2143 = vmul.f32 %v2126, -1.702
      %v2144 = vmul.f32 %v2079, -1.702
      %v2145 = vmul.f32 %v2081, -1.702
      %v2146 = vmul.f32 %v2130, -1.702
      %v2147 = vmul.f32 %v2132, -1.702
      %v2148 = vmul.f32 %v2136, 1.442695
      %v2149 = vpow.pop %v2148
      %v2150 = vmul.f32 %v2137, 1.442695
      %v2151 = vpow.pop %v2150
      %v2152 = vmul.f32 %v2138, 1.442695
      %v2153 = vpow.pop %v2152
      %v2154 = vmul.f32 %v2139, 1.442695
      %v2155 = vpow.pop %v2154
      %v2156 = vmul.f32 %v2140, 1.442695
      %v2157 = vpow.pop %v2156
      %v2158 = vmul.f32 %v2141, 1.442695
      %v2159 = vpow.pop %v2158
      %v2160 = vmul.f32 %v2142, 1.442695
      %v2161 = vpow.pop %v2160
      %v2162 = vmul.f32 %v2143, 1.442695
      %v2163 = vpow.pop %v2162
      %v2164 = vmul.f32 %v2144, 1.442695
      %v2165 = vpow.pop %v2164
      %v2166 = vmul.f32 %v2145, 1.442695
      %v2167 = vpow.pop %v2166
      %v2168 = vmul.f32 %v2146, 1.442695
      %v2169 = vpow.pop %v2168
      %v2170 = vmul.f32 %v2147, 1.442695
      %v2171 = vpow.pop %v2170
      %v2172 = vadd.f32 %v2149, 1.0
      %v2173 = vadd.f32 %v2151, 1.0
      %v2174 = vadd.f32 %v2153, 1.0
      %v2175 = vadd.f32 %v2155, 1.0
      %v2176 = vadd.f32 %v2157, 1.0
      %v2177 = vadd.f32 %v2159, 1.0
      %v2178 = vadd.f32 %v2161, 1.0
      %v2179 = vadd.f32 %v2163, 1.0
      %v2180 = vadd.f32 %v2165, 1.0
      %v2181 = vadd.f32 %v2167, 1.0
      %v2182 = vadd.f32 %v2169, 1.0
      %v2183 = vadd.f32 %v2171, 1.0
      %v2184 = vrcp.pop %v2172
      %v2185 = vrcp.pop %v2173
      %v2186 = vrcp.pop %v2174
      %v2187 = vrcp.pop %v2175
      %v2188 = vrcp.pop %v2176
      %v2189 = vrcp.pop %v2177
      %v2190 = vrcp.pop %v2178
      %v2191 = vrcp.pop %v2179
      %v2192 = vrcp.pop %v2180
      %v2193 = vrcp.pop %v2181
      %v2194 = vrcp.pop %v2182
      %v2195 = vrcp.pop %v2183
      %v2196 = vmul.f32 %v2069, %v2184
      %v2197 = vmul.f32 %v2071, %v2185
      %v2198 = vmul.f32 %v2120, %v2186
      %v2199 = vmul.f32 %v2122, %v2187
      %v2200 = vmul.f32 %v2073, %v2188
      %v2201 = vmul.f32 %v2075, %v2189
      %v2202 = vmul.f32 %v2124, %v2190
      %v2203 = vmul.f32 %v2126, %v2191
      %v2204 = vmul.f32 %v2079, %v2192
      %v2205 = vmul.f32 %v2081, %v2193
      %v2206 = vmul.f32 %v2130, %v2194
      %v2207 = vmul.f32 %v2132, %v2195
      %v2208 = vpack.c.bf16 %v2200, %v2196
      %v2209 = vpack.c.bf16 %v2201, %v2197
      %v2210 = vpack.c.bf16 %v2202, %v2198
      %v2211 = vpack.c.bf16 %v2203, %v2199
      %v2212 = vpack.c.bf16 %v2204, %v2204
      %v2213 = vpack.c.bf16 %v2205, %v2205
      %v2214 = vpack.c.bf16 %v2206, %v2206
      %v2215 = vpack.c.bf16 %v2207, %v2207
      %v2216 = vld [vmem:[%s11] sm:$0xf]
      %v2217 = vld [vmem:[%s11 + $0x4] sm:$0xf]
      %v2218 = vld [vmem:[%s11 + $0x8] sm:$0xf]
      %v2219 = vld [vmem:[%s11 + $0xc] sm:$0xf]
      %v2220 = vld [vmem:[%s11 + $0x10] sm:$0xf]
      %v2221 = vld [vmem:[%s11 + $0x14] sm:$0xf]
      %v2222 = vld [vmem:[%s11 + $0x18] sm:$0xf]
      %v2223 = vld [vmem:[%s11 + $0x1c] sm:$0xf]
      %v2224 = vld [vmem:[%s11 + $0x20] sm:$0xf]
      %v2225 = vld [vmem:[%s11 + $0x24] sm:$0xf]
      %v2226 = vld [vmem:[%s11 + $0x28] sm:$0xf]
      %v2227 = vld [vmem:[%s11 + $0x2c] sm:$0xf]
      %v2228 = vld [vmem:[%s11 + $0x30] sm:$0xf]
      %v2229 = vld [vmem:[%s11 + $0x34] sm:$0xf]
      %v2230 = vld [vmem:[%s11 + $0x38] sm:$0xf]
      %v2231 = vld [vmem:[%s11 + $0x3c] sm:$0xf]
      %v2232 = vld [vmem:[%s11 + $0x40] sm:$0xf]
      %v2233 = vld [vmem:[%s11 + $0x44] sm:$0xf]
      %v2234 = vld [vmem:[%s11 + $0x48] sm:$0xf]
      %v2235 = vld [vmem:[%s11 + $0x4c] sm:$0xf]
      %v2236 = vld [vmem:[%s11 + $0x50] sm:$0xf]
      %v2237 = vld [vmem:[%s11 + $0x54] sm:$0xf]
      %v2238 = vld [vmem:[%s11 + $0x58] sm:$0xf]
      %v2239 = vld [vmem:[%s11 + $0x5c] sm:$0xf]
      %v2240 = vld [vmem:[%s11 + $0x60] sm:$0xf]
      %v2241 = vld [vmem:[%s11 + $0x64] sm:$0xf]
      %v2242 = vld [vmem:[%s11 + $0x68] sm:$0xf]
      %v2243 = vld [vmem:[%s11 + $0x6c] sm:$0xf]
      %v2244 = vld [vmem:[%s11 + $0x70] sm:$0xf]
      %v2245 = vld [vmem:[%s11 + $0x74] sm:$0xf]
      %v2246 = vld [vmem:[%s11 + $0x78] sm:$0xf]
      %v2247 = vld [vmem:[%s11 + $0x7c] sm:$0xf]
      %v2248 = vld [vmem:[%s11 + $0x80] sm:$0xf]
      %v2249 = vld [vmem:[%s11 + $0x84] sm:$0xf]
      %v2250 = vld [vmem:[%s11 + $0x88] sm:$0xf]
      %v2251 = vld [vmem:[%s11 + $0x8c] sm:$0xf]
      %v2252 = vld [vmem:[%s11 + $0x90] sm:$0xf]
      %v2253 = vld [vmem:[%s11 + $0x94] sm:$0xf]
      %v2254 = vld [vmem:[%s11 + $0x98] sm:$0xf]
      %v2255 = vld [vmem:[%s11 + $0x9c] sm:$0xf]
      %v2256 = vld [vmem:[%s11 + $0xa0] sm:$0xf]
      %v2257 = vld [vmem:[%s11 + $0xa4] sm:$0xf]
      %v2258 = vld [vmem:[%s11 + $0xa8] sm:$0xf]
      %v2259 = vld [vmem:[%s11 + $0xac] sm:$0xf]
      %v2260 = vld [vmem:[%s11 + $0xb0] sm:$0xf]
      %v2261 = vld [vmem:[%s11 + $0xb4] sm:$0xf]
      %v2262 = vld [vmem:[%s11 + $0xb8] sm:$0xf]
      %v2263 = vld [vmem:[%s11 + $0xbc] sm:$0xf]
      %v2264 = vld [vmem:[%s11 + $0xc0] sm:$0xf]
      %v2265 = vld [vmem:[%s11 + $0xc4] sm:$0xf]
      %v2266 = vld [vmem:[%s11 + $0xc8] sm:$0xf]
      %v2267 = vld [vmem:[%s11 + $0xcc] sm:$0xf]
      %v2268 = vld [vmem:[%s11 + $0xd0] sm:$0xf]
      %v2269 = vld [vmem:[%s11 + $0xd4] sm:$0xf]
      %v2270 = vld [vmem:[%s11 + $0xd8] sm:$0xf]
      %v2271 = vld [vmem:[%s11 + $0xdc] sm:$0xf]
      %v2272 = vld [vmem:[%s11 + $0xe0] sm:$0xf]
      %v2273 = vld [vmem:[%s11 + $0xe4] sm:$0xf]
      %v2274 = vld [vmem:[%s11 + $0xe8] sm:$0xf]
      %v2275 = vld [vmem:[%s11 + $0xec] sm:$0xf]
      %v2276 = vld [vmem:[%s11 + $0xf0] sm:$0xf]
      %v2277 = vld [vmem:[%s11 + $0xf4] sm:$0xf]
      %v2278 = vld [vmem:[%s11 + $0xf8] sm:$0xf]
      %v2279 = vld [vmem:[%s11 + $0xfc] sm:$0xf]
      %v2280 = vld [vmem:[%s12] sm:$0x1]
      %v2282 = vlaneseq
      %v2283 = vshrl.u32 %v2282, 7
      %v2284 = vsub.s32 0, %v2283
      %v2285 = vrot.slane %v2280, %v2284
      %v2351 = vunpack.c.l.b16 %v2216
      %v2352 = vunpack.c.l.b16 %v2217
      %v2353 = vunpack.c.l.b16 %v2218
      %v2354 = vunpack.c.l.b16 %v2219
      %v2355 = vunpack.c.l.b16 %v2220
      %v2356 = vunpack.c.l.b16 %v2221
      %v2357 = vunpack.c.l.b16 %v2222
      %v2358 = vunpack.c.l.b16 %v2223
      %v2359 = vunpack.c.l.b16 %v2224
      %v2360 = vunpack.c.l.b16 %v2225
      %v2361 = vunpack.c.l.b16 %v2226
      %v2362 = vunpack.c.l.b16 %v2227
      %v2363 = vunpack.c.l.b16 %v2228
      %v2364 = vunpack.c.l.b16 %v2229
      %v2365 = vunpack.c.l.b16 %v2230
      %v2366 = vunpack.c.l.b16 %v2231
      %v2367 = vunpack.c.l.b16 %v2232
      %v2368 = vunpack.c.l.b16 %v2233
      %v2369 = vunpack.c.l.b16 %v2234
      %v2370 = vunpack.c.l.b16 %v2235
      %v2371 = vunpack.c.l.b16 %v2236
      %v2372 = vunpack.c.l.b16 %v2237
      %v2373 = vunpack.c.l.b16 %v2238
      %v2374 = vunpack.c.l.b16 %v2239
      %v2375 = vunpack.c.l.b16 %v2240
      %v2376 = vunpack.c.l.b16 %v2241
      %v2377 = vunpack.c.l.b16 %v2242
      %v2378 = vunpack.c.l.b16 %v2243
      %v2379 = vunpack.c.l.b16 %v2244
      %v2380 = vunpack.c.l.b16 %v2245
      %v2381 = vunpack.c.l.b16 %v2246
      %v2382 = vunpack.c.l.b16 %v2247
      %v2383 = vunpack.c.l.b16 %v2248
      %v2384 = vunpack.c.l.b16 %v2249
      %v2385 = vunpack.c.l.b16 %v2250
      %v2386 = vunpack.c.l.b16 %v2251
      %v2387 = vunpack.c.l.b16 %v2252
      %v2388 = vunpack.c.l.b16 %v2253
      %v2389 = vunpack.c.l.b16 %v2254
      %v2390 = vunpack.c.l.b16 %v2255
      %v2391 = vunpack.c.l.b16 %v2256
      %v2392 = vunpack.c.l.b16 %v2257
      %v2393 = vunpack.c.l.b16 %v2258
      %v2394 = vunpack.c.l.b16 %v2259
      %v2395 = vunpack.c.l.b16 %v2260
      %v2396 = vunpack.c.l.b16 %v2261
      %v2397 = vunpack.c.l.b16 %v2262
      %v2398 = vunpack.c.l.b16 %v2263
      %v2399 = vunpack.c.l.b16 %v2264
      %v2400 = vunpack.c.l.b16 %v2265
      %v2401 = vunpack.c.l.b16 %v2266
      %v2402 = vunpack.c.l.b16 %v2267
      %v2403 = vunpack.c.l.b16 %v2268
      %v2404 = vunpack.c.l.b16 %v2269
      %v2405 = vunpack.c.l.b16 %v2270
      %v2406 = vunpack.c.l.b16 %v2271
      %v2407 = vunpack.c.l.b16 %v2272
      %v2408 = vunpack.c.l.b16 %v2273
      %v2409 = vunpack.c.l.b16 %v2274
      %v2410 = vunpack.c.l.b16 %v2275
      %v2411 = vunpack.c.l.b16 %v2276
      %v2412 = vunpack.c.l.b16 %v2277
      %v2413 = vunpack.c.l.b16 %v2278
      %v2414 = vunpack.c.l.b16 %v2279
      %v2415 = vpack.c.b16 %v2352, %v2351
      %v2416 = vpack.c.b16 %v2354, %v2353
      %v2417 = vpack.c.b16 %v2356, %v2355
      %v2418 = vpack.c.b16 %v2358, %v2357
      %v2419 = vpack.c.b16 %v2360, %v2359
      %v2420 = vpack.c.b16 %v2362, %v2361
      %v2421 = vpack.c.b16 %v2364, %v2363
      %v2422 = vpack.c.b16 %v2366, %v2365
      %v2423 = vpack.c.b16 %v2368, %v2367
      %v2424 = vpack.c.b16 %v2370, %v2369
      %v2425 = vpack.c.b16 %v2372, %v2371
      %v2426 = vpack.c.b16 %v2374, %v2373
      %v2427 = vpack.c.b16 %v2376, %v2375
      %v2428 = vpack.c.b16 %v2378, %v2377
      %v2429 = vpack.c.b16 %v2380, %v2379
      %v2430 = vpack.c.b16 %v2382, %v2381
      %v2431 = vpack.c.b16 %v2384, %v2383
      %v2432 = vpack.c.b16 %v2386, %v2385
      %v2433 = vpack.c.b16 %v2388, %v2387
      %v2434 = vpack.c.b16 %v2390, %v2389
      %v2435 = vpack.c.b16 %v2392, %v2391
      %v2436 = vpack.c.b16 %v2394, %v2393
      %v2437 = vpack.c.b16 %v2396, %v2395
      %v2438 = vpack.c.b16 %v2398, %v2397
      %v2439 = vpack.c.b16 %v2400, %v2399
      %v2440 = vpack.c.b16 %v2402, %v2401
      %v2441 = vpack.c.b16 %v2404, %v2403
      %v2442 = vpack.c.b16 %v2406, %v2405
      %v2443 = vpack.c.b16 %v2408, %v2407
      %v2444 = vpack.c.b16 %v2410, %v2409
      %v2445 = vpack.c.b16 %v2412, %v2411
      %v2446 = vpack.c.b16 %v2414, %v2413
      %2479 = vmatprep.subr.bf16.mxu0 0
      %2480 = vmatpush1.bf16.msra.mxu0 %v2415
      %2481 = vmatprep.subr.bf16.mxu0 0
      %2482 = vmatpush1.bf16.msra.mxu0 %v2416
      %2483 = vmatprep.subr.bf16.mxu0 0
      %2484 = vmatpush1.bf16.msra.mxu0 %v2417
      %2485 = vmatprep.subr.bf16.mxu0 0
      %2486 = vmatpush1.bf16.msra.mxu0 %v2418
      %2487 = vmatprep.subr.bf16.mxu0 0
      %2488 = vmatpush1.bf16.msra.mxu0 %v2419
      %2489 = vmatprep.subr.bf16.mxu0 0
      %2490 = vmatpush1.bf16.msra.mxu0 %v2420
      %2491 = vmatprep.subr.bf16.mxu0 0
      %2492 = vmatpush1.bf16.msra.mxu0 %v2421
      %2493 = vmatprep.subr.bf16.mxu0 0
      %2494 = vmatpush1.bf16.msra.mxu0 %v2422
      %2495 = vmatprep.subr.bf16.mxu0 0
      %2496 = vmatpush1.bf16.msra.mxu0 %v2423
      %2497 = vmatprep.subr.bf16.mxu0 0
      %2498 = vmatpush1.bf16.msra.mxu0 %v2424
      %2499 = vmatprep.subr.bf16.mxu0 0
      %2500 = vmatpush1.bf16.msra.mxu0 %v2425
      %2501 = vmatprep.subr.bf16.mxu0 0
      %2502 = vmatpush1.bf16.msra.mxu0 %v2426
      %2503 = vmatprep.subr.bf16.mxu0 0
      %2504 = vmatpush1.bf16.msra.mxu0 %v2427
      %2505 = vmatprep.subr.bf16.mxu0 0
      %2506 = vmatpush1.bf16.msra.mxu0 %v2428
      %2507 = vmatprep.subr.bf16.mxu0 0
      %2508 = vmatpush1.bf16.msra.mxu0 %v2429
      %2509 = vmatprep.subr.bf16.mxu0 0
      %2510 = vmatpush1.bf16.msra.mxu0 %v2430
      %2511 = vmatprep.mubr.bf16.mxu0 %v2209
      %2512 = vmatmul.mubr.bf16.gmra.mrb[0].mxu0 %v2208
      %v2513 = vpop.f32.mrb[0].mxu0
      %v2514 = vadd.f32 %v2285, %v2513
      %v2515 = vpop.f32.mrb[0].mxu0
      %v2516 = vpop.f32.mrb[0].mxu0
      %v2517 = vadd.f32 %v2285, %v2516
      %v2518 = vpop.f32.mrb[0].mxu0
      %2519 = vmatprep.mubr.bf16.mxu0 %v2213
      %2520 = vmatmul.mubr.bf16.gmra.mrb[0].mxu0 %v2212
      %v2521 = vpop.f32.mrb[0].mxu0
      %v2522 = vadd.f32 %v2285, %v2521
      %v2523 = vpop.f32.mrb[0].mxu0
      %v2524 = vpop.f32.mrb[0].mxu0
      %v2525 = vpop.f32.mrb[0].mxu0
      %2526 = vdwg.mxu0
      %2527 = vmatprep.subr.bf16.mxu0 0
      %2528 = vmatpush1.bf16.msra.mxu0 %v2431
      %2529 = vmatprep.subr.bf16.mxu0 0
      %2530 = vmatpush1.bf16.msra.mxu0 %v2432
      %2531 = vmatprep.subr.bf16.mxu0 0
      %2532 = vmatpush1.bf16.msra.mxu0 %v2433
      %2533 = vmatprep.subr.bf16.mxu0 0
      %2534 = vmatpush1.bf16.msra.mxu0 %v2434
      %2535 = vmatprep.subr.bf16.mxu0 0
      %2536 = vmatpush1.bf16.msra.mxu0 %v2435
      %2537 = vmatprep.subr.bf16.mxu0 0
      %2538 = vmatpush1.bf16.msra.mxu0 %v2436
      %2539 = vmatprep.subr.bf16.mxu0 0
      %2540 = vmatpush1.bf16.msra.mxu0 %v2437
      %2541 = vmatprep.subr.bf16.mxu0 0
      %2542 = vmatpush1.bf16.msra.mxu0 %v2438
      %2543 = vmatprep.subr.bf16.mxu0 0
      %2544 = vmatpush1.bf16.msra.mxu0 %v2439
      %2545 = vmatprep.subr.bf16.mxu0 0
      %2546 = vmatpush1.bf16.msra.mxu0 %v2440
      %2547 = vmatprep.subr.bf16.mxu0 0
      %2548 = vmatpush1.bf16.msra.mxu0 %v2441
      %2549 = vmatprep.subr.bf16.mxu0 0
      %2550 = vmatpush1.bf16.msra.mxu0 %v2442
      %2551 = vmatprep.subr.bf16.mxu0 0
      %2552 = vmatpush1.bf16.msra.mxu0 %v2443
      %2553 = vmatprep.subr.bf16.mxu0 0
      %2554 = vmatpush1.bf16.msra.mxu0 %v2444
      %2555 = vmatprep.subr.bf16.mxu0 0
      %2556 = vmatpush1.bf16.msra.mxu0 %v2445
      %2557 = vmatprep.subr.bf16.mxu0 0
      %2558 = vmatpush1.bf16.msra.mxu0 %v2446
      %2559 = vmatprep.mubr.bf16.mxu0 %v2211
      %2560 = vmatmul.mubr.bf16.gmra.mrb[0].mxu0 %v2210
      %v2561 = vpop.f32.mrb[0].mxu0
      %v2562 = vadd.f32 %v2514, %v2561
      %v2563 = vpop.f32.mrb[0].mxu0
      %v2564 = vpop.f32.mrb[0].mxu0
      %v2565 = vadd.f32 %v2517, %v2564
      %v2566 = vpop.f32.mrb[0].mxu0
      %2567 = vmatprep.mubr.bf16.mxu0 %v2215
      %2568 = vmatmul.mubr.bf16.gmra.mrb[0].mxu0 %v2214
      %v2569 = vpop.f32.mrb[0].mxu0
      %v2570 = vadd.f32 %v2522, %v2569
      %v2571 = vpop.f32.mrb[0].mxu0
      %v2572 = vpop.f32.mrb[0].mxu0
      %v2573 = vpop.f32.mrb[0].mxu0
      %2574 = vdwg.mxu0
      %v2575 = vadd.f32 %v1760, %v2562
      %v2576 = vadd.f32 %v1761, %v2565
      %v2577 = vadd.f32 %v1762, %v2570
      %2578 = vst [vmem:[%s440] sm:$0xff] %v2575
      %2579 = vst [vmem:[%s440 + $0x8] sm:$0xff] %v2576
      %2580 = vst [vmem:[%s440 + $0x10] sm:$0x1] %v2577
      %p2581 = scmp.lt.s32.totalorder %s24, 1
      %s2582 = scalar_select %p2581, %s24, 1
      %s2583 = smul.addr %s2582, 3
      %s2584 = smul.addr %s2583, 8
      %s2585 = scalar_lea.vmem %s13, %s2584
      // Predicated region
      $region73: #{clip_featurizer_forward.5} parent=71 // pred_check
        %p2586 = pneg %p320
      $region74: #{clip_featurizer_forward.5} parent=71 // pred_check_branch
        %2588 = sbr.rel (%p2586) target = $region76
      $region75: #{clip_featurizer_forward.5} parent=71 // pred_region
        _
      $region76: #{clip_featurizer_forward.5} parent=71 // pred_fallthru
        _
    $region72: #{clip_featurizer_forward.5} parent=5 // pred_fallthru
      _
    %p2589 = scmp.le.s32.totalorder 2, %s19
    // Predicated region
    $region77: #{clip_featurizer_forward.5} parent=5 // pred_check
      %p2590 = pneg %p2589
    $region78: #{clip_featurizer_forward.5} parent=5 // pred_check_branch
      %2592 = sbr.rel (%p2590) target = $region80
    $region79: #{clip_featurizer_forward.5} parent=5 // pred_region
      %s2593 = ssub.s32 %s19, 2
      // Predicated region
      $region81: #{clip_featurizer_forward.5} parent=79 // pred_check
        %p2594 = pneg %p326
      $region82: #{clip_featurizer_forward.5} parent=79 // pred_check_branch
        %2596 = sbr.rel (%p2594) target = $region84
      $region83: #{clip_featurizer_forward.5} parent=79 // pred_region
        %p2597 = scmp.lt.s32.totalorder %s25, 1
        %s2598 = scalar_select %p2597, %s25, 1
        %s2599 = smul.addr %s2598, 3
        %s2600 = smul.addr %s2599, 8
        %s2601 = scalar_lea.vmem %s13, %s2600
      $region84: #{clip_featurizer_forward.5} parent=79 // pred_fallthru
        _
    $region80: #{clip_featurizer_forward.5} parent=5 // pred_fallthru
      _
  $region6: #{clip_featurizer_forward.5} parent=0 // loop_footer
    %s23 = sadd.s32 1, %s19
  $region7: #{clip_featurizer_forward.5} parent=0 // loop_footer_branch
    %18 = sbr.rel target = $region3
  $region8: #{clip_featurizer_forward.5} parent=0 // loop_exit
    _

</llo_original>
